<compile_context>
chip_gen: v5e
topology: v5e:2x2
jax: 0.10.0
libtpu: 0.0.40
codegen_flags: <defaults>
</compile_context>

<pallas_src>
import functools

import numpy as np
import jax
import jax.numpy as jnp
from jax.experimental import pallas as pl
from jax.experimental.pallas import tpu as pltpu


_SQRT_2_OVER_PI = 0.7978845608028654


def _gelu_tanh(x):
    # TODO(synk): PyTorch nn.GELU() defaults to the exact erf form; the tanh
    # approximation (elementwise diff < ~3e-3) is used since erf has no
    # guaranteed Mosaic lowering.  The in-script reference uses the same form.
    return 0.5 * x * (1.0 + jnp.tanh(_SQRT_2_OVER_PI * (x + 0.044715 * x * x * x)))


def _dw_masks(H, W):
    """(9, 1, H*W) f32 validity masks of the zero-padded 3x3 depthwise conv."""
    m = np.zeros((9, H, W), np.float32)
    for di in (-1, 0, 1):
        for dj in (-1, 0, 1):
            k = (di + 1) * 3 + (dj + 1)
            m[k, max(0, -di):H - max(0, di), max(0, -dj):W - max(0, dj)] = 1.0
    return m.reshape(9, 1, H * W)


def _pick_batch_block(N, max_b=8):
    """Largest divisor of N that is <= max_b and (when possible) leaves the
    grid with >= 2 steps so both v7x TensorCores get work."""
    divisors = [b for b in range(1, min(N, max_b) + 1) if N % b == 0]
    multi_step = [b for b in divisors if N // b >= 2]
    return max(multi_step) if multi_step else max(divisors)


def _default_epilogue_dtype():
    # bf16 VPU/EUP exist on v6e/v7x; v5e and older must keep the f32 epilogue.
    try:
        kind = jax.devices()[0].device_kind.lower()
    except Exception:
        return jnp.float32
    if any(g in kind for g in ("v2", "v3", "v4", "v5")):
        return jnp.float32
    return jnp.bfloat16


# ---------------------------------------------------------------------------
# fused kernel: one grid step == B images, all activations stay in VMEM/vregs
# ---------------------------------------------------------------------------
def _mlp_fused_kernel(x_ref, w1_ref, b1_ref, coef_ref, bpos_ref, w2_ref, b2_ref,
                      o_ref, *, B, H, W, matmul_dtype, epilogue_dtype):
    HW = H * W
    w1 = w1_ref[...]
    b1 = b1_ref[...]
    w2 = w2_ref[...]
    b2 = b2_ref[...]
    bpos = bpos_ref[...]

    # B is small and static -> unrolled; amortizes per-grid-step fixed cost.
    for b in range(B):
        # fc1: 1x1 conv == (Chid, Cin) @ (Cin, HW) on the MXU, f32 accumulation.
        y1 = jnp.dot(w1, x_ref[b], preferred_element_type=jnp.float32) + b1
        y1 = y1.astype(epilogue_dtype)          # bf16 epilogue on v6e/v7x

        # pos: depthwise 3x3 (padding=1) as 8 lane-rolls + FMAs on the flat
        # (Chid, HW) slab; boundary masks are pre-folded into coef[k], and the
        # center tap initializes z (no zeros init).  Rolls go to the XLU.
        z = y1 * coef_ref[4]
        for di in (-1, 0, 1):
            for dj in (-1, 0, 1):
                if di == 0 and dj == 0:
                    continue
                k = (di + 1) * 3 + (dj + 1)
                s = di * W + dj                                # flat src offset
                src = pltpu.roll(y1, shift=(-s) % HW, axis=1)  # src[p] = y1[p+s]
                z = z + src * coef_ref[k]

        # act: GELU(fc1(x) + pos(fc1(x))); pos bias folded into pre-activation.
        g = _gelu_tanh(y1 + z + bpos)

        # TODO(synk): Dropout(drop) is identity here (drop=0.0 default / eval);
        # training dropout would use pltpu.prng_seed + pltpu.stateful_bernoulli.

        # fc2: 1x1 conv == (Cout, Chid) @ (Chid, HW) on the MXU.
        out = jnp.dot(w2, g.astype(matmul_dtype),
                      preferred_element_type=jnp.float32) + b2
        o_ref[b] = out.astype(o_ref.dtype)


# ---------------------------------------------------------------------------
# wrapper: NCHW in / NCHW out (same as the PyTorch module)
# ---------------------------------------------------------------------------
def mlp_forward(x_nchw, params, *, matmul_dtype=jnp.float32, epilogue_dtype=None,
                max_batch_block=8):
    if epilogue_dtype is None:
        epilogue_dtype = _default_epilogue_dtype()

    N, Cin, H, W = x_nchw.shape
    HW = H * W
    out_dtype = x_nchw.dtype

    w1 = params["w_fc1"].reshape(-1, Cin).astype(matmul_dtype)      # (Chid, Cin)
    Chid = w1.shape[0]
    b1 = params["b_fc1"].reshape(Chid, 1).astype(jnp.float32)
    w2 = params["w_fc2"].reshape(-1, Chid).astype(matmul_dtype)     # (Cout, Chid)
    Cout = w2.shape[0]
    b2 = params["b_fc2"].reshape(Cout, 1).astype(jnp.float32)

    # Depthwise taps with the zero-pad boundary masks folded in:
    #   coef[k] = wpos[k] (per-channel) * mask[k] (per-pixel)  -> (9, Chid, HW)
    wpos = jnp.transpose(params["w_pos"].reshape(Chid, 9))[:, :, None]  # (9,Chid,1)
    coef = (wpos * jnp.asarray(_dw_masks(H, W))).astype(epilogue_dtype)  # (9,Chid,HW)
    bpos = params["b_pos"].reshape(Chid, 1).astype(epilogue_dtype)
    # TODO(synk): for large Chid*HW, skip the materialized coef tensor and
    # build the row/col boundary masks in-kernel with broadcasted_iota compares.

    # (C, H*W) slabs: lane-dense loads/stores, no NCHW<->NHWC transposes.
    x = x_nchw.reshape(N, Cin, HW).astype(matmul_dtype)

    B = _pick_batch_block(N, max_batch_block)      # images per grid step
    grid = (N // B,)                               # >= 2 steps feeds both v7x TCs

    kernel = functools.partial(_mlp_fused_kernel, B=B, H=H, W=W,
                               matmul_dtype=matmul_dtype,
                               epilogue_dtype=epilogue_dtype)

    flops = 2 * N * HW * (Chid * Cin + 9 * Chid + Chid * Cout)
    transcendentals = N * HW * Chid
    const_bytes = sum(int(a.size) * a.dtype.itemsize
                      for a in (w1, b1, coef, bpos, w2, b2))
    bytes_accessed = (int(x.size) * x.dtype.itemsize + const_bytes
                      + N * Cout * HW * jnp.dtype(out_dtype).itemsize)

    # Explicit VMEM budget: double-buffered x/out blocks + resident constants
    # + a generous bound for the per-image hidden slabs (y1/z/g temporaries).
    x_blk = B * Cin * HW * x.dtype.itemsize
    o_blk = B * Cout * HW * jnp.dtype(out_dtype).itemsize
    hid = Chid * HW * (4 + 3 * jnp.dtype(epilogue_dtype).itemsize)
    est = 2 * (x_blk + o_blk) + 2 * const_bytes + 4 * hid
    vmem_limit = int(min(max(2 * est, 32 * 2**20), 50 * 2**20))  # < v7x 64 MiB phys

    out = pl.pallas_call(
        kernel,
        out_shape=jax.ShapeDtypeStruct((N, Cout, HW), out_dtype),
        grid_spec=pltpu.PrefetchScalarGridSpec(
            num_scalar_prefetch=0,
            grid=grid,
            in_specs=[
                pl.BlockSpec((B, Cin, HW), lambda n: (n, 0, 0)),
                # Grid-invariant operands below stay resident across the grid.
                # TODO(synk): pipeline_mode=pl.Buffered(1) on these would drop
                # the redundant second buffer (VMEM headroom on v7x's 64 MiB).
                pl.BlockSpec((Chid, Cin), lambda n: (0, 0)),
                pl.BlockSpec((Chid, 1), lambda n: (0, 0)),
                pl.BlockSpec((9, Chid, HW), lambda n: (0, 0, 0)),
                pl.BlockSpec((Chid, 1), lambda n: (0, 0)),
                pl.BlockSpec((Cout, Chid), lambda n: (0, 0)),
                pl.BlockSpec((Cout, 1), lambda n: (0, 0)),
            ],
            out_specs=pl.BlockSpec((B, Cout, HW), lambda n: (n, 0, 0)),
        ),
        compiler_params=pltpu.CompilerParams(
            dimension_semantics=("parallel",),
            vmem_limit_bytes=vmem_limit),
        cost_estimate=pl.CostEstimate(flops=flops,
                                      transcendentals=transcendentals,
                                      bytes_accessed=bytes_accessed),
    )(x, w1, b1, coef, bpos, w2, b2)

    # TODO(synk): for large H*W on v7x (64 MiB VMEM), add an HW-tiling path:
    # tile along H in multiples of 128 lanes with a one-row recomputed halo for
    # y1 (fc1 over H_tile+2 rows via a manual pltpu.make_async_copy of the
    # overlapping x rows); the flat-HW roll+mask trick must be redone per-tile
    # since rolls wrap within the tile.
    return out.reshape(N, Cout, H, W)


# ---------------------------------------------------------------------------
# pure-JAX reference (same tanh-GELU), for the correctness check
# ---------------------------------------------------------------------------
def reference_forward(x_nchw, params):
    P = jax.lax.Precision.HIGHEST
    dn = ("NCHW", "OIHW", "NCHW")
    Chid = params["w_fc1"].shape[0]
    y1 = jax.lax.conv_general_dilated(
        x_nchw, params["w_fc1"], (1, 1), "VALID", dimension_numbers=dn,
        precision=P) + params["b_fc1"][None, :, None, None]
    z = jax.lax.conv_general_dilated(
        y1, params["w_pos"], (1, 1), ((1, 1), (1, 1)), dimension_numbers=dn,
        feature_group_count=Chid, precision=P) + params["b_pos"][None, :, None, None]
    g = _gelu_tanh(y1 + z)
    out = jax.lax.conv_general_dilated(
        g, params["w_fc2"], (1, 1), "VALID", dimension_numbers=dn,
        precision=P) + params["b_fc2"][None, :, None, None]
    return out


if __name__ == "__main__":
    # Small shapes consistent with the module: in=32, hidden=64, out=32
    # (defaults to in_features), spatial 16x16 -> H*W = 256 lanes.  batch=4 so
    # the batch-blocked grid (B=2) still has 2 steps for v7x megacore.
    N, Cin, H, W = 4, 32, 16, 16
    Chid, Cout = 64, 32

    key = jax.random.PRNGKey(0)
    ks = jax.random.split(key, 7)
    params = {
        "w_fc1": 0.1 * jax.random.normal(ks[0], (Chid, Cin, 1, 1), jnp.float32),
        "b_fc1": 0.1 * jax.random.normal(ks[1], (Chid,), jnp.float32),
        "w_pos": 0.1 * jax.random.normal(ks[2], (Chid, 1, 3, 3), jnp.float32),
        "b_pos": 0.1 * jax.random.normal(ks[3], (Chid,), jnp.float32),
        "w_fc2": 0.1 * jax.random.normal(ks[4], (Cout, Chid, 1, 1), jnp.float32),
        "b_fc2": 0.1 * jax.random.normal(ks[5], (Cout,), jnp.float32),
    }
    x = jax.random.normal(ks[6], (N, Cin, H, W), jnp.float32)

    ref = jax.block_until_ready(reference_forward(x, params))
    ref_scale = float(jnp.max(jnp.abs(ref))) + 1e-6

    # Exact path: f32 matmul operands + f32 epilogue everywhere.
    exact_fn = jax.jit(lambda xx, pp: mlp_forward(
        xx, pp, matmul_dtype=jnp.float32, epilogue_dtype=jnp.float32))
    out = jax.block_until_ready(exact_fn(x, params))
    assert out.shape == (N, Cout, H, W), out.shape
    err = float(jnp.max(jnp.abs(out - ref)))
    assert err < 5e-2, f"f32 path max abs err {err}"

    # Fast path: bf16 matmul operands (f32 accumulation) + generation-dependent
    # epilogue (bf16 on v6e/v7x, f32 on v5e).  Relative-error gate.
    fast_fn = jax.jit(lambda xx, pp: mlp_forward(
        xx, pp, matmul_dtype=jnp.bfloat16, epilogue_dtype=None))
    out_fast = jax.block_until_ready(fast_fn(x, params))
    rel = float(jnp.max(jnp.abs(out_fast - ref))) / ref_scale
    assert rel < 6e-2, f"fast path max rel err {rel}"

    print("KERNEL_OK")
</pallas_src>

<mosaic_0001>
module attributes {stable_mosaic.version = 11 : i64} {
  func.func @_mlp_fused_kernel(%arg0: i32, %arg1: memref<2x32x256xf32, #tpu.memory_space<vmem>>, %arg2: memref<64x32xf32, #tpu.memory_space<vmem>>, %arg3: memref<64x1xf32, #tpu.memory_space<vmem>>, %arg4: memref<9x64x256xf32, #tpu.memory_space<vmem>>, %arg5: memref<64x1xf32, #tpu.memory_space<vmem>>, %arg6: memref<32x64xf32, #tpu.memory_space<vmem>>, %arg7: memref<32x1xf32, #tpu.memory_space<vmem>>, %arg8: memref<2x32x256xf32, #tpu.memory_space<vmem>>) attributes {dimension_semantics = [#tpu.dimension_semantics<parallel>], iteration_bounds = array<i64: 2>, scalar_prefetch = 0 : i64, scratch_operands = 0 : i64, tpu.core_type = #tpu.core_type<tc>, window_params = [{transform_indices = @transform_0, window_bounds = array<i64: 2, 32, 256>}, {pipeline_mode = #tpu.pipeline_mode<synchronous>, transform_indices = @transform_1, window_bounds = array<i64: 64, 32>}, {pipeline_mode = #tpu.pipeline_mode<synchronous>, transform_indices = @transform_2, window_bounds = array<i64: 64, 1>}, {pipeline_mode = #tpu.pipeline_mode<synchronous>, transform_indices = @transform_3, window_bounds = array<i64: 9, 64, 256>}, {pipeline_mode = #tpu.pipeline_mode<synchronous>, transform_indices = @transform_4, window_bounds = array<i64: 64, 1>}, {pipeline_mode = #tpu.pipeline_mode<synchronous>, transform_indices = @transform_5, window_bounds = array<i64: 32, 64>}, {pipeline_mode = #tpu.pipeline_mode<synchronous>, transform_indices = @transform_6, window_bounds = array<i64: 32, 1>}, {transform_indices = @transform_7, window_bounds = array<i64: 2, 32, 256>}]} {
    %c0 = arith.constant 0 : index
    %c0_0 = arith.constant 0 : index
    %0 = vector.load %arg2[%c0, %c0_0] : memref<64x32xf32, #tpu.memory_space<vmem>>, vector<64x32xf32>
    %c0_1 = arith.constant 0 : index
    %c0_2 = arith.constant 0 : index
    %1 = vector.load %arg3[%c0_1, %c0_2] : memref<64x1xf32, #tpu.memory_space<vmem>>, vector<64x1xf32>
    %c0_3 = arith.constant 0 : index
    %c0_4 = arith.constant 0 : index
    %2 = vector.load %arg6[%c0_3, %c0_4] : memref<32x64xf32, #tpu.memory_space<vmem>>, vector<32x64xf32>
    %c0_5 = arith.constant 0 : index
    %c0_6 = arith.constant 0 : index
    %3 = vector.load %arg7[%c0_5, %c0_6] : memref<32x1xf32, #tpu.memory_space<vmem>>, vector<32x1xf32>
    %c0_7 = arith.constant 0 : index
    %c0_8 = arith.constant 0 : index
    %4 = vector.load %arg5[%c0_7, %c0_8] : memref<64x1xf32, #tpu.memory_space<vmem>>, vector<64x1xf32>
    %c0_9 = arith.constant 0 : index
    %c0_10 = arith.constant 0 : index
    %c0_11 = arith.constant 0 : index
    %5 = vector.load %arg1[%c0_9, %c0_10, %c0_11] : memref<2x32x256xf32, #tpu.memory_space<vmem>>, vector<1x32x256xf32>
    %6 = vector.shape_cast %5 : vector<1x32x256xf32> to vector<32x256xf32>
    %cst = arith.constant dense<0.000000e+00> : vector<64x256xf32>
    %7 = tpu.matmul %0, %6, %cst {dimension_numbers = #tpu.dot_dimension_numbers<[1], [0], [0], [1], [0, 0, 1, 1], [], []>} : vector<64x32xf32>, vector<32x256xf32>, vector<64x256xf32> -> vector<64x256xf32>
    %8 = vector.broadcast %1 : vector<64x1xf32> to vector<64x256xf32>
    %9 = arith.addf %7, %8 : vector<64x256xf32>
    %c4 = arith.constant 4 : index
    %c0_12 = arith.constant 0 : index
    %c0_13 = arith.constant 0 : index
    %10 = vector.load %arg4[%c4, %c0_12, %c0_13] : memref<9x64x256xf32, #tpu.memory_space<vmem>>, vector<1x64x256xf32>
    %11 = vector.shape_cast %10 : vector<1x64x256xf32> to vector<64x256xf32>
    %12 = arith.mulf %9, %11 : vector<64x256xf32>
    %c17_i32 = arith.constant 17 : i32
    %13 = tpu.dynamic_rotate %9 by %c17_i32 dim 1 : vector<64x256xf32>, i32 -> vector<64x256xf32>
    %c0_14 = arith.constant 0 : index
    %c0_15 = arith.constant 0 : index
    %c0_16 = arith.constant 0 : index
    %14 = vector.load %arg4[%c0_14, %c0_15, %c0_16] : memref<9x64x256xf32, #tpu.memory_space<vmem>>, vector<1x64x256xf32>
    %15 = vector.shape_cast %14 : vector<1x64x256xf32> to vector<64x256xf32>
    %16 = arith.mulf %13, %15 : vector<64x256xf32>
    %17 = arith.addf %12, %16 : vector<64x256xf32>
    %c16_i32 = arith.constant 16 : i32
    %18 = tpu.dynamic_rotate %9 by %c16_i32 dim 1 : vector<64x256xf32>, i32 -> vector<64x256xf32>
    %c1 = arith.constant 1 : index
    %c0_17 = arith.constant 0 : index
    %c0_18 = arith.constant 0 : index
    %19 = vector.load %arg4[%c1, %c0_17, %c0_18] : memref<9x64x256xf32, #tpu.memory_space<vmem>>, vector<1x64x256xf32>
    %20 = vector.shape_cast %19 : vector<1x64x256xf32> to vector<64x256xf32>
    %21 = arith.mulf %18, %20 : vector<64x256xf32>
    %22 = arith.addf %17, %21 : vector<64x256xf32>
    %c15_i32 = arith.constant 15 : i32
    %23 = tpu.dynamic_rotate %9 by %c15_i32 dim 1 : vector<64x256xf32>, i32 -> vector<64x256xf32>
    %c2 = arith.constant 2 : index
    %c0_19 = arith.constant 0 : index
    %c0_20 = arith.constant 0 : index
    %24 = vector.load %arg4[%c2, %c0_19, %c0_20] : memref<9x64x256xf32, #tpu.memory_space<vmem>>, vector<1x64x256xf32>
    %25 = vector.shape_cast %24 : vector<1x64x256xf32> to vector<64x256xf32>
    %26 = arith.mulf %23, %25 : vector<64x256xf32>
    %27 = arith.addf %22, %26 : vector<64x256xf32>
    %c1_i32 = arith.constant 1 : i32
    %28 = tpu.dynamic_rotate %9 by %c1_i32 dim 1 : vector<64x256xf32>, i32 -> vector<64x256xf32>
    %c3 = arith.constant 3 : index
    %c0_21 = arith.constant 0 : index
    %c0_22 = arith.constant 0 : index
    %29 = vector.load %arg4[%c3, %c0_21, %c0_22] : memref<9x64x256xf32, #tpu.memory_space<vmem>>, vector<1x64x256xf32>
    %30 = vector.shape_cast %29 : vector<1x64x256xf32> to vector<64x256xf32>
    %31 = arith.mulf %28, %30 : vector<64x256xf32>
    %32 = arith.addf %27, %31 : vector<64x256xf32>
    %c255_i32 = arith.constant 255 : i32
    %33 = tpu.dynamic_rotate %9 by %c255_i32 dim 1 : vector<64x256xf32>, i32 -> vector<64x256xf32>
    %c5 = arith.constant 5 : index
    %c0_23 = arith.constant 0 : index
    %c0_24 = arith.constant 0 : index
    %34 = vector.load %arg4[%c5, %c0_23, %c0_24] : memref<9x64x256xf32, #tpu.memory_space<vmem>>, vector<1x64x256xf32>
    %35 = vector.shape_cast %34 : vector<1x64x256xf32> to vector<64x256xf32>
    %36 = arith.mulf %33, %35 : vector<64x256xf32>
    %37 = arith.addf %32, %36 : vector<64x256xf32>
    %c241_i32 = arith.constant 241 : i32
    %38 = tpu.dynamic_rotate %9 by %c241_i32 dim 1 : vector<64x256xf32>, i32 -> vector<64x256xf32>
    %c6 = arith.constant 6 : index
    %c0_25 = arith.constant 0 : index
    %c0_26 = arith.constant 0 : index
    %39 = vector.load %arg4[%c6, %c0_25, %c0_26] : memref<9x64x256xf32, #tpu.memory_space<vmem>>, vector<1x64x256xf32>
    %40 = vector.shape_cast %39 : vector<1x64x256xf32> to vector<64x256xf32>
    %41 = arith.mulf %38, %40 : vector<64x256xf32>
    %42 = arith.addf %37, %41 : vector<64x256xf32>
    %c240_i32 = arith.constant 240 : i32
    %43 = tpu.dynamic_rotate %9 by %c240_i32 dim 1 : vector<64x256xf32>, i32 -> vector<64x256xf32>
    %c7 = arith.constant 7 : index
    %c0_27 = arith.constant 0 : index
    %c0_28 = arith.constant 0 : index
    %44 = vector.load %arg4[%c7, %c0_27, %c0_28] : memref<9x64x256xf32, #tpu.memory_space<vmem>>, vector<1x64x256xf32>
    %45 = vector.shape_cast %44 : vector<1x64x256xf32> to vector<64x256xf32>
    %46 = arith.mulf %43, %45 : vector<64x256xf32>
    %47 = arith.addf %42, %46 : vector<64x256xf32>
    %c239_i32 = arith.constant 239 : i32
    %48 = tpu.dynamic_rotate %9 by %c239_i32 dim 1 : vector<64x256xf32>, i32 -> vector<64x256xf32>
    %c8 = arith.constant 8 : index
    %c0_29 = arith.constant 0 : index
    %c0_30 = arith.constant 0 : index
    %49 = vector.load %arg4[%c8, %c0_29, %c0_30] : memref<9x64x256xf32, #tpu.memory_space<vmem>>, vector<1x64x256xf32>
    %50 = vector.shape_cast %49 : vector<1x64x256xf32> to vector<64x256xf32>
    %51 = arith.mulf %48, %50 : vector<64x256xf32>
    %52 = arith.addf %47, %51 : vector<64x256xf32>
    %53 = arith.addf %9, %52 : vector<64x256xf32>
    %54 = vector.broadcast %4 : vector<64x1xf32> to vector<64x256xf32>
    %55 = arith.addf %53, %54 : vector<64x256xf32>
    %cst_31 = arith.constant 5.000000e-01 : f32
    %56 = vector.broadcast %cst_31 : f32 to vector<64x256xf32>
    %57 = arith.mulf %56, %55 : vector<64x256xf32>
    %cst_32 = arith.constant 4.471500e-02 : f32
    %58 = vector.broadcast %cst_32 : f32 to vector<64x256xf32>
    %59 = arith.mulf %58, %55 : vector<64x256xf32>
    %60 = arith.mulf %59, %55 : vector<64x256xf32>
    %61 = arith.mulf %60, %55 : vector<64x256xf32>
    %62 = arith.addf %55, %61 : vector<64x256xf32>
    %cst_33 = arith.constant 0.797884583 : f32
    %63 = vector.broadcast %cst_33 : f32 to vector<64x256xf32>
    %64 = arith.mulf %63, %62 : vector<64x256xf32>
    %65 = math.tanh %64 : vector<64x256xf32>
    %cst_34 = arith.constant 1.000000e+00 : f32
    %66 = vector.broadcast %cst_34 : f32 to vector<64x256xf32>
    %67 = arith.addf %66, %65 : vector<64x256xf32>
    %68 = arith.mulf %57, %67 : vector<64x256xf32>
    %cst_35 = arith.constant dense<0.000000e+00> : vector<32x256xf32>
    %69 = tpu.matmul %2, %68, %cst_35 {dimension_numbers = #tpu.dot_dimension_numbers<[1], [0], [0], [1], [0, 0, 1, 1], [], []>} : vector<32x64xf32>, vector<64x256xf32>, vector<32x256xf32> -> vector<32x256xf32>
    %70 = vector.broadcast %3 : vector<32x1xf32> to vector<32x256xf32>
    %71 = arith.addf %69, %70 : vector<32x256xf32>
    %c0_36 = arith.constant 0 : index
    %c0_37 = arith.constant 0 : index
    %c0_38 = arith.constant 0 : index
    %72 = vector.load %arg8[%c0_36, %c0_37, %c0_38] : memref<2x32x256xf32, #tpu.memory_space<vmem>>, vector<1x32x256xf32>
    %73 = vector.shape_cast %72 : vector<1x32x256xf32> to vector<32x256xf32>
    %74 = vector.shape_cast %71 : vector<32x256xf32> to vector<1x32x256xf32>
    tpu.vector_store %arg8[%c0_36, %c0_37, %c0_38], %74 {strides = array<i32>} : memref<2x32x256xf32, #tpu.memory_space<vmem>>, vector<1x32x256xf32>,
    %c1_39 = arith.constant 1 : index
    %c0_40 = arith.constant 0 : index
    %c0_41 = arith.constant 0 : index
    %75 = vector.load %arg1[%c1_39, %c0_40, %c0_41] : memref<2x32x256xf32, #tpu.memory_space<vmem>>, vector<1x32x256xf32>
    %76 = vector.shape_cast %75 : vector<1x32x256xf32> to vector<32x256xf32>
    %cst_42 = arith.constant dense<0.000000e+00> : vector<64x256xf32>
    %77 = tpu.matmul %0, %76, %cst_42 {dimension_numbers = #tpu.dot_dimension_numbers<[1], [0], [0], [1], [0, 0, 1, 1], [], []>} : vector<64x32xf32>, vector<32x256xf32>, vector<64x256xf32> -> vector<64x256xf32>
    %78 = vector.broadcast %1 : vector<64x1xf32> to vector<64x256xf32>
    %79 = arith.addf %77, %78 : vector<64x256xf32>
    %c4_43 = arith.constant 4 : index
    %c0_44 = arith.constant 0 : index
    %c0_45 = arith.constant 0 : index
    %80 = vector.load %arg4[%c4_43, %c0_44, %c0_45] : memref<9x64x256xf32, #tpu.memory_space<vmem>>, vector<1x64x256xf32>
    %81 = vector.shape_cast %80 : vector<1x64x256xf32> to vector<64x256xf32>
    %82 = arith.mulf %79, %81 : vector<64x256xf32>
    %c17_i32_46 = arith.constant 17 : i32
    %83 = tpu.dynamic_rotate %79 by %c17_i32_46 dim 1 : vector<64x256xf32>, i32 -> vector<64x256xf32>
    %c0_47 = arith.constant 0 : index
    %c0_48 = arith.constant 0 : index
    %c0_49 = arith.constant 0 : index
    %84 = vector.load %arg4[%c0_47, %c0_48, %c0_49] : memref<9x64x256xf32, #tpu.memory_space<vmem>>, vector<1x64x256xf32>
    %85 = vector.shape_cast %84 : vector<1x64x256xf32> to vector<64x256xf32>
    %86 = arith.mulf %83, %85 : vector<64x256xf32>
    %87 = arith.addf %82, %86 : vector<64x256xf32>
    %c16_i32_50 = arith.constant 16 : i32
    %88 = tpu.dynamic_rotate %79 by %c16_i32_50 dim 1 : vector<64x256xf32>, i32 -> vector<64x256xf32>
    %c1_51 = arith.constant 1 : index
    %c0_52 = arith.constant 0 : index
    %c0_53 = arith.constant 0 : index
    %89 = vector.load %arg4[%c1_51, %c0_52, %c0_53] : memref<9x64x256xf32, #tpu.memory_space<vmem>>, vector<1x64x256xf32>
    %90 = vector.shape_cast %89 : vector<1x64x256xf32> to vector<64x256xf32>
    %91 = arith.mulf %88, %90 : vector<64x256xf32>
    %92 = arith.addf %87, %91 : vector<64x256xf32>
    %c15_i32_54 = arith.constant 15 : i32
    %93 = tpu.dynamic_rotate %79 by %c15_i32_54 dim 1 : vector<64x256xf32>, i32 -> vector<64x256xf32>
    %c2_55 = arith.constant 2 : index
    %c0_56 = arith.constant 0 : index
    %c0_57 = arith.constant 0 : index
    %94 = vector.load %arg4[%c2_55, %c0_56, %c0_57] : memref<9x64x256xf32, #tpu.memory_space<vmem>>, vector<1x64x256xf32>
    %95 = vector.shape_cast %94 : vector<1x64x256xf32> to vector<64x256xf32>
    %96 = arith.mulf %93, %95 : vector<64x256xf32>
    %97 = arith.addf %92, %96 : vector<64x256xf32>
    %c1_i32_58 = arith.constant 1 : i32
    %98 = tpu.dynamic_rotate %79 by %c1_i32_58 dim 1 : vector<64x256xf32>, i32 -> vector<64x256xf32>
    %c3_59 = arith.constant 3 : index
    %c0_60 = arith.constant 0 : index
    %c0_61 = arith.constant 0 : index
    %99 = vector.load %arg4[%c3_59, %c0_60, %c0_61] : memref<9x64x256xf32, #tpu.memory_space<vmem>>, vector<1x64x256xf32>
    %100 = vector.shape_cast %99 : vector<1x64x256xf32> to vector<64x256xf32>
    %101 = arith.mulf %98, %100 : vector<64x256xf32>
    %102 = arith.addf %97, %101 : vector<64x256xf32>
    %c255_i32_62 = arith.constant 255 : i32
    %103 = tpu.dynamic_rotate %79 by %c255_i32_62 dim 1 : vector<64x256xf32>, i32 -> vector<64x256xf32>
    %c5_63 = arith.constant 5 : index
    %c0_64 = arith.constant 0 : index
    %c0_65 = arith.constant 0 : index
    %104 = vector.load %arg4[%c5_63, %c0_64, %c0_65] : memref<9x64x256xf32, #tpu.memory_space<vmem>>, vector<1x64x256xf32>
    %105 = vector.shape_cast %104 : vector<1x64x256xf32> to vector<64x256xf32>
    %106 = arith.mulf %103, %105 : vector<64x256xf32>
    %107 = arith.addf %102, %106 : vector<64x256xf32>
    %c241_i32_66 = arith.constant 241 : i32
    %108 = tpu.dynamic_rotate %79 by %c241_i32_66 dim 1 : vector<64x256xf32>, i32 -> vector<64x256xf32>
    %c6_67 = arith.constant 6 : index
    %c0_68 = arith.constant 0 : index
    %c0_69 = arith.constant 0 : index
    %109 = vector.load %arg4[%c6_67, %c0_68, %c0_69] : memref<9x64x256xf32, #tpu.memory_space<vmem>>, vector<1x64x256xf32>
    %110 = vector.shape_cast %109 : vector<1x64x256xf32> to vector<64x256xf32>
    %111 = arith.mulf %108, %110 : vector<64x256xf32>
    %112 = arith.addf %107, %111 : vector<64x256xf32>
    %c240_i32_70 = arith.constant 240 : i32
    %113 = tpu.dynamic_rotate %79 by %c240_i32_70 dim 1 : vector<64x256xf32>, i32 -> vector<64x256xf32>
    %c7_71 = arith.constant 7 : index
    %c0_72 = arith.constant 0 : index
    %c0_73 = arith.constant 0 : index
    %114 = vector.load %arg4[%c7_71, %c0_72, %c0_73] : memref<9x64x256xf32, #tpu.memory_space<vmem>>, vector<1x64x256xf32>
    %115 = vector.shape_cast %114 : vector<1x64x256xf32> to vector<64x256xf32>
    %116 = arith.mulf %113, %115 : vector<64x256xf32>
    %117 = arith.addf %112, %116 : vector<64x256xf32>
    %c239_i32_74 = arith.constant 239 : i32
    %118 = tpu.dynamic_rotate %79 by %c239_i32_74 dim 1 : vector<64x256xf32>, i32 -> vector<64x256xf32>
    %c8_75 = arith.constant 8 : index
    %c0_76 = arith.constant 0 : index
    %c0_77 = arith.constant 0 : index
    %119 = vector.load %arg4[%c8_75, %c0_76, %c0_77] : memref<9x64x256xf32, #tpu.memory_space<vmem>>, vector<1x64x256xf32>
    %120 = vector.shape_cast %119 : vector<1x64x256xf32> to vector<64x256xf32>
    %121 = arith.mulf %118, %120 : vector<64x256xf32>
    %122 = arith.addf %117, %121 : vector<64x256xf32>
    %123 = arith.addf %79, %122 : vector<64x256xf32>
    %124 = vector.broadcast %4 : vector<64x1xf32> to vector<64x256xf32>
    %125 = arith.addf %123, %124 : vector<64x256xf32>
    %cst_78 = arith.constant 5.000000e-01 : f32
    %126 = vector.broadcast %cst_78 : f32 to vector<64x256xf32>
    %127 = arith.mulf %126, %125 : vector<64x256xf32>
    %cst_79 = arith.constant 4.471500e-02 : f32
    %128 = vector.broadcast %cst_79 : f32 to vector<64x256xf32>
    %129 = arith.mulf %128, %125 : vector<64x256xf32>
    %130 = arith.mulf %129, %125 : vector<64x256xf32>
    %131 = arith.mulf %130, %125 : vector<64x256xf32>
    %132 = arith.addf %125, %131 : vector<64x256xf32>
    %cst_80 = arith.constant 0.797884583 : f32
    %133 = vector.broadcast %cst_80 : f32 to vector<64x256xf32>
    %134 = arith.mulf %133, %132 : vector<64x256xf32>
    %135 = math.tanh %134 : vector<64x256xf32>
    %cst_81 = arith.constant 1.000000e+00 : f32
    %136 = vector.broadcast %cst_81 : f32 to vector<64x256xf32>
    %137 = arith.addf %136, %135 : vector<64x256xf32>
    %138 = arith.mulf %127, %137 : vector<64x256xf32>
    %cst_82 = arith.constant dense<0.000000e+00> : vector<32x256xf32>
    %139 = tpu.matmul %2, %138, %cst_82 {dimension_numbers = #tpu.dot_dimension_numbers<[1], [0], [0], [1], [0, 0, 1, 1], [], []>} : vector<32x64xf32>, vector<64x256xf32>, vector<32x256xf32> -> vector<32x256xf32>
    %140 = vector.broadcast %3 : vector<32x1xf32> to vector<32x256xf32>
    %141 = arith.addf %139, %140 : vector<32x256xf32>
    %c1_83 = arith.constant 1 : index
    %c0_84 = arith.constant 0 : index
    %c0_85 = arith.constant 0 : index
    %142 = vector.load %arg8[%c1_83, %c0_84, %c0_85] : memref<2x32x256xf32, #tpu.memory_space<vmem>>, vector<1x32x256xf32>
    %143 = vector.shape_cast %142 : vector<1x32x256xf32> to vector<32x256xf32>
    %144 = vector.shape_cast %141 : vector<32x256xf32> to vector<1x32x256xf32>
    tpu.vector_store %arg8[%c1_83, %c0_84, %c0_85], %144 {strides = array<i32>} : memref<2x32x256xf32, #tpu.memory_space<vmem>>, vector<1x32x256xf32>,
    return
  }
  func.func @transform_0(%arg0: i32) -> (i32, i32, i32) {
    %c0_i32 = arith.constant 0 : i32
    %c0_i32_0 = arith.constant 0 : i32
    %c0_i32_1 = arith.constant 0 : i32
    return %arg0, %c0_i32, %c0_i32_0 : i32, i32, i32
  }
  func.func @transform_1(%arg0: i32) -> (i32, i32) {
    %c0_i32 = arith.constant 0 : i32
    %c0_i32_0 = arith.constant 0 : i32
    %c0_i32_1 = arith.constant 0 : i32
    return %c0_i32, %c0_i32_0 : i32, i32
  }
  func.func @transform_2(%arg0: i32) -> (i32, i32) {
    %c0_i32 = arith.constant 0 : i32
    %c0_i32_0 = arith.constant 0 : i32
    %c0_i32_1 = arith.constant 0 : i32
    return %c0_i32, %c0_i32_0 : i32, i32
  }
  func.func @transform_3(%arg0: i32) -> (i32, i32, i32) {
    %c0_i32 = arith.constant 0 : i32
    %c0_i32_0 = arith.constant 0 : i32
    %c0_i32_1 = arith.constant 0 : i32
    %c0_i32_2 = arith.constant 0 : i32
    return %c0_i32, %c0_i32_0, %c0_i32_1 : i32, i32, i32
  }
  func.func @transform_4(%arg0: i32) -> (i32, i32) {
    %c0_i32 = arith.constant 0 : i32
    %c0_i32_0 = arith.constant 0 : i32
    %c0_i32_1 = arith.constant 0 : i32
    return %c0_i32, %c0_i32_0 : i32, i32
  }
  func.func @transform_5(%arg0: i32) -> (i32, i32) {
    %c0_i32 = arith.constant 0 : i32
    %c0_i32_0 = arith.constant 0 : i32
    %c0_i32_1 = arith.constant 0 : i32
    return %c0_i32, %c0_i32_0 : i32, i32
  }
  func.func @transform_6(%arg0: i32) -> (i32, i32) {
    %c0_i32 = arith.constant 0 : i32
    %c0_i32_0 = arith.constant 0 : i32
    %c0_i32_1 = arith.constant 0 : i32
    return %c0_i32, %c0_i32_0 : i32, i32
  }
  func.func @transform_7(%arg0: i32) -> (i32, i32, i32) {
    %c0_i32 = arith.constant 0 : i32
    %c0_i32_0 = arith.constant 0 : i32
    %c0_i32_1 = arith.constant 0 : i32
    return %arg0, %c0_i32, %c0_i32_0 : i32, i32, i32
  }
}

</mosaic_0001>

<llo_original>
// kernel: _lambda_.1
$region0: #{_lambda_.1}
  #allocation0 [shape = 'u32[]', space=smem, size = 0x4, offset = 0x4, fixed_abs, tag = 'smem constant byte address 0x4 - core index']
  #allocation1 [shape = 'u32[72,128]{1,0:T(1,128)}', space=vmem, size = 0x9000, scoped, tag = 'internal scratch']
  %s0 = inlined_call_operand.vmem [shape: f32[4,32,256], index: 0, kind: input, shape index: {}]
  %s1 = inlined_call_operand.vmem [shape: f32[64,32], index: 1, kind: input, shape index: {}]
  %s2 = inlined_call_operand.vmem [shape: f32[64,1], index: 2, kind: input, shape index: {}]
  %s3 = inlined_call_operand.vmem [shape: f32[9,64,256], index: 3, kind: input, shape index: {}]
  %s4 = inlined_call_operand.vmem [shape: f32[64,1], index: 4, kind: input, shape index: {}]
  %s5 = inlined_call_operand.vmem [shape: f32[32,64], index: 5, kind: input, shape index: {}]
  %s6 = inlined_call_operand.vmem [shape: f32[32,1], index: 6, kind: input, shape index: {}]
  %s7 = inlined_call_operand.vmem [shape: f32[4,32,256], index: 7, kind: output, shape index: {}]
  %s8 = sld [smem:[#allocation0]]
  $region61: #{_lambda_.1} parent=0
    _
  %s10 = ssub.s32 1, %s8
  %s11 = scalar_select 0, %s10, %s8
  loop: start=0, step=1, limit=4
  $region2: #{_lambda_.1} parent=0 // loop_pre_header
    _
  $region3: #{_lambda_.1} parent=0 // loop_header
    %s13 = sphi 0, %s17
    %p14 = scmp.ge.s32.totalorder %s13, 4
    %s23 = sphi 0, %s25
    %s26 = sphi 0, %s23
    %s27 = sphi 0, %s26
    %s43 = sphi 0, %s27
    %s47 = sphi 0, %s47
    %s49 = sphi 0, %s47
    %s50 = sphi 0, %s49
    %s64 = sphi 0, %s50
    %s68 = sphi 0, %s68
    %s70 = sphi 0, %s68
    %s71 = sphi 0, %s70
    %s85 = sphi 0, %s71
    %s89 = sphi 0, %s89
    %s91 = sphi 0, %s89
    %s92 = sphi 0, %s91
    %s106 = sphi 0, %s92
    %s110 = sphi 0, %s110
    %s112 = sphi 0, %s110
    %s113 = sphi 0, %s112
    %s127 = sphi 0, %s113
    %s131 = sphi 0, %s131
    %s133 = sphi 0, %s131
    %s134 = sphi 0, %s133
    %s148 = sphi 0, %s134
    %s152 = sphi 0, %s152
    %s154 = sphi 0, %s152
    %s155 = sphi 0, %s154
    %s169 = sphi 0, %s155
    %s175 = sphi 0, %s177
    %s178 = sphi 0, %s175
    %s179 = sphi 0, %s178
    %s195 = sphi 0, %s179
  $region4: #{_lambda_.1} parent=0 // loop_header_branch
    %16 = sbr.rel (%p14) target = $region8
  $region5: #{_lambda_.1} parent=0 // loop_body
    %s18 = ssub.s32 %s13, 1
    %s19 = ssub.s32 %s13, 2
    %s20 = sadd.s32 %s13, 1
    %s21 = ssub.s32 %s13, %s20
    %p22 = scmp.eq.s32.totalorder %s21, 0
    %s24 = sadd.s32 %s23, 1
    %s25 = scalar_select %p22, %s23, %s24
    %p28 = pneg %p22
    %p29 = scmp.eq.s32.totalorder %s13, 1
    %p30 = por %p28, %p29
    %p31 = scmp.ne.s32.totalorder %s23, %s26
    %p32 = scmp.eq.s32.totalorder %s13, 0
    %p33 = por %p31, %p32
    %p34 = scmp.ne.s32.totalorder %s23, %s26
    %p35 = scmp.eq.s32.totalorder %s18, 1
    %p36 = por %p34, %p35
    %p37 = scmp.ne.s32.totalorder %s26, %s27
    %p38 = scmp.eq.s32.totalorder %s18, 0
    %p39 = por %p37, %p38
    %p40 = scmp.ne.s32.totalorder %s26, %s27
    %p41 = scmp.eq.s32.totalorder %s19, 1
    %p42 = por %p40, %p41
    %p44 = scmp.ne.s32.totalorder %s27, %s43
    %p45 = scmp.eq.s32.totalorder %s19, 0
    %p46 = por %p44, %p45
    %s48 = sadd.s32 %s47, 1
    %p51 = scmp.eq.s32.totalorder %s13, 1
    %p52 = scmp.ne.s32.totalorder %s47, %s49
    %p53 = scmp.eq.s32.totalorder %s13, 0
    %p54 = por %p52, %p53
    %p55 = scmp.ne.s32.totalorder %s47, %s49
    %p56 = scmp.eq.s32.totalorder %s18, 1
    %p57 = por %p55, %p56
    %p58 = scmp.ne.s32.totalorder %s49, %s50
    %p59 = scmp.eq.s32.totalorder %s18, 0
    %p60 = por %p58, %p59
    %p61 = scmp.ne.s32.totalorder %s49, %s50
    %p62 = scmp.eq.s32.totalorder %s19, 1
    %p63 = por %p61, %p62
    %p65 = scmp.ne.s32.totalorder %s50, %s64
    %p66 = scmp.eq.s32.totalorder %s19, 0
    %p67 = por %p65, %p66
    %s69 = sadd.s32 %s68, 1
    %p72 = scmp.eq.s32.totalorder %s13, 1
    %p73 = scmp.ne.s32.totalorder %s68, %s70
    %p74 = scmp.eq.s32.totalorder %s13, 0
    %p75 = por %p73, %p74
    %p76 = scmp.ne.s32.totalorder %s68, %s70
    %p77 = scmp.eq.s32.totalorder %s18, 1
    %p78 = por %p76, %p77
    %p79 = scmp.ne.s32.totalorder %s70, %s71
    %p80 = scmp.eq.s32.totalorder %s18, 0
    %p81 = por %p79, %p80
    %p82 = scmp.ne.s32.totalorder %s70, %s71
    %p83 = scmp.eq.s32.totalorder %s19, 1
    %p84 = por %p82, %p83
    %p86 = scmp.ne.s32.totalorder %s71, %s85
    %p87 = scmp.eq.s32.totalorder %s19, 0
    %p88 = por %p86, %p87
    %s90 = sadd.s32 %s89, 1
    %p93 = scmp.eq.s32.totalorder %s13, 1
    %p94 = scmp.ne.s32.totalorder %s89, %s91
    %p95 = scmp.eq.s32.totalorder %s13, 0
    %p96 = por %p94, %p95
    %p97 = scmp.ne.s32.totalorder %s89, %s91
    %p98 = scmp.eq.s32.totalorder %s18, 1
    %p99 = por %p97, %p98
    %p100 = scmp.ne.s32.totalorder %s91, %s92
    %p101 = scmp.eq.s32.totalorder %s18, 0
    %p102 = por %p100, %p101
    %p103 = scmp.ne.s32.totalorder %s91, %s92
    %p104 = scmp.eq.s32.totalorder %s19, 1
    %p105 = por %p103, %p104
    %p107 = scmp.ne.s32.totalorder %s92, %s106
    %p108 = scmp.eq.s32.totalorder %s19, 0
    %p109 = por %p107, %p108
    %s111 = sadd.s32 %s110, 1
    %p114 = scmp.eq.s32.totalorder %s13, 1
    %p115 = scmp.ne.s32.totalorder %s110, %s112
    %p116 = scmp.eq.s32.totalorder %s13, 0
    %p117 = por %p115, %p116
    %p118 = scmp.ne.s32.totalorder %s110, %s112
    %p119 = scmp.eq.s32.totalorder %s18, 1
    %p120 = por %p118, %p119
    %p121 = scmp.ne.s32.totalorder %s112, %s113
    %p122 = scmp.eq.s32.totalorder %s18, 0
    %p123 = por %p121, %p122
    %p124 = scmp.ne.s32.totalorder %s112, %s113
    %p125 = scmp.eq.s32.totalorder %s19, 1
    %p126 = por %p124, %p125
    %p128 = scmp.ne.s32.totalorder %s113, %s127
    %p129 = scmp.eq.s32.totalorder %s19, 0
    %p130 = por %p128, %p129
    %s132 = sadd.s32 %s131, 1
    %p135 = scmp.eq.s32.totalorder %s13, 1
    %p136 = scmp.ne.s32.totalorder %s131, %s133
    %p137 = scmp.eq.s32.totalorder %s13, 0
    %p138 = por %p136, %p137
    %p139 = scmp.ne.s32.totalorder %s131, %s133
    %p140 = scmp.eq.s32.totalorder %s18, 1
    %p141 = por %p139, %p140
    %p142 = scmp.ne.s32.totalorder %s133, %s134
    %p143 = scmp.eq.s32.totalorder %s18, 0
    %p144 = por %p142, %p143
    %p145 = scmp.ne.s32.totalorder %s133, %s134
    %p146 = scmp.eq.s32.totalorder %s19, 1
    %p147 = por %p145, %p146
    %p149 = scmp.ne.s32.totalorder %s134, %s148
    %p150 = scmp.eq.s32.totalorder %s19, 0
    %p151 = por %p149, %p150
    %s153 = sadd.s32 %s152, 1
    %p156 = scmp.eq.s32.totalorder %s13, 1
    %p157 = scmp.ne.s32.totalorder %s152, %s154
    %p158 = scmp.eq.s32.totalorder %s13, 0
    %p159 = por %p157, %p158
    %p160 = scmp.ne.s32.totalorder %s152, %s154
    %p161 = scmp.eq.s32.totalorder %s18, 1
    %p162 = por %p160, %p161
    %p163 = scmp.ne.s32.totalorder %s154, %s155
    %p164 = scmp.eq.s32.totalorder %s18, 0
    %p165 = por %p163, %p164
    %p166 = scmp.ne.s32.totalorder %s154, %s155
    %p167 = scmp.eq.s32.totalorder %s19, 1
    %p168 = por %p166, %p167
    %p170 = scmp.ne.s32.totalorder %s155, %s169
    %p171 = scmp.eq.s32.totalorder %s19, 0
    %p172 = por %p170, %p171
    %s173 = ssub.s32 %s13, %s20
    %p174 = scmp.eq.s32.totalorder %s173, 0
    %s176 = sadd.s32 %s175, 1
    %s177 = scalar_select %p174, %s175, %s176
    %p180 = pneg %p174
    %p181 = scmp.eq.s32.totalorder %s13, 1
    %p182 = por %p180, %p181
    %p183 = scmp.ne.s32.totalorder %s175, %s178
    %p184 = scmp.eq.s32.totalorder %s13, 0
    %p185 = por %p183, %p184
    %p186 = scmp.ne.s32.totalorder %s175, %s178
    %p187 = scmp.eq.s32.totalorder %s18, 1
    %p188 = por %p186, %p187
    %p189 = scmp.ne.s32.totalorder %s178, %s179
    %p190 = scmp.eq.s32.totalorder %s18, 0
    %p191 = por %p189, %p190
    %p192 = scmp.ne.s32.totalorder %s178, %s179
    %p193 = scmp.eq.s32.totalorder %s19, 1
    %p194 = por %p192, %p193
    %p196 = scmp.ne.s32.totalorder %s179, %s195
    %p197 = scmp.eq.s32.totalorder %s19, 0
    %p198 = por %p196, %p197
    %p199 = scmp.le.s32.totalorder 1, %s13
    %p200 = scmp.lt.s32.totalorder %s13, 3
    %p201 = pnand %p199, %p200
    %p202 = pneg %p201
    // Predicated region
    $region9: #{_lambda_.1} parent=5 // pred_check
      _
    $region10: #{_lambda_.1} parent=5 // pred_check_branch
      %204 = sbr.rel (%p201) target = $region12
    $region11: #{_lambda_.1} parent=5 // pred_region
      %s205 = ssub.s32 %s13, 1
      // Predicated region
      $region13: #{_lambda_.1} parent=11 // pred_check
        %p206 = pneg %p60
      $region14: #{_lambda_.1} parent=11 // pred_check_branch
        %208 = sbr.rel (%p206) target = $region16
      $region15: #{_lambda_.1} parent=11 // pred_region
        _
      $region16: #{_lambda_.1} parent=11 // pred_fallthru
        _
      // Predicated region
      $region17: #{_lambda_.1} parent=11 // pred_check
        %p209 = pneg %p81
      $region18: #{_lambda_.1} parent=11 // pred_check_branch
        %211 = sbr.rel (%p209) target = $region20
      $region19: #{_lambda_.1} parent=11 // pred_region
        _
      $region20: #{_lambda_.1} parent=11 // pred_fallthru
        _
      // Predicated region
      $region21: #{_lambda_.1} parent=11 // pred_check
        %p212 = pneg %p102
      $region22: #{_lambda_.1} parent=11 // pred_check_branch
        %214 = sbr.rel (%p212) target = $region24
      $region23: #{_lambda_.1} parent=11 // pred_region
        _
      $region24: #{_lambda_.1} parent=11 // pred_fallthru
        _
      // Predicated region
      $region25: #{_lambda_.1} parent=11 // pred_check
        %p215 = pneg %p123
      $region26: #{_lambda_.1} parent=11 // pred_check_branch
        %217 = sbr.rel (%p215) target = $region28
      $region27: #{_lambda_.1} parent=11 // pred_region
        _
      $region28: #{_lambda_.1} parent=11 // pred_fallthru
        _
      // Predicated region
      $region29: #{_lambda_.1} parent=11 // pred_check
        %p218 = pneg %p144
      $region30: #{_lambda_.1} parent=11 // pred_check_branch
        %220 = sbr.rel (%p218) target = $region32
      $region31: #{_lambda_.1} parent=11 // pred_region
        _
      $region32: #{_lambda_.1} parent=11 // pred_fallthru
        _
      // Predicated region
      $region33: #{_lambda_.1} parent=11 // pred_check
        %p221 = pneg %p165
      $region34: #{_lambda_.1} parent=11 // pred_check_branch
        %223 = sbr.rel (%p221) target = $region36
      $region35: #{_lambda_.1} parent=11 // pred_region
        _
      $region36: #{_lambda_.1} parent=11 // pred_fallthru
        _
    $region12: #{_lambda_.1} parent=5 // pred_fallthru
      _
    %p224 = scmp.lt.s32.totalorder %s13, 2
    // Predicated region
    $region37: #{_lambda_.1} parent=5 // pred_check
      %p225 = pneg %p224
    $region38: #{_lambda_.1} parent=5 // pred_check_branch
      %227 = sbr.rel (%p225) target = $region40
    $region39: #{_lambda_.1} parent=5 // pred_region
      // Predicated region
      $region41: #{_lambda_.1} parent=39 // pred_check
        %p228 = pneg %p33
      $region42: #{_lambda_.1} parent=39 // pred_check_branch
        %230 = sbr.rel (%p228) target = $region44
      $region43: #{_lambda_.1} parent=39 // pred_region
        %s231 = smul.u32 2, %s13
        %p232 = scmp.lt.s32.totalorder %s231, 3
        %s233 = scalar_select %p232, %s231, 3
        %s234 = smul.addr %s233, 8
        %s235 = smul.addr %s234, 8
        %s236 = scalar_lea.vmem %s0, %s235
        %s237 = smul.u32 2, %s13
      $region44: #{_lambda_.1} parent=39 // pred_fallthru
        _
    $region40: #{_lambda_.1} parent=5 // pred_fallthru
      _
    %p238 = scmp.le.s32.totalorder 1, %s13
    %p239 = scmp.lt.s32.totalorder %s13, 3
    %p240 = pnand %p238, %p239
    %p241 = pneg %p240
    // Predicated region
    $region45: #{_lambda_.1} parent=5 // pred_check
      _
    $region46: #{_lambda_.1} parent=5 // pred_check_branch
      %243 = sbr.rel (%p240) target = $region48
    $region47: #{_lambda_.1} parent=5 // pred_region
      %s244 = ssub.s32 %s13, 1
      %s245 = smul.u32 2, %s18
      %p246 = scmp.lt.s32.totalorder %s245, 3
      %s247 = scalar_select %p246, %s245, 3
      %s248 = smul.addr %s247, 8
      %s249 = smul.addr %s248, 8
      %s250 = scalar_lea.vmem %s0, %s249
      %p251 = pneg %p39
      %p252 = pneg %p36
      %p253 = pneg %p60
      %p254 = pneg %p57
      %p255 = pneg %p81
      %p256 = pneg %p78
      %p257 = pneg %p102
      %p258 = pneg %p99
      %p259 = pneg %p123
      %p260 = pneg %p120
      %p261 = pneg %p144
      %p262 = pneg %p141
      %p263 = pneg %p165
      %p264 = pneg %p162
      %p265 = pneg %p191
      %p266 = pneg %p188
      %s267 = smul.u32 2, %s18
      %p268 = scmp.lt.s32.totalorder %s267, 3
      %s269 = scalar_select %p268, %s267, 3
      %s270 = smul.addr %s269, 8
      %s271 = smul.addr %s270, 8
      %s272 = scalar_lea.vmem %s7, %s271
      %s273 = smul.u32 2, %s18
      %p274 = scmp.lt.s32.totalorder %s273, 3
      %s275 = scalar_select %p274, %s273, 3
      %s276 = smul.addr %s275, 8
      %s277 = smul.addr %s276, 8
      %s278 = scalar_lea.vmem %s0, %s277
      %s279 = smul.u32 2, %s18
      %s280 = smul.u32 2, %s18
      %p281 = scmp.lt.s32.totalorder %s280, 3
      %s282 = scalar_select %p281, %s280, 3
      %s283 = smul.addr %s282, 8
      %s284 = smul.addr %s283, 8
      %s285 = scalar_lea.vmem %s7, %s284
      %s286 = smul.u32 2, %s18
      %v287 = vld [vmem:[%s1] sm:$0xff]
      %v288 = vld [vmem:[%s1 + $0x8] sm:$0xff]
      %v289 = vld [vmem:[%s1 + $0x10] sm:$0xff]
      %v290 = vld [vmem:[%s1 + $0x18] sm:$0xff]
      %v291 = vld [vmem:[%s1 + $0x20] sm:$0xff]
      %v292 = vld [vmem:[%s1 + $0x28] sm:$0xff]
      %v293 = vld [vmem:[%s1 + $0x30] sm:$0xff]
      %v294 = vld [vmem:[%s1 + $0x38] sm:$0xff]
      %v295 = vld [vmem:[%s2] sm:$0xff]
      %v296 = vld [vmem:[%s2 + $0x8] sm:$0xff]
      %v297 = vld [vmem:[%s2 + $0x10] sm:$0xff]
      %v298 = vld [vmem:[%s2 + $0x18] sm:$0xff]
      %v299 = vld [vmem:[%s2 + $0x20] sm:$0xff]
      %v300 = vld [vmem:[%s2 + $0x28] sm:$0xff]
      %v301 = vld [vmem:[%s2 + $0x30] sm:$0xff]
      %v302 = vld [vmem:[%s2 + $0x38] sm:$0xff]
      %v303 = vld [vmem:[%s5] sm:$0xff]
      %v304 = vld [vmem:[%s5 + $0x8] sm:$0xff]
      %v305 = vld [vmem:[%s5 + $0x10] sm:$0xff]
      %v306 = vld [vmem:[%s5 + $0x18] sm:$0xff]
      %v307 = vld [vmem:[%s6] sm:$0xff]
      %v308 = vld [vmem:[%s6 + $0x8] sm:$0xff]
      %v309 = vld [vmem:[%s6 + $0x10] sm:$0xff]
      %v310 = vld [vmem:[%s6 + $0x18] sm:$0xff]
      %v311 = vld [vmem:[%s4] sm:$0xff]
      %v312 = vld [vmem:[%s4 + $0x8] sm:$0xff]
      %v313 = vld [vmem:[%s4 + $0x10] sm:$0xff]
      %v314 = vld [vmem:[%s4 + $0x18] sm:$0xff]
      %v315 = vld [vmem:[%s4 + $0x20] sm:$0xff]
      %v316 = vld [vmem:[%s4 + $0x28] sm:$0xff]
      %v317 = vld [vmem:[%s4 + $0x30] sm:$0xff]
      %v318 = vld [vmem:[%s4 + $0x38] sm:$0xff]
      %v319 = vld [vmem:[%s278] sm:$0xff]
      %v320 = vld [vmem:[%s278 + $0x8] sm:$0xff]
      %v321 = vld [vmem:[%s278 + $0x10] sm:$0xff]
      %v322 = vld [vmem:[%s278 + $0x18] sm:$0xff]
      %v323 = vld [vmem:[%s278 + $0x20] sm:$0xff]
      %v324 = vld [vmem:[%s278 + $0x28] sm:$0xff]
      %v325 = vld [vmem:[%s278 + $0x30] sm:$0xff]
      %v326 = vld [vmem:[%s278 + $0x38] sm:$0xff]
      %328 = vset.pattern.permute.xlu0 0
      %329 = vperm.xlu0 %328, %v295
      %v330 = vpop.permute.xlu0 %329
      %333 = vset.pattern.permute.xlu0 0
      %334 = vperm.xlu0 %333, %v296
      %v335 = vpop.permute.xlu0 %334
      %338 = vset.pattern.permute.xlu0 0
      %339 = vperm.xlu0 %338, %v297
      %v340 = vpop.permute.xlu0 %339
      %343 = vset.pattern.permute.xlu0 0
      %344 = vperm.xlu0 %343, %v298
      %v345 = vpop.permute.xlu0 %344
      %348 = vset.pattern.permute.xlu0 0
      %349 = vperm.xlu0 %348, %v299
      %v350 = vpop.permute.xlu0 %349
      %353 = vset.pattern.permute.xlu0 0
      %354 = vperm.xlu0 %353, %v300
      %v355 = vpop.permute.xlu0 %354
      %358 = vset.pattern.permute.xlu0 0
      %359 = vperm.xlu0 %358, %v301
      %v360 = vpop.permute.xlu0 %359
      %363 = vset.pattern.permute.xlu0 0
      %364 = vperm.xlu0 %363, %v302
      %v365 = vpop.permute.xlu0 %364
      %vm367 = vcmask 261120
      %v369 = vsel %vm367, %v287, 0
      %v372 = vsel %vm367, %v288, 0
      %v375 = vsel %vm367, %v289, 0
      %v378 = vsel %vm367, %v290, 0
      %v381 = vsel %vm367, %v291, 0
      %v384 = vsel %vm367, %v292, 0
      %v387 = vsel %vm367, %v293, 0
      %v390 = vsel %vm367, %v294, 0
      %392 = vmatpush.msra.mxu0 0.0
      %393 = vmatpush.msra.mxu0 0.0
      %394 = vmatpush.msra.mxu0 0.0
      %395 = vmatpush.msra.mxu0 0.0
      %396 = vmatpush.msra.mxu0 0.0
      %397 = vmatpush.msra.mxu0 0.0
      %398 = vmatpush.msra.mxu0 0.0
      %399 = vmatpush.msra.mxu0 0.0
      %400 = vmatpush.msra.mxu0 0.0
      %401 = vmatpush.msra.mxu0 0.0
      %402 = vmatpush.msra.mxu0 0.0
      %403 = vmatpush.msra.mxu0 0.0
      %404 = vmatpush.msra.mxu0 %v325
      %405 = vmatpush.msra.mxu0 %v323
      %406 = vmatpush.msra.mxu0 %v321
      %407 = vmatpush.msra.mxu0 %v319
      %408 = vmatmul.f32.gmra.mxu0 %v369
      %v409 = vpop.f32.mrf.mxu0
      %v410 = vadd.f32 %v330, %v409
      %411 = vmatmul.f32.gmra.mxu0 %v372
      %v412 = vpop.f32.mrf.mxu0
      %v413 = vadd.f32 %v335, %v412
      %414 = vmatmul.f32.gmra.mxu0 %v375
      %v415 = vpop.f32.mrf.mxu0
      %v416 = vadd.f32 %v340, %v415
      %417 = vmatmul.f32.gmra.mxu0 %v378
      %v418 = vpop.f32.mrf.mxu0
      %v419 = vadd.f32 %v345, %v418
      %420 = vmatmul.f32.gmra.mxu0 %v381
      %v421 = vpop.f32.mrf.mxu0
      %v422 = vadd.f32 %v350, %v421
      %423 = vmatmul.f32.gmra.mxu0 %v384
      %v424 = vpop.f32.mrf.mxu0
      %v425 = vadd.f32 %v355, %v424
      %426 = vmatmul.f32.gmra.mxu0 %v387
      %v427 = vpop.f32.mrf.mxu0
      %v428 = vadd.f32 %v360, %v427
      %429 = vmatmul.f32.gmra.mxu0 %v390
      %v430 = vpop.f32.mrf.mxu0
      %v431 = vadd.f32 %v365, %v430
      %432 = vdwg.mxu0
      %433 = vmatpush.msra.mxu0 0.0
      %434 = vmatpush.msra.mxu0 0.0
      %435 = vmatpush.msra.mxu0 0.0
      %436 = vmatpush.msra.mxu0 0.0
      %437 = vmatpush.msra.mxu0 0.0
      %438 = vmatpush.msra.mxu0 0.0
      %439 = vmatpush.msra.mxu0 0.0
      %440 = vmatpush.msra.mxu0 0.0
      %441 = vmatpush.msra.mxu0 0.0
      %442 = vmatpush.msra.mxu0 0.0
      %443 = vmatpush.msra.mxu0 0.0
      %444 = vmatpush.msra.mxu0 0.0
      %445 = vmatpush.msra.mxu0 %v326
      %446 = vmatpush.msra.mxu0 %v324
      %447 = vmatpush.msra.mxu0 %v322
      %448 = vmatpush.msra.mxu0 %v320
      %449 = vmatmul.f32.gmra.mxu0 %v369
      %v450 = vpop.f32.mrf.mxu0
      %v451 = vadd.f32 %v330, %v450
      %452 = vmatmul.f32.gmra.mxu0 %v372
      %v453 = vpop.f32.mrf.mxu0
      %v454 = vadd.f32 %v335, %v453
      %455 = vmatmul.f32.gmra.mxu0 %v375
      %v456 = vpop.f32.mrf.mxu0
      %v457 = vadd.f32 %v340, %v456
      %458 = vmatmul.f32.gmra.mxu0 %v378
      %v459 = vpop.f32.mrf.mxu0
      %v460 = vadd.f32 %v345, %v459
      %461 = vmatmul.f32.gmra.mxu0 %v381
      %v462 = vpop.f32.mrf.mxu0
      %v463 = vadd.f32 %v350, %v462
      %464 = vmatmul.f32.gmra.mxu0 %v384
      %v465 = vpop.f32.mrf.mxu0
      %v466 = vadd.f32 %v355, %v465
      %467 = vmatmul.f32.gmra.mxu0 %v387
      %v468 = vpop.f32.mrf.mxu0
      %v469 = vadd.f32 %v360, %v468
      %470 = vmatmul.f32.gmra.mxu0 %v390
      %v471 = vpop.f32.mrf.mxu0
      %v472 = vadd.f32 %v365, %v471
      %473 = vdwg.mxu0
      %s474 = scalar_lea.vmem %s3, 512
      %v475 = vld [vmem:[%s474] sm:$0xff]
      %v476 = vld [vmem:[%s474 + $0x8] sm:$0xff]
      %v477 = vld [vmem:[%s474 + $0x10] sm:$0xff]
      %v478 = vld [vmem:[%s474 + $0x18] sm:$0xff]
      %v479 = vld [vmem:[%s474 + $0x20] sm:$0xff]
      %v480 = vld [vmem:[%s474 + $0x28] sm:$0xff]
      %v481 = vld [vmem:[%s474 + $0x30] sm:$0xff]
      %v482 = vld [vmem:[%s474 + $0x38] sm:$0xff]
      %v483 = vld [vmem:[%s474 + $0x40] sm:$0xff]
      %v484 = vld [vmem:[%s474 + $0x48] sm:$0xff]
      %v485 = vld [vmem:[%s474 + $0x50] sm:$0xff]
      %v486 = vld [vmem:[%s474 + $0x58] sm:$0xff]
      %v487 = vld [vmem:[%s474 + $0x60] sm:$0xff]
      %v488 = vld [vmem:[%s474 + $0x68] sm:$0xff]
      %v489 = vld [vmem:[%s474 + $0x70] sm:$0xff]
      %v490 = vld [vmem:[%s474 + $0x78] sm:$0xff]
      %v491 = vmul.f32 %v410, %v475
      %v492 = vmul.f32 %v451, %v476
      %v493 = vmul.f32 %v413, %v477
      %v494 = vmul.f32 %v454, %v478
      %v495 = vmul.f32 %v416, %v479
      %v496 = vmul.f32 %v457, %v480
      %v497 = vmul.f32 %v419, %v481
      %v498 = vmul.f32 %v460, %v482
      %v499 = vmul.f32 %v422, %v483
      %v500 = vmul.f32 %v463, %v484
      %v501 = vmul.f32 %v425, %v485
      %v502 = vmul.f32 %v466, %v486
      %v503 = vmul.f32 %v428, %v487
      %v504 = vmul.f32 %v469, %v488
      %v505 = vmul.f32 %v431, %v489
      %v506 = vmul.f32 %v472, %v490
      %507 = vrot.lane.b32.xlu0 %v410, 17
      %v508 = vpop.permute.xlu0 %507
      %509 = vrot.lane.b32.xlu0 %v413, 17
      %v510 = vpop.permute.xlu0 %509
      %511 = vrot.lane.b32.xlu0 %v416, 17
      %v512 = vpop.permute.xlu0 %511
      %513 = vrot.lane.b32.xlu0 %v419, 17
      %v514 = vpop.permute.xlu0 %513
      %515 = vrot.lane.b32.xlu0 %v422, 17
      %v516 = vpop.permute.xlu0 %515
      %517 = vrot.lane.b32.xlu0 %v425, 17
      %v518 = vpop.permute.xlu0 %517
      %519 = vrot.lane.b32.xlu0 %v428, 17
      %v520 = vpop.permute.xlu0 %519
      %521 = vrot.lane.b32.xlu0 %v431, 17
      %v522 = vpop.permute.xlu0 %521
      %523 = vrot.lane.b32.xlu0 %v451, 17
      %v524 = vpop.permute.xlu0 %523
      %525 = vrot.lane.b32.xlu0 %v454, 17
      %v526 = vpop.permute.xlu0 %525
      %527 = vrot.lane.b32.xlu0 %v457, 17
      %v528 = vpop.permute.xlu0 %527
      %529 = vrot.lane.b32.xlu0 %v460, 17
      %v530 = vpop.permute.xlu0 %529
      %531 = vrot.lane.b32.xlu0 %v463, 17
      %v532 = vpop.permute.xlu0 %531
      %533 = vrot.lane.b32.xlu0 %v466, 17
      %v534 = vpop.permute.xlu0 %533
      %535 = vrot.lane.b32.xlu0 %v469, 17
      %v536 = vpop.permute.xlu0 %535
      %537 = vrot.lane.b32.xlu0 %v472, 17
      %v538 = vpop.permute.xlu0 %537
      %v539 = vlaneseq
      %v540 = vand.u32 %v539, 127
      %vm541 = vcmp.lt.s32.totalorder %v540, 17
      %v542 = vsel %vm541, %v508, %v524
      %v543 = vsel %vm541, %v510, %v526
      %v544 = vsel %vm541, %v512, %v528
      %v545 = vsel %vm541, %v514, %v530
      %v546 = vsel %vm541, %v516, %v532
      %v547 = vsel %vm541, %v518, %v534
      %v548 = vsel %vm541, %v520, %v536
      %v549 = vsel %vm541, %v522, %v538
      %v550 = vsel %vm541, %v524, %v508
      %v551 = vsel %vm541, %v526, %v510
      %v552 = vsel %vm541, %v528, %v512
      %v553 = vsel %vm541, %v530, %v514
      %v554 = vsel %vm541, %v532, %v516
      %v555 = vsel %vm541, %v534, %v518
      %v556 = vsel %vm541, %v536, %v520
      %v557 = vsel %vm541, %v538, %v522
      %v558 = vld [vmem:[%s3] sm:$0xff]
      %v559 = vld [vmem:[%s3 + $0x8] sm:$0xff]
      %v560 = vld [vmem:[%s3 + $0x10] sm:$0xff]
      %v561 = vld [vmem:[%s3 + $0x18] sm:$0xff]
      %v562 = vld [vmem:[%s3 + $0x20] sm:$0xff]
      %v563 = vld [vmem:[%s3 + $0x28] sm:$0xff]
      %v564 = vld [vmem:[%s3 + $0x30] sm:$0xff]
      %v565 = vld [vmem:[%s3 + $0x38] sm:$0xff]
      %v566 = vld [vmem:[%s3 + $0x40] sm:$0xff]
      %v567 = vld [vmem:[%s3 + $0x48] sm:$0xff]
      %v568 = vld [vmem:[%s3 + $0x50] sm:$0xff]
      %v569 = vld [vmem:[%s3 + $0x58] sm:$0xff]
      %v570 = vld [vmem:[%s3 + $0x60] sm:$0xff]
      %v571 = vld [vmem:[%s3 + $0x68] sm:$0xff]
      %v572 = vld [vmem:[%s3 + $0x70] sm:$0xff]
      %v573 = vld [vmem:[%s3 + $0x78] sm:$0xff]
      %v574 = vmul.f32 %v550, %v558
      %v575 = vmul.f32 %v542, %v559
      %v576 = vmul.f32 %v551, %v560
      %v577 = vmul.f32 %v543, %v561
      %v578 = vmul.f32 %v552, %v562
      %v579 = vmul.f32 %v544, %v563
      %v580 = vmul.f32 %v553, %v564
      %v581 = vmul.f32 %v545, %v565
      %v582 = vmul.f32 %v554, %v566
      %v583 = vmul.f32 %v546, %v567
      %v584 = vmul.f32 %v555, %v568
      %v585 = vmul.f32 %v547, %v569
      %v586 = vmul.f32 %v556, %v570
      %v587 = vmul.f32 %v548, %v571
      %v588 = vmul.f32 %v557, %v572
      %v589 = vmul.f32 %v549, %v573
      %v590 = vadd.f32 %v491, %v574
      %v591 = vadd.f32 %v492, %v575
      %v592 = vadd.f32 %v493, %v576
      %v593 = vadd.f32 %v494, %v577
      %v594 = vadd.f32 %v495, %v578
      %v595 = vadd.f32 %v496, %v579
      %v596 = vadd.f32 %v497, %v580
      %v597 = vadd.f32 %v498, %v581
      %v598 = vadd.f32 %v499, %v582
      %v599 = vadd.f32 %v500, %v583
      %v600 = vadd.f32 %v501, %v584
      %v601 = vadd.f32 %v502, %v585
      %v602 = vadd.f32 %v503, %v586
      %v603 = vadd.f32 %v504, %v587
      %v604 = vadd.f32 %v505, %v588
      %v605 = vadd.f32 %v506, %v589
      %606 = vrot.lane.b32.xlu0 %v410, 16
      %v607 = vpop.permute.xlu0 %606
      %608 = vrot.lane.b32.xlu0 %v413, 16
      %v609 = vpop.permute.xlu0 %608
      %610 = vrot.lane.b32.xlu0 %v416, 16
      %v611 = vpop.permute.xlu0 %610
      %612 = vrot.lane.b32.xlu0 %v419, 16
      %v613 = vpop.permute.xlu0 %612
      %614 = vrot.lane.b32.xlu0 %v422, 16
      %v615 = vpop.permute.xlu0 %614
      %616 = vrot.lane.b32.xlu0 %v425, 16
      %v617 = vpop.permute.xlu0 %616
      %618 = vrot.lane.b32.xlu0 %v428, 16
      %v619 = vpop.permute.xlu0 %618
      %620 = vrot.lane.b32.xlu0 %v431, 16
      %v621 = vpop.permute.xlu0 %620
      %622 = vrot.lane.b32.xlu0 %v451, 16
      %v623 = vpop.permute.xlu0 %622
      %624 = vrot.lane.b32.xlu0 %v454, 16
      %v625 = vpop.permute.xlu0 %624
      %626 = vrot.lane.b32.xlu0 %v457, 16
      %v627 = vpop.permute.xlu0 %626
      %628 = vrot.lane.b32.xlu0 %v460, 16
      %v629 = vpop.permute.xlu0 %628
      %630 = vrot.lane.b32.xlu0 %v463, 16
      %v631 = vpop.permute.xlu0 %630
      %632 = vrot.lane.b32.xlu0 %v466, 16
      %v633 = vpop.permute.xlu0 %632
      %634 = vrot.lane.b32.xlu0 %v469, 16
      %v635 = vpop.permute.xlu0 %634
      %636 = vrot.lane.b32.xlu0 %v472, 16
      %v637 = vpop.permute.xlu0 %636
      %vm638 = vcmp.lt.s32.totalorder %v540, 16
      %v639 = vsel %vm638, %v607, %v623
      %v640 = vsel %vm638, %v609, %v625
      %v641 = vsel %vm638, %v611, %v627
      %v642 = vsel %vm638, %v613, %v629
      %v643 = vsel %vm638, %v615, %v631
      %v644 = vsel %vm638, %v617, %v633
      %v645 = vsel %vm638, %v619, %v635
      %v646 = vsel %vm638, %v621, %v637
      %v647 = vsel %vm638, %v623, %v607
      %v648 = vsel %vm638, %v625, %v609
      %v649 = vsel %vm638, %v627, %v611
      %v650 = vsel %vm638, %v629, %v613
      %v651 = vsel %vm638, %v631, %v615
      %v652 = vsel %vm638, %v633, %v617
      %v653 = vsel %vm638, %v635, %v619
      %v654 = vsel %vm638, %v637, %v621
      %s655 = scalar_lea.vmem %s3, 128
      %v656 = vld [vmem:[%s655] sm:$0xff]
      %v657 = vld [vmem:[%s655 + $0x8] sm:$0xff]
      %v658 = vld [vmem:[%s655 + $0x10] sm:$0xff]
      %v659 = vld [vmem:[%s655 + $0x18] sm:$0xff]
      %v660 = vld [vmem:[%s655 + $0x20] sm:$0xff]
      %v661 = vld [vmem:[%s655 + $0x28] sm:$0xff]
      %v662 = vld [vmem:[%s655 + $0x30] sm:$0xff]
      %v663 = vld [vmem:[%s655 + $0x38] sm:$0xff]
      %v664 = vld [vmem:[%s655 + $0x40] sm:$0xff]
      %v665 = vld [vmem:[%s655 + $0x48] sm:$0xff]
      %v666 = vld [vmem:[%s655 + $0x50] sm:$0xff]
      %v667 = vld [vmem:[%s655 + $0x58] sm:$0xff]
      %v668 = vld [vmem:[%s655 + $0x60] sm:$0xff]
      %v669 = vld [vmem:[%s655 + $0x68] sm:$0xff]
      %v670 = vld [vmem:[%s655 + $0x70] sm:$0xff]
      %v671 = vld [vmem:[%s655 + $0x78] sm:$0xff]
      %v672 = vmul.f32 %v647, %v656
      %v673 = vmul.f32 %v639, %v657
      %v674 = vmul.f32 %v648, %v658
      %v675 = vmul.f32 %v640, %v659
      %v676 = vmul.f32 %v649, %v660
      %v677 = vmul.f32 %v641, %v661
      %v678 = vmul.f32 %v650, %v662
      %v679 = vmul.f32 %v642, %v663
      %v680 = vmul.f32 %v651, %v664
      %v681 = vmul.f32 %v643, %v665
      %v682 = vmul.f32 %v652, %v666
      %v683 = vmul.f32 %v644, %v667
      %v684 = vmul.f32 %v653, %v668
      %v685 = vmul.f32 %v645, %v669
      %v686 = vmul.f32 %v654, %v670
      %v687 = vmul.f32 %v646, %v671
      %v688 = vadd.f32 %v590, %v672
      %v689 = vadd.f32 %v591, %v673
      %v690 = vadd.f32 %v592, %v674
      %v691 = vadd.f32 %v593, %v675
      %v692 = vadd.f32 %v594, %v676
      %v693 = vadd.f32 %v595, %v677
      %v694 = vadd.f32 %v596, %v678
      %v695 = vadd.f32 %v597, %v679
      %v696 = vadd.f32 %v598, %v680
      %v697 = vadd.f32 %v599, %v681
      %v698 = vadd.f32 %v600, %v682
      %v699 = vadd.f32 %v601, %v683
      %v700 = vadd.f32 %v602, %v684
      %v701 = vadd.f32 %v603, %v685
      %v702 = vadd.f32 %v604, %v686
      %v703 = vadd.f32 %v605, %v687
      %704 = vrot.lane.b32.xlu0 %v410, 15
      %v705 = vpop.permute.xlu0 %704
      %706 = vrot.lane.b32.xlu0 %v413, 15
      %v707 = vpop.permute.xlu0 %706
      %708 = vrot.lane.b32.xlu0 %v416, 15
      %v709 = vpop.permute.xlu0 %708
      %710 = vrot.lane.b32.xlu0 %v419, 15
      %v711 = vpop.permute.xlu0 %710
      %712 = vrot.lane.b32.xlu0 %v422, 15
      %v713 = vpop.permute.xlu0 %712
      %714 = vrot.lane.b32.xlu0 %v425, 15
      %v715 = vpop.permute.xlu0 %714
      %716 = vrot.lane.b32.xlu0 %v428, 15
      %v717 = vpop.permute.xlu0 %716
      %718 = vrot.lane.b32.xlu0 %v431, 15
      %v719 = vpop.permute.xlu0 %718
      %720 = vrot.lane.b32.xlu0 %v451, 15
      %v721 = vpop.permute.xlu0 %720
      %722 = vrot.lane.b32.xlu0 %v454, 15
      %v723 = vpop.permute.xlu0 %722
      %724 = vrot.lane.b32.xlu0 %v457, 15
      %v725 = vpop.permute.xlu0 %724
      %726 = vrot.lane.b32.xlu0 %v460, 15
      %v727 = vpop.permute.xlu0 %726
      %728 = vrot.lane.b32.xlu0 %v463, 15
      %v729 = vpop.permute.xlu0 %728
      %730 = vrot.lane.b32.xlu0 %v466, 15
      %v731 = vpop.permute.xlu0 %730
      %732 = vrot.lane.b32.xlu0 %v469, 15
      %v733 = vpop.permute.xlu0 %732
      %734 = vrot.lane.b32.xlu0 %v472, 15
      %v735 = vpop.permute.xlu0 %734
      %vm736 = vcmp.lt.s32.totalorder %v540, 15
      %v737 = vsel %vm736, %v705, %v721
      %v738 = vsel %vm736, %v707, %v723
      %v739 = vsel %vm736, %v709, %v725
      %v740 = vsel %vm736, %v711, %v727
      %v741 = vsel %vm736, %v713, %v729
      %v742 = vsel %vm736, %v715, %v731
      %v743 = vsel %vm736, %v717, %v733
      %v744 = vsel %vm736, %v719, %v735
      %v745 = vsel %vm736, %v721, %v705
      %v746 = vsel %vm736, %v723, %v707
      %v747 = vsel %vm736, %v725, %v709
      %v748 = vsel %vm736, %v727, %v711
      %v749 = vsel %vm736, %v729, %v713
      %v750 = vsel %vm736, %v731, %v715
      %v751 = vsel %vm736, %v733, %v717
      %v752 = vsel %vm736, %v735, %v719
      %s753 = scalar_lea.vmem %s3, 256
      %v754 = vld [vmem:[%s753] sm:$0xff]
      %v755 = vld [vmem:[%s753 + $0x8] sm:$0xff]
      %v756 = vld [vmem:[%s753 + $0x10] sm:$0xff]
      %v757 = vld [vmem:[%s753 + $0x18] sm:$0xff]
      %v758 = vld [vmem:[%s753 + $0x20] sm:$0xff]
      %v759 = vld [vmem:[%s753 + $0x28] sm:$0xff]
      %v760 = vld [vmem:[%s753 + $0x30] sm:$0xff]
      %v761 = vld [vmem:[%s753 + $0x38] sm:$0xff]
      %v762 = vld [vmem:[%s753 + $0x40] sm:$0xff]
      %v763 = vld [vmem:[%s753 + $0x48] sm:$0xff]
      %v764 = vld [vmem:[%s753 + $0x50] sm:$0xff]
      %v765 = vld [vmem:[%s753 + $0x58] sm:$0xff]
      %v766 = vld [vmem:[%s753 + $0x60] sm:$0xff]
      %v767 = vld [vmem:[%s753 + $0x68] sm:$0xff]
      %v768 = vld [vmem:[%s753 + $0x70] sm:$0xff]
      %v769 = vld [vmem:[%s753 + $0x78] sm:$0xff]
      %v770 = vmul.f32 %v745, %v754
      %v771 = vmul.f32 %v737, %v755
      %v772 = vmul.f32 %v746, %v756
      %v773 = vmul.f32 %v738, %v757
      %v774 = vmul.f32 %v747, %v758
      %v775 = vmul.f32 %v739, %v759
      %v776 = vmul.f32 %v748, %v760
      %v777 = vmul.f32 %v740, %v761
      %v778 = vmul.f32 %v749, %v762
      %v779 = vmul.f32 %v741, %v763
      %v780 = vmul.f32 %v750, %v764
      %v781 = vmul.f32 %v742, %v765
      %v782 = vmul.f32 %v751, %v766
      %v783 = vmul.f32 %v743, %v767
      %v784 = vmul.f32 %v752, %v768
      %v785 = vmul.f32 %v744, %v769
      %v786 = vadd.f32 %v688, %v770
      %v787 = vadd.f32 %v689, %v771
      %v788 = vadd.f32 %v690, %v772
      %v789 = vadd.f32 %v691, %v773
      %v790 = vadd.f32 %v692, %v774
      %v791 = vadd.f32 %v693, %v775
      %v792 = vadd.f32 %v694, %v776
      %v793 = vadd.f32 %v695, %v777
      %v794 = vadd.f32 %v696, %v778
      %v795 = vadd.f32 %v697, %v779
      %v796 = vadd.f32 %v698, %v780
      %v797 = vadd.f32 %v699, %v781
      %v798 = vadd.f32 %v700, %v782
      %v799 = vadd.f32 %v701, %v783
      %v800 = vadd.f32 %v702, %v784
      %v801 = vadd.f32 %v703, %v785
      %802 = vrot.lane.b32.xlu0 %v410, 1
      %v803 = vpop.permute.xlu0 %802
      %804 = vrot.lane.b32.xlu0 %v413, 1
      %v805 = vpop.permute.xlu0 %804
      %806 = vrot.lane.b32.xlu0 %v416, 1
      %v807 = vpop.permute.xlu0 %806
      %808 = vrot.lane.b32.xlu0 %v419, 1
      %v809 = vpop.permute.xlu0 %808
      %810 = vrot.lane.b32.xlu0 %v422, 1
      %v811 = vpop.permute.xlu0 %810
      %812 = vrot.lane.b32.xlu0 %v425, 1
      %v813 = vpop.permute.xlu0 %812
      %814 = vrot.lane.b32.xlu0 %v428, 1
      %v815 = vpop.permute.xlu0 %814
      %816 = vrot.lane.b32.xlu0 %v431, 1
      %v817 = vpop.permute.xlu0 %816
      %818 = vrot.lane.b32.xlu0 %v451, 1
      %v819 = vpop.permute.xlu0 %818
      %820 = vrot.lane.b32.xlu0 %v454, 1
      %v821 = vpop.permute.xlu0 %820
      %822 = vrot.lane.b32.xlu0 %v457, 1
      %v823 = vpop.permute.xlu0 %822
      %824 = vrot.lane.b32.xlu0 %v460, 1
      %v825 = vpop.permute.xlu0 %824
      %826 = vrot.lane.b32.xlu0 %v463, 1
      %v827 = vpop.permute.xlu0 %826
      %828 = vrot.lane.b32.xlu0 %v466, 1
      %v829 = vpop.permute.xlu0 %828
      %830 = vrot.lane.b32.xlu0 %v469, 1
      %v831 = vpop.permute.xlu0 %830
      %832 = vrot.lane.b32.xlu0 %v472, 1
      %v833 = vpop.permute.xlu0 %832
      %vm834 = vcmp.lt.s32.totalorder %v540, 1
      %v835 = vsel %vm834, %v803, %v819
      %v836 = vsel %vm834, %v805, %v821
      %v837 = vsel %vm834, %v807, %v823
      %v838 = vsel %vm834, %v809, %v825
      %v839 = vsel %vm834, %v811, %v827
      %v840 = vsel %vm834, %v813, %v829
      %v841 = vsel %vm834, %v815, %v831
      %v842 = vsel %vm834, %v817, %v833
      %v843 = vsel %vm834, %v819, %v803
      %v844 = vsel %vm834, %v821, %v805
      %v845 = vsel %vm834, %v823, %v807
      %v846 = vsel %vm834, %v825, %v809
      %v847 = vsel %vm834, %v827, %v811
      %v848 = vsel %vm834, %v829, %v813
      %v849 = vsel %vm834, %v831, %v815
      %v850 = vsel %vm834, %v833, %v817
      %s851 = scalar_lea.vmem %s3, 384
      %v852 = vld [vmem:[%s851] sm:$0xff]
      %v853 = vld [vmem:[%s851 + $0x8] sm:$0xff]
      %v854 = vld [vmem:[%s851 + $0x10] sm:$0xff]
      %v855 = vld [vmem:[%s851 + $0x18] sm:$0xff]
      %v856 = vld [vmem:[%s851 + $0x20] sm:$0xff]
      %v857 = vld [vmem:[%s851 + $0x28] sm:$0xff]
      %v858 = vld [vmem:[%s851 + $0x30] sm:$0xff]
      %v859 = vld [vmem:[%s851 + $0x38] sm:$0xff]
      %v860 = vld [vmem:[%s851 + $0x40] sm:$0xff]
      %v861 = vld [vmem:[%s851 + $0x48] sm:$0xff]
      %v862 = vld [vmem:[%s851 + $0x50] sm:$0xff]
      %v863 = vld [vmem:[%s851 + $0x58] sm:$0xff]
      %v864 = vld [vmem:[%s851 + $0x60] sm:$0xff]
      %v865 = vld [vmem:[%s851 + $0x68] sm:$0xff]
      %v866 = vld [vmem:[%s851 + $0x70] sm:$0xff]
      %v867 = vld [vmem:[%s851 + $0x78] sm:$0xff]
      %v868 = vmul.f32 %v843, %v852
      %v869 = vmul.f32 %v835, %v853
      %v870 = vmul.f32 %v844, %v854
      %v871 = vmul.f32 %v836, %v855
      %v872 = vmul.f32 %v845, %v856
      %v873 = vmul.f32 %v837, %v857
      %v874 = vmul.f32 %v846, %v858
      %v875 = vmul.f32 %v838, %v859
      %v876 = vmul.f32 %v847, %v860
      %v877 = vmul.f32 %v839, %v861
      %v878 = vmul.f32 %v848, %v862
      %v879 = vmul.f32 %v840, %v863
      %v880 = vmul.f32 %v849, %v864
      %v881 = vmul.f32 %v841, %v865
      %v882 = vmul.f32 %v850, %v866
      %v883 = vmul.f32 %v842, %v867
      %v884 = vadd.f32 %v786, %v868
      %v885 = vadd.f32 %v787, %v869
      %v886 = vadd.f32 %v788, %v870
      %v887 = vadd.f32 %v789, %v871
      %v888 = vadd.f32 %v790, %v872
      %v889 = vadd.f32 %v791, %v873
      %v890 = vadd.f32 %v792, %v874
      %v891 = vadd.f32 %v793, %v875
      %v892 = vadd.f32 %v794, %v876
      %v893 = vadd.f32 %v795, %v877
      %v894 = vadd.f32 %v796, %v878
      %v895 = vadd.f32 %v797, %v879
      %v896 = vadd.f32 %v798, %v880
      %v897 = vadd.f32 %v799, %v881
      %v898 = vadd.f32 %v800, %v882
      %v899 = vadd.f32 %v801, %v883
      %900 = vrot.lane.b32.xlu0 %v410, 127
      %v901 = vpop.permute.xlu0 %900
      %902 = vrot.lane.b32.xlu0 %v413, 127
      %v903 = vpop.permute.xlu0 %902
      %904 = vrot.lane.b32.xlu0 %v416, 127
      %v905 = vpop.permute.xlu0 %904
      %906 = vrot.lane.b32.xlu0 %v419, 127
      %v907 = vpop.permute.xlu0 %906
      %908 = vrot.lane.b32.xlu0 %v422, 127
      %v909 = vpop.permute.xlu0 %908
      %910 = vrot.lane.b32.xlu0 %v425, 127
      %v911 = vpop.permute.xlu0 %910
      %912 = vrot.lane.b32.xlu0 %v428, 127
      %v913 = vpop.permute.xlu0 %912
      %914 = vrot.lane.b32.xlu0 %v431, 127
      %v915 = vpop.permute.xlu0 %914
      %916 = vrot.lane.b32.xlu0 %v451, 127
      %v917 = vpop.permute.xlu0 %916
      %918 = vrot.lane.b32.xlu0 %v454, 127
      %v919 = vpop.permute.xlu0 %918
      %920 = vrot.lane.b32.xlu0 %v457, 127
      %v921 = vpop.permute.xlu0 %920
      %922 = vrot.lane.b32.xlu0 %v460, 127
      %v923 = vpop.permute.xlu0 %922
      %924 = vrot.lane.b32.xlu0 %v463, 127
      %v925 = vpop.permute.xlu0 %924
      %926 = vrot.lane.b32.xlu0 %v466, 127
      %v927 = vpop.permute.xlu0 %926
      %928 = vrot.lane.b32.xlu0 %v469, 127
      %v929 = vpop.permute.xlu0 %928
      %930 = vrot.lane.b32.xlu0 %v472, 127
      %v931 = vpop.permute.xlu0 %930
      %vm932 = vcmp.lt.s32.totalorder %v540, 127
      %v933 = vsel %vm932, %v901, %v917
      %v934 = vsel %vm932, %v903, %v919
      %v935 = vsel %vm932, %v905, %v921
      %v936 = vsel %vm932, %v907, %v923
      %v937 = vsel %vm932, %v909, %v925
      %v938 = vsel %vm932, %v911, %v927
      %v939 = vsel %vm932, %v913, %v929
      %v940 = vsel %vm932, %v915, %v931
      %v941 = vsel %vm932, %v917, %v901
      %v942 = vsel %vm932, %v919, %v903
      %v943 = vsel %vm932, %v921, %v905
      %v944 = vsel %vm932, %v923, %v907
      %v945 = vsel %vm932, %v925, %v909
      %v946 = vsel %vm932, %v927, %v911
      %v947 = vsel %vm932, %v929, %v913
      %v948 = vsel %vm932, %v931, %v915
      %s949 = scalar_lea.vmem %s3, 640
      %v950 = vld [vmem:[%s949] sm:$0xff]
      %v951 = vld [vmem:[%s949 + $0x8] sm:$0xff]
      %v952 = vld [vmem:[%s949 + $0x10] sm:$0xff]
      %v953 = vld [vmem:[%s949 + $0x18] sm:$0xff]
      %v954 = vld [vmem:[%s949 + $0x20] sm:$0xff]
      %v955 = vld [vmem:[%s949 + $0x28] sm:$0xff]
      %v956 = vld [vmem:[%s949 + $0x30] sm:$0xff]
      %v957 = vld [vmem:[%s949 + $0x38] sm:$0xff]
      %v958 = vld [vmem:[%s949 + $0x40] sm:$0xff]
      %v959 = vld [vmem:[%s949 + $0x48] sm:$0xff]
      %v960 = vld [vmem:[%s949 + $0x50] sm:$0xff]
      %v961 = vld [vmem:[%s949 + $0x58] sm:$0xff]
      %v962 = vld [vmem:[%s949 + $0x60] sm:$0xff]
      %v963 = vld [vmem:[%s949 + $0x68] sm:$0xff]
      %v964 = vld [vmem:[%s949 + $0x70] sm:$0xff]
      %v965 = vld [vmem:[%s949 + $0x78] sm:$0xff]
      %v966 = vmul.f32 %v933, %v950
      %v967 = vmul.f32 %v941, %v951
      %v968 = vmul.f32 %v934, %v952
      %v969 = vmul.f32 %v942, %v953
      %v970 = vmul.f32 %v935, %v954
      %v971 = vmul.f32 %v943, %v955
      %v972 = vmul.f32 %v936, %v956
      %v973 = vmul.f32 %v944, %v957
      %v974 = vmul.f32 %v937, %v958
      %v975 = vmul.f32 %v945, %v959
      %v976 = vmul.f32 %v938, %v960
      %v977 = vmul.f32 %v946, %v961
      %v978 = vmul.f32 %v939, %v962
      %v979 = vmul.f32 %v947, %v963
      %v980 = vmul.f32 %v940, %v964
      %v981 = vmul.f32 %v948, %v965
      %v982 = vadd.f32 %v884, %v966
      %v983 = vadd.f32 %v885, %v967
      %v984 = vadd.f32 %v886, %v968
      %v985 = vadd.f32 %v887, %v969
      %v986 = vadd.f32 %v888, %v970
      %v987 = vadd.f32 %v889, %v971
      %v988 = vadd.f32 %v890, %v972
      %v989 = vadd.f32 %v891, %v973
      %v990 = vadd.f32 %v892, %v974
      %v991 = vadd.f32 %v893, %v975
      %v992 = vadd.f32 %v894, %v976
      %v993 = vadd.f32 %v895, %v977
      %v994 = vadd.f32 %v896, %v978
      %v995 = vadd.f32 %v897, %v979
      %v996 = vadd.f32 %v898, %v980
      %v997 = vadd.f32 %v899, %v981
      %998 = vrot.lane.b32.xlu0 %v410, 113
      %v999 = vpop.permute.xlu0 %998
      %1000 = vrot.lane.b32.xlu0 %v413, 113
      %v1001 = vpop.permute.xlu0 %1000
      %1002 = vrot.lane.b32.xlu0 %v416, 113
      %v1003 = vpop.permute.xlu0 %1002
      %1004 = vrot.lane.b32.xlu0 %v419, 113
      %v1005 = vpop.permute.xlu0 %1004
      %1006 = vrot.lane.b32.xlu0 %v422, 113
      %v1007 = vpop.permute.xlu0 %1006
      %1008 = vrot.lane.b32.xlu0 %v425, 113
      %v1009 = vpop.permute.xlu0 %1008
      %1010 = vrot.lane.b32.xlu0 %v428, 113
      %v1011 = vpop.permute.xlu0 %1010
      %1012 = vrot.lane.b32.xlu0 %v431, 113
      %v1013 = vpop.permute.xlu0 %1012
      %1014 = vrot.lane.b32.xlu0 %v451, 113
      %v1015 = vpop.permute.xlu0 %1014
      %1016 = vrot.lane.b32.xlu0 %v454, 113
      %v1017 = vpop.permute.xlu0 %1016
      %1018 = vrot.lane.b32.xlu0 %v457, 113
      %v1019 = vpop.permute.xlu0 %1018
      %1020 = vrot.lane.b32.xlu0 %v460, 113
      %v1021 = vpop.permute.xlu0 %1020
      %1022 = vrot.lane.b32.xlu0 %v463, 113
      %v1023 = vpop.permute.xlu0 %1022
      %1024 = vrot.lane.b32.xlu0 %v466, 113
      %v1025 = vpop.permute.xlu0 %1024
      %1026 = vrot.lane.b32.xlu0 %v469, 113
      %v1027 = vpop.permute.xlu0 %1026
      %1028 = vrot.lane.b32.xlu0 %v472, 113
      %v1029 = vpop.permute.xlu0 %1028
      %vm1030 = vcmp.lt.s32.totalorder %v540, 113
      %v1031 = vsel %vm1030, %v999, %v1015
      %v1032 = vsel %vm1030, %v1001, %v1017
      %v1033 = vsel %vm1030, %v1003, %v1019
      %v1034 = vsel %vm1030, %v1005, %v1021
      %v1035 = vsel %vm1030, %v1007, %v1023
      %v1036 = vsel %vm1030, %v1009, %v1025
      %v1037 = vsel %vm1030, %v1011, %v1027
      %v1038 = vsel %vm1030, %v1013, %v1029
      %v1039 = vsel %vm1030, %v1015, %v999
      %v1040 = vsel %vm1030, %v1017, %v1001
      %v1041 = vsel %vm1030, %v1019, %v1003
      %v1042 = vsel %vm1030, %v1021, %v1005
      %v1043 = vsel %vm1030, %v1023, %v1007
      %v1044 = vsel %vm1030, %v1025, %v1009
      %v1045 = vsel %vm1030, %v1027, %v1011
      %v1046 = vsel %vm1030, %v1029, %v1013
      %s1047 = scalar_lea.vmem %s3, 768
      %v1048 = vld [vmem:[%s1047] sm:$0xff]
      %v1049 = vld [vmem:[%s1047 + $0x8] sm:$0xff]
      %v1050 = vld [vmem:[%s1047 + $0x10] sm:$0xff]
      %v1051 = vld [vmem:[%s1047 + $0x18] sm:$0xff]
      %v1052 = vld [vmem:[%s1047 + $0x20] sm:$0xff]
      %v1053 = vld [vmem:[%s1047 + $0x28] sm:$0xff]
      %v1054 = vld [vmem:[%s1047 + $0x30] sm:$0xff]
      %v1055 = vld [vmem:[%s1047 + $0x38] sm:$0xff]
      %v1056 = vld [vmem:[%s1047 + $0x40] sm:$0xff]
      %v1057 = vld [vmem:[%s1047 + $0x48] sm:$0xff]
      %v1058 = vld [vmem:[%s1047 + $0x50] sm:$0xff]
      %v1059 = vld [vmem:[%s1047 + $0x58] sm:$0xff]
      %v1060 = vld [vmem:[%s1047 + $0x60] sm:$0xff]
      %v1061 = vld [vmem:[%s1047 + $0x68] sm:$0xff]
      %v1062 = vld [vmem:[%s1047 + $0x70] sm:$0xff]
      %v1063 = vld [vmem:[%s1047 + $0x78] sm:$0xff]
      %v1064 = vmul.f32 %v1031, %v1048
      %v1065 = vmul.f32 %v1039, %v1049
      %v1066 = vmul.f32 %v1032, %v1050
      %v1067 = vmul.f32 %v1040, %v1051
      %v1068 = vmul.f32 %v1033, %v1052
      %v1069 = vmul.f32 %v1041, %v1053
      %v1070 = vmul.f32 %v1034, %v1054
      %v1071 = vmul.f32 %v1042, %v1055
      %v1072 = vmul.f32 %v1035, %v1056
      %v1073 = vmul.f32 %v1043, %v1057
      %v1074 = vmul.f32 %v1036, %v1058
      %v1075 = vmul.f32 %v1044, %v1059
      %v1076 = vmul.f32 %v1037, %v1060
      %v1077 = vmul.f32 %v1045, %v1061
      %v1078 = vmul.f32 %v1038, %v1062
      %v1079 = vmul.f32 %v1046, %v1063
      %v1080 = vadd.f32 %v982, %v1064
      %v1081 = vadd.f32 %v983, %v1065
      %v1082 = vadd.f32 %v984, %v1066
      %v1083 = vadd.f32 %v985, %v1067
      %v1084 = vadd.f32 %v986, %v1068
      %v1085 = vadd.f32 %v987, %v1069
      %v1086 = vadd.f32 %v988, %v1070
      %v1087 = vadd.f32 %v989, %v1071
      %v1088 = vadd.f32 %v990, %v1072
      %v1089 = vadd.f32 %v991, %v1073
      %v1090 = vadd.f32 %v992, %v1074
      %v1091 = vadd.f32 %v993, %v1075
      %v1092 = vadd.f32 %v994, %v1076
      %v1093 = vadd.f32 %v995, %v1077
      %v1094 = vadd.f32 %v996, %v1078
      %v1095 = vadd.f32 %v997, %v1079
      %1096 = vrot.lane.b32.xlu0 %v410, 112
      %v1097 = vpop.permute.xlu0 %1096
      %1098 = vrot.lane.b32.xlu0 %v413, 112
      %v1099 = vpop.permute.xlu0 %1098
      %1100 = vrot.lane.b32.xlu0 %v416, 112
      %v1101 = vpop.permute.xlu0 %1100
      %1102 = vrot.lane.b32.xlu0 %v419, 112
      %v1103 = vpop.permute.xlu0 %1102
      %1104 = vrot.lane.b32.xlu0 %v422, 112
      %v1105 = vpop.permute.xlu0 %1104
      %1106 = vrot.lane.b32.xlu0 %v425, 112
      %v1107 = vpop.permute.xlu0 %1106
      %1108 = vrot.lane.b32.xlu0 %v428, 112
      %v1109 = vpop.permute.xlu0 %1108
      %1110 = vrot.lane.b32.xlu0 %v431, 112
      %v1111 = vpop.permute.xlu0 %1110
      %1112 = vrot.lane.b32.xlu0 %v451, 112
      %v1113 = vpop.permute.xlu0 %1112
      %1114 = vrot.lane.b32.xlu0 %v454, 112
      %v1115 = vpop.permute.xlu0 %1114
      %1116 = vrot.lane.b32.xlu0 %v457, 112
      %v1117 = vpop.permute.xlu0 %1116
      %1118 = vrot.lane.b32.xlu0 %v460, 112
      %v1119 = vpop.permute.xlu0 %1118
      %1120 = vrot.lane.b32.xlu0 %v463, 112
      %v1121 = vpop.permute.xlu0 %1120
      %1122 = vrot.lane.b32.xlu0 %v466, 112
      %v1123 = vpop.permute.xlu0 %1122
      %1124 = vrot.lane.b32.xlu0 %v469, 112
      %v1125 = vpop.permute.xlu0 %1124
      %1126 = vrot.lane.b32.xlu0 %v472, 112
      %v1127 = vpop.permute.xlu0 %1126
      %vm1128 = vcmp.lt.s32.totalorder %v540, 112
      %v1129 = vsel %vm1128, %v1097, %v1113
      %v1130 = vsel %vm1128, %v1099, %v1115
      %v1131 = vsel %vm1128, %v1101, %v1117
      %v1132 = vsel %vm1128, %v1103, %v1119
      %v1133 = vsel %vm1128, %v1105, %v1121
      %v1134 = vsel %vm1128, %v1107, %v1123
      %v1135 = vsel %vm1128, %v1109, %v1125
      %v1136 = vsel %vm1128, %v1111, %v1127
      %v1137 = vsel %vm1128, %v1113, %v1097
      %v1138 = vsel %vm1128, %v1115, %v1099
      %v1139 = vsel %vm1128, %v1117, %v1101
      %v1140 = vsel %vm1128, %v1119, %v1103
      %v1141 = vsel %vm1128, %v1121, %v1105
      %v1142 = vsel %vm1128, %v1123, %v1107
      %v1143 = vsel %vm1128, %v1125, %v1109
      %v1144 = vsel %vm1128, %v1127, %v1111
      %s1145 = scalar_lea.vmem %s3, 896
      %v1146 = vld [vmem:[%s1145] sm:$0xff]
      %v1147 = vld [vmem:[%s1145 + $0x8] sm:$0xff]
      %v1148 = vld [vmem:[%s1145 + $0x10] sm:$0xff]
      %v1149 = vld [vmem:[%s1145 + $0x18] sm:$0xff]
      %v1150 = vld [vmem:[%s1145 + $0x20] sm:$0xff]
      %v1151 = vld [vmem:[%s1145 + $0x28] sm:$0xff]
      %v1152 = vld [vmem:[%s1145 + $0x30] sm:$0xff]
      %v1153 = vld [vmem:[%s1145 + $0x38] sm:$0xff]
      %v1154 = vld [vmem:[%s1145 + $0x40] sm:$0xff]
      %v1155 = vld [vmem:[%s1145 + $0x48] sm:$0xff]
      %v1156 = vld [vmem:[%s1145 + $0x50] sm:$0xff]
      %v1157 = vld [vmem:[%s1145 + $0x58] sm:$0xff]
      %v1158 = vld [vmem:[%s1145 + $0x60] sm:$0xff]
      %v1159 = vld [vmem:[%s1145 + $0x68] sm:$0xff]
      %v1160 = vld [vmem:[%s1145 + $0x70] sm:$0xff]
      %v1161 = vld [vmem:[%s1145 + $0x78] sm:$0xff]
      %v1162 = vmul.f32 %v1129, %v1146
      %v1163 = vmul.f32 %v1137, %v1147
      %v1164 = vmul.f32 %v1130, %v1148
      %v1165 = vmul.f32 %v1138, %v1149
      %v1166 = vmul.f32 %v1131, %v1150
      %v1167 = vmul.f32 %v1139, %v1151
      %v1168 = vmul.f32 %v1132, %v1152
      %v1169 = vmul.f32 %v1140, %v1153
      %v1170 = vmul.f32 %v1133, %v1154
      %v1171 = vmul.f32 %v1141, %v1155
      %v1172 = vmul.f32 %v1134, %v1156
      %v1173 = vmul.f32 %v1142, %v1157
      %v1174 = vmul.f32 %v1135, %v1158
      %v1175 = vmul.f32 %v1143, %v1159
      %v1176 = vmul.f32 %v1136, %v1160
      %v1177 = vmul.f32 %v1144, %v1161
      %v1178 = vadd.f32 %v1080, %v1162
      %v1179 = vadd.f32 %v1081, %v1163
      %v1180 = vadd.f32 %v1082, %v1164
      %v1181 = vadd.f32 %v1083, %v1165
      %v1182 = vadd.f32 %v1084, %v1166
      %v1183 = vadd.f32 %v1085, %v1167
      %v1184 = vadd.f32 %v1086, %v1168
      %v1185 = vadd.f32 %v1087, %v1169
      %v1186 = vadd.f32 %v1088, %v1170
      %v1187 = vadd.f32 %v1089, %v1171
      %v1188 = vadd.f32 %v1090, %v1172
      %v1189 = vadd.f32 %v1091, %v1173
      %v1190 = vadd.f32 %v1092, %v1174
      %v1191 = vadd.f32 %v1093, %v1175
      %v1192 = vadd.f32 %v1094, %v1176
      %v1193 = vadd.f32 %v1095, %v1177
      %1194 = vrot.lane.b32.xlu0 %v410, 111
      %v1195 = vpop.permute.xlu0 %1194
      %1196 = vrot.lane.b32.xlu0 %v413, 111
      %v1197 = vpop.permute.xlu0 %1196
      %1198 = vrot.lane.b32.xlu0 %v416, 111
      %v1199 = vpop.permute.xlu0 %1198
      %1200 = vrot.lane.b32.xlu0 %v419, 111
      %v1201 = vpop.permute.xlu0 %1200
      %1202 = vrot.lane.b32.xlu0 %v422, 111
      %v1203 = vpop.permute.xlu0 %1202
      %1204 = vrot.lane.b32.xlu0 %v425, 111
      %v1205 = vpop.permute.xlu0 %1204
      %1206 = vrot.lane.b32.xlu0 %v428, 111
      %v1207 = vpop.permute.xlu0 %1206
      %1208 = vrot.lane.b32.xlu0 %v431, 111
      %v1209 = vpop.permute.xlu0 %1208
      %1210 = vrot.lane.b32.xlu0 %v451, 111
      %v1211 = vpop.permute.xlu0 %1210
      %1212 = vrot.lane.b32.xlu0 %v454, 111
      %v1213 = vpop.permute.xlu0 %1212
      %1214 = vrot.lane.b32.xlu0 %v457, 111
      %v1215 = vpop.permute.xlu0 %1214
      %1216 = vrot.lane.b32.xlu0 %v460, 111
      %v1217 = vpop.permute.xlu0 %1216
      %1218 = vrot.lane.b32.xlu0 %v463, 111
      %v1219 = vpop.permute.xlu0 %1218
      %1220 = vrot.lane.b32.xlu0 %v466, 111
      %v1221 = vpop.permute.xlu0 %1220
      %1222 = vrot.lane.b32.xlu0 %v469, 111
      %v1223 = vpop.permute.xlu0 %1222
      %1224 = vrot.lane.b32.xlu0 %v472, 111
      %v1225 = vpop.permute.xlu0 %1224
      %vm1226 = vcmp.lt.s32.totalorder %v540, 111
      %v1227 = vsel %vm1226, %v1195, %v1211
      %v1228 = vsel %vm1226, %v1197, %v1213
      %v1229 = vsel %vm1226, %v1199, %v1215
      %v1230 = vsel %vm1226, %v1201, %v1217
      %v1231 = vsel %vm1226, %v1203, %v1219
      %v1232 = vsel %vm1226, %v1205, %v1221
      %v1233 = vsel %vm1226, %v1207, %v1223
      %v1234 = vsel %vm1226, %v1209, %v1225
      %v1235 = vsel %vm1226, %v1211, %v1195
      %v1236 = vsel %vm1226, %v1213, %v1197
      %v1237 = vsel %vm1226, %v1215, %v1199
      %v1238 = vsel %vm1226, %v1217, %v1201
      %v1239 = vsel %vm1226, %v1219, %v1203
      %v1240 = vsel %vm1226, %v1221, %v1205
      %v1241 = vsel %vm1226, %v1223, %v1207
      %v1242 = vsel %vm1226, %v1225, %v1209
      %s1243 = scalar_lea.vmem %s3, 1024
      %v1244 = vld [vmem:[%s1243] sm:$0xff]
      %v1245 = vld [vmem:[%s1243 + $0x8] sm:$0xff]
      %v1246 = vld [vmem:[%s1243 + $0x10] sm:$0xff]
      %v1247 = vld [vmem:[%s1243 + $0x18] sm:$0xff]
      %v1248 = vld [vmem:[%s1243 + $0x20] sm:$0xff]
      %v1249 = vld [vmem:[%s1243 + $0x28] sm:$0xff]
      %v1250 = vld [vmem:[%s1243 + $0x30] sm:$0xff]
      %v1251 = vld [vmem:[%s1243 + $0x38] sm:$0xff]
      %v1252 = vld [vmem:[%s1243 + $0x40] sm:$0xff]
      %v1253 = vld [vmem:[%s1243 + $0x48] sm:$0xff]
      %v1254 = vld [vmem:[%s1243 + $0x50] sm:$0xff]
      %v1255 = vld [vmem:[%s1243 + $0x58] sm:$0xff]
      %v1256 = vld [vmem:[%s1243 + $0x60] sm:$0xff]
      %v1257 = vld [vmem:[%s1243 + $0x68] sm:$0xff]
      %v1258 = vld [vmem:[%s1243 + $0x70] sm:$0xff]
      %v1259 = vld [vmem:[%s1243 + $0x78] sm:$0xff]
      %v1260 = vmul.f32 %v1227, %v1244
      %v1261 = vmul.f32 %v1235, %v1245
      %v1262 = vmul.f32 %v1228, %v1246
      %v1263 = vmul.f32 %v1236, %v1247
      %v1264 = vmul.f32 %v1229, %v1248
      %v1265 = vmul.f32 %v1237, %v1249
      %v1266 = vmul.f32 %v1230, %v1250
      %v1267 = vmul.f32 %v1238, %v1251
      %v1268 = vmul.f32 %v1231, %v1252
      %v1269 = vmul.f32 %v1239, %v1253
      %v1270 = vmul.f32 %v1232, %v1254
      %v1271 = vmul.f32 %v1240, %v1255
      %v1272 = vmul.f32 %v1233, %v1256
      %v1273 = vmul.f32 %v1241, %v1257
      %v1274 = vmul.f32 %v1234, %v1258
      %v1275 = vmul.f32 %v1242, %v1259
      %v1276 = vadd.f32 %v1178, %v1260
      %v1277 = vadd.f32 %v1179, %v1261
      %v1278 = vadd.f32 %v1180, %v1262
      %v1279 = vadd.f32 %v1181, %v1263
      %v1280 = vadd.f32 %v1182, %v1264
      %v1281 = vadd.f32 %v1183, %v1265
      %v1282 = vadd.f32 %v1184, %v1266
      %v1283 = vadd.f32 %v1185, %v1267
      %v1284 = vadd.f32 %v1186, %v1268
      %v1285 = vadd.f32 %v1187, %v1269
      %v1286 = vadd.f32 %v1188, %v1270
      %v1287 = vadd.f32 %v1189, %v1271
      %v1288 = vadd.f32 %v1190, %v1272
      %v1289 = vadd.f32 %v1191, %v1273
      %v1290 = vadd.f32 %v1192, %v1274
      %v1291 = vadd.f32 %v1193, %v1275
      %v1292 = vadd.f32 %v410, %v1276
      %v1293 = vadd.f32 %v451, %v1277
      %v1294 = vadd.f32 %v413, %v1278
      %v1295 = vadd.f32 %v454, %v1279
      %v1296 = vadd.f32 %v416, %v1280
      %v1297 = vadd.f32 %v457, %v1281
      %v1298 = vadd.f32 %v419, %v1282
      %v1299 = vadd.f32 %v460, %v1283
      %v1300 = vadd.f32 %v422, %v1284
      %v1301 = vadd.f32 %v463, %v1285
      %v1302 = vadd.f32 %v425, %v1286
      %v1303 = vadd.f32 %v466, %v1287
      %v1304 = vadd.f32 %v428, %v1288
      %v1305 = vadd.f32 %v469, %v1289
      %v1306 = vadd.f32 %v431, %v1290
      %v1307 = vadd.f32 %v472, %v1291
      %1309 = vset.pattern.permute.xlu0 0
      %1310 = vperm.xlu0 %1309, %v311
      %v1311 = vpop.permute.xlu0 %1310
      %1314 = vset.pattern.permute.xlu0 0
      %1315 = vperm.xlu0 %1314, %v312
      %v1316 = vpop.permute.xlu0 %1315
      %1319 = vset.pattern.permute.xlu0 0
      %1320 = vperm.xlu0 %1319, %v313
      %v1321 = vpop.permute.xlu0 %1320
      %1324 = vset.pattern.permute.xlu0 0
      %1325 = vperm.xlu0 %1324, %v314
      %v1326 = vpop.permute.xlu0 %1325
      %1329 = vset.pattern.permute.xlu0 0
      %1330 = vperm.xlu0 %1329, %v315
      %v1331 = vpop.permute.xlu0 %1330
      %1334 = vset.pattern.permute.xlu0 0
      %1335 = vperm.xlu0 %1334, %v316
      %v1336 = vpop.permute.xlu0 %1335
      %1339 = vset.pattern.permute.xlu0 0
      %1340 = vperm.xlu0 %1339, %v317
      %v1341 = vpop.permute.xlu0 %1340
      %1344 = vset.pattern.permute.xlu0 0
      %1345 = vperm.xlu0 %1344, %v318
      %v1346 = vpop.permute.xlu0 %1345
      %v1348 = vadd.f32 %v1292, %v1311
      %v1349 = vadd.f32 %v1293, %v1311
      %v1350 = vadd.f32 %v1294, %v1316
      %v1351 = vadd.f32 %v1295, %v1316
      %v1352 = vadd.f32 %v1296, %v1321
      %v1353 = vadd.f32 %v1297, %v1321
      %v1354 = vadd.f32 %v1298, %v1326
      %v1355 = vadd.f32 %v1299, %v1326
      %v1356 = vadd.f32 %v1300, %v1331
      %v1357 = vadd.f32 %v1301, %v1331
      %v1358 = vadd.f32 %v1302, %v1336
      %v1359 = vadd.f32 %v1303, %v1336
      %v1360 = vadd.f32 %v1304, %v1341
      %v1361 = vadd.f32 %v1305, %v1341
      %v1362 = vadd.f32 %v1306, %v1346
      %v1363 = vadd.f32 %v1307, %v1346
      %v1364 = vmul.f32 %v1348, 0.5
      %v1365 = vmul.f32 %v1349, 0.5
      %v1366 = vmul.f32 %v1350, 0.5
      %v1367 = vmul.f32 %v1351, 0.5
      %v1368 = vmul.f32 %v1352, 0.5
      %v1369 = vmul.f32 %v1353, 0.5
      %v1370 = vmul.f32 %v1354, 0.5
      %v1371 = vmul.f32 %v1355, 0.5
      %v1372 = vmul.f32 %v1356, 0.5
      %v1373 = vmul.f32 %v1357, 0.5
      %v1374 = vmul.f32 %v1358, 0.5
      %v1375 = vmul.f32 %v1359, 0.5
      %v1376 = vmul.f32 %v1360, 0.5
      %v1377 = vmul.f32 %v1361, 0.5
      %v1378 = vmul.f32 %v1362, 0.5
      %v1379 = vmul.f32 %v1363, 0.5
      %v1380 = vmul.f32 %v1348, 0.044715
      %v1381 = vmul.f32 %v1349, 0.044715
      %v1382 = vmul.f32 %v1350, 0.044715
      %v1383 = vmul.f32 %v1351, 0.044715
      %v1384 = vmul.f32 %v1352, 0.044715
      %v1385 = vmul.f32 %v1353, 0.044715
      %v1386 = vmul.f32 %v1354, 0.044715
      %v1387 = vmul.f32 %v1355, 0.044715
      %v1388 = vmul.f32 %v1356, 0.044715
      %v1389 = vmul.f32 %v1357, 0.044715
      %v1390 = vmul.f32 %v1358, 0.044715
      %v1391 = vmul.f32 %v1359, 0.044715
      %v1392 = vmul.f32 %v1360, 0.044715
      %v1393 = vmul.f32 %v1361, 0.044715
      %v1394 = vmul.f32 %v1362, 0.044715
      %v1395 = vmul.f32 %v1363, 0.044715
      %v1396 = vmul.f32 %v1380, %v1348
      %v1397 = vmul.f32 %v1381, %v1349
      %v1398 = vmul.f32 %v1382, %v1350
      %v1399 = vmul.f32 %v1383, %v1351
      %v1400 = vmul.f32 %v1384, %v1352
      %v1401 = vmul.f32 %v1385, %v1353
      %v1402 = vmul.f32 %v1386, %v1354
      %v1403 = vmul.f32 %v1387, %v1355
      %v1404 = vmul.f32 %v1388, %v1356
      %v1405 = vmul.f32 %v1389, %v1357
      %v1406 = vmul.f32 %v1390, %v1358
      %v1407 = vmul.f32 %v1391, %v1359
      %v1408 = vmul.f32 %v1392, %v1360
      %v1409 = vmul.f32 %v1393, %v1361
      %v1410 = vmul.f32 %v1394, %v1362
      %v1411 = vmul.f32 %v1395, %v1363
      %v1412 = vmul.f32 %v1396, %v1348
      %v1413 = vmul.f32 %v1397, %v1349
      %v1414 = vmul.f32 %v1398, %v1350
      %v1415 = vmul.f32 %v1399, %v1351
      %v1416 = vmul.f32 %v1400, %v1352
      %v1417 = vmul.f32 %v1401, %v1353
      %v1418 = vmul.f32 %v1402, %v1354
      %v1419 = vmul.f32 %v1403, %v1355
      %v1420 = vmul.f32 %v1404, %v1356
      %v1421 = vmul.f32 %v1405, %v1357
      %v1422 = vmul.f32 %v1406, %v1358
      %v1423 = vmul.f32 %v1407, %v1359
      %v1424 = vmul.f32 %v1408, %v1360
      %v1425 = vmul.f32 %v1409, %v1361
      %v1426 = vmul.f32 %v1410, %v1362
      %v1427 = vmul.f32 %v1411, %v1363
      %v1428 = vadd.f32 %v1348, %v1412
      %v1429 = vadd.f32 %v1349, %v1413
      %v1430 = vadd.f32 %v1350, %v1414
      %v1431 = vadd.f32 %v1351, %v1415
      %v1432 = vadd.f32 %v1352, %v1416
      %v1433 = vadd.f32 %v1353, %v1417
      %v1434 = vadd.f32 %v1354, %v1418
      %v1435 = vadd.f32 %v1355, %v1419
      %v1436 = vadd.f32 %v1356, %v1420
      %v1437 = vadd.f32 %v1357, %v1421
      %v1438 = vadd.f32 %v1358, %v1422
      %v1439 = vadd.f32 %v1359, %v1423
      %v1440 = vadd.f32 %v1360, %v1424
      %v1441 = vadd.f32 %v1361, %v1425
      %v1442 = vadd.f32 %v1362, %v1426
      %v1443 = vadd.f32 %v1363, %v1427
      %v1444 = vmul.f32 %v1428, 0.7978846
      %v1445 = vmul.f32 %v1429, 0.7978846
      %v1446 = vmul.f32 %v1430, 0.7978846
      %v1447 = vmul.f32 %v1431, 0.7978846
      %v1448 = vmul.f32 %v1432, 0.7978846
      %v1449 = vmul.f32 %v1433, 0.7978846
      %v1450 = vmul.f32 %v1434, 0.7978846
      %v1451 = vmul.f32 %v1435, 0.7978846
      %v1452 = vmul.f32 %v1436, 0.7978846
      %v1453 = vmul.f32 %v1437, 0.7978846
      %v1454 = vmul.f32 %v1438, 0.7978846
      %v1455 = vmul.f32 %v1439, 0.7978846
      %v1456 = vmul.f32 %v1440, 0.7978846
      %v1457 = vmul.f32 %v1441, 0.7978846
      %v1458 = vmul.f32 %v1442, 0.7978846
      %v1459 = vmul.f32 %v1443, 0.7978846
      %v1460 = vtanh.pop %v1444
      %v1461 = vtanh.pop %v1445
      %v1462 = vtanh.pop %v1446
      %v1463 = vtanh.pop %v1447
      %v1464 = vtanh.pop %v1448
      %v1465 = vtanh.pop %v1449
      %v1466 = vtanh.pop %v1450
      %v1467 = vtanh.pop %v1451
      %v1468 = vtanh.pop %v1452
      %v1469 = vtanh.pop %v1453
      %v1470 = vtanh.pop %v1454
      %v1471 = vtanh.pop %v1455
      %v1472 = vtanh.pop %v1456
      %v1473 = vtanh.pop %v1457
      %v1474 = vtanh.pop %v1458
      %v1475 = vtanh.pop %v1459
      %v1476 = vadd.f32 %v1460, 1.0
      %v1477 = vadd.f32 %v1461, 1.0
      %v1478 = vadd.f32 %v1462, 1.0
      %v1479 = vadd.f32 %v1463, 1.0
      %v1480 = vadd.f32 %v1464, 1.0
      %v1481 = vadd.f32 %v1465, 1.0
      %v1482 = vadd.f32 %v1466, 1.0
      %v1483 = vadd.f32 %v1467, 1.0
      %v1484 = vadd.f32 %v1468, 1.0
      %v1485 = vadd.f32 %v1469, 1.0
      %v1486 = vadd.f32 %v1470, 1.0
      %v1487 = vadd.f32 %v1471, 1.0
      %v1488 = vadd.f32 %v1472, 1.0
      %v1489 = vadd.f32 %v1473, 1.0
      %v1490 = vadd.f32 %v1474, 1.0
      %v1491 = vadd.f32 %v1475, 1.0
      %v1492 = vmul.f32 %v1364, %v1476
      %v1493 = vmul.f32 %v1365, %v1477
      %v1494 = vmul.f32 %v1366, %v1478
      %v1495 = vmul.f32 %v1367, %v1479
      %v1496 = vmul.f32 %v1368, %v1480
      %v1497 = vmul.f32 %v1369, %v1481
      %v1498 = vmul.f32 %v1370, %v1482
      %v1499 = vmul.f32 %v1371, %v1483
      %v1500 = vmul.f32 %v1372, %v1484
      %v1501 = vmul.f32 %v1373, %v1485
      %v1502 = vmul.f32 %v1374, %v1486
      %v1503 = vmul.f32 %v1375, %v1487
      %v1504 = vmul.f32 %v1376, %v1488
      %v1505 = vmul.f32 %v1377, %v1489
      %v1506 = vmul.f32 %v1378, %v1490
      %v1507 = vmul.f32 %v1379, %v1491
      %1509 = vset.pattern.permute.xlu0 0
      %1510 = vperm.xlu0 %1509, %v307
      %v1511 = vpop.permute.xlu0 %1510
      %1514 = vset.pattern.permute.xlu0 0
      %1515 = vperm.xlu0 %1514, %v308
      %v1516 = vpop.permute.xlu0 %1515
      %1519 = vset.pattern.permute.xlu0 0
      %1520 = vperm.xlu0 %1519, %v309
      %v1521 = vpop.permute.xlu0 %1520
      %1524 = vset.pattern.permute.xlu0 0
      %1525 = vperm.xlu0 %1524, %v310
      %v1526 = vpop.permute.xlu0 %1525
      %vm1528 = vcmask 523264
      %v1530 = vsel %vm1528, %v303, 0
      %v1533 = vsel %vm1528, %v304, 0
      %v1536 = vsel %vm1528, %v305, 0
      %v1539 = vsel %vm1528, %v306, 0
      %1541 = vmatpush.msra.mxu0 0.0
      %1542 = vmatpush.msra.mxu0 0.0
      %1543 = vmatpush.msra.mxu0 0.0
      %1544 = vmatpush.msra.mxu0 0.0
      %1545 = vmatpush.msra.mxu0 0.0
      %1546 = vmatpush.msra.mxu0 0.0
      %1547 = vmatpush.msra.mxu0 0.0
      %1548 = vmatpush.msra.mxu0 0.0
      %1549 = vmatpush.msra.mxu0 %v1506
      %1550 = vmatpush.msra.mxu0 %v1504
      %1551 = vmatpush.msra.mxu0 %v1502
      %1552 = vmatpush.msra.mxu0 %v1500
      %1553 = vmatpush.msra.mxu0 %v1498
      %1554 = vmatpush.msra.mxu0 %v1496
      %1555 = vmatpush.msra.mxu0 %v1494
      %1556 = vmatpush.msra.mxu0 %v1492
      %1557 = vmatmul.f32.gmra.mxu0 %v1530
      %v1558 = vpop.f32.mrf.mxu0
      %v1559 = vadd.f32 %v1511, %v1558
      %1560 = vmatmul.f32.gmra.mxu0 %v1533
      %v1561 = vpop.f32.mrf.mxu0
      %v1562 = vadd.f32 %v1516, %v1561
      %1563 = vmatmul.f32.gmra.mxu0 %v1536
      %v1564 = vpop.f32.mrf.mxu0
      %v1565 = vadd.f32 %v1521, %v1564
      %1566 = vmatmul.f32.gmra.mxu0 %v1539
      %v1567 = vpop.f32.mrf.mxu0
      %v1568 = vadd.f32 %v1526, %v1567
      %1569 = vdwg.mxu0
      %1570 = vmatpush.msra.mxu0 0.0
      %1571 = vmatpush.msra.mxu0 0.0
      %1572 = vmatpush.msra.mxu0 0.0
      %1573 = vmatpush.msra.mxu0 0.0
      %1574 = vmatpush.msra.mxu0 0.0
      %1575 = vmatpush.msra.mxu0 0.0
      %1576 = vmatpush.msra.mxu0 0.0
      %1577 = vmatpush.msra.mxu0 0.0
      %1578 = vmatpush.msra.mxu0 %v1507
      %1579 = vmatpush.msra.mxu0 %v1505
      %1580 = vmatpush.msra.mxu0 %v1503
      %1581 = vmatpush.msra.mxu0 %v1501
      %1582 = vmatpush.msra.mxu0 %v1499
      %1583 = vmatpush.msra.mxu0 %v1497
      %1584 = vmatpush.msra.mxu0 %v1495
      %1585 = vmatpush.msra.mxu0 %v1493
      %1586 = vmatmul.f32.gmra.mxu0 %v1530
      %v1587 = vpop.f32.mrf.mxu0
      %v1588 = vadd.f32 %v1511, %v1587
      %1589 = vmatmul.f32.gmra.mxu0 %v1533
      %v1590 = vpop.f32.mrf.mxu0
      %v1591 = vadd.f32 %v1516, %v1590
      %1592 = vmatmul.f32.gmra.mxu0 %v1536
      %v1593 = vpop.f32.mrf.mxu0
      %v1594 = vadd.f32 %v1521, %v1593
      %1595 = vmatmul.f32.gmra.mxu0 %v1539
      %v1596 = vpop.f32.mrf.mxu0
      %v1597 = vadd.f32 %v1526, %v1596
      %1598 = vdwg.mxu0
      %1599 = vst [vmem:[%s285] sm:$0xff] %v1559
      %1600 = vst [vmem:[%s285 + $0x8] sm:$0xff] %v1588
      %1601 = vst [vmem:[%s285 + $0x10] sm:$0xff] %v1562
      %1602 = vst [vmem:[%s285 + $0x18] sm:$0xff] %v1591
      %1603 = vst [vmem:[%s285 + $0x20] sm:$0xff] %v1565
      %1604 = vst [vmem:[%s285 + $0x28] sm:$0xff] %v1594
      %1605 = vst [vmem:[%s285 + $0x30] sm:$0xff] %v1568
      %1606 = vst [vmem:[%s285 + $0x38] sm:$0xff] %v1597
      %s1607 = scalar_lea.vmem %s278, 64
      %v1608 = vld [vmem:[%s1607] sm:$0xff]
      %v1609 = vld [vmem:[%s1607 + $0x8] sm:$0xff]
      %v1610 = vld [vmem:[%s1607 + $0x10] sm:$0xff]
      %v1611 = vld [vmem:[%s1607 + $0x18] sm:$0xff]
      %v1612 = vld [vmem:[%s1607 + $0x20] sm:$0xff]
      %v1613 = vld [vmem:[%s1607 + $0x28] sm:$0xff]
      %v1614 = vld [vmem:[%s1607 + $0x30] sm:$0xff]
      %v1615 = vld [vmem:[%s1607 + $0x38] sm:$0xff]
      %1616 = vmatpush.msra.mxu0 0.0
      %1617 = vmatpush.msra.mxu0 0.0
      %1618 = vmatpush.msra.mxu0 0.0
      %1619 = vmatpush.msra.mxu0 0.0
      %1620 = vmatpush.msra.mxu0 0.0
      %1621 = vmatpush.msra.mxu0 0.0
      %1622 = vmatpush.msra.mxu0 0.0
      %1623 = vmatpush.msra.mxu0 0.0
      %1624 = vmatpush.msra.mxu0 0.0
      %1625 = vmatpush.msra.mxu0 0.0
      %1626 = vmatpush.msra.mxu0 0.0
      %1627 = vmatpush.msra.mxu0 0.0
      %1628 = vmatpush.msra.mxu0 %v1614
      %1629 = vmatpush.msra.mxu0 %v1612
      %1630 = vmatpush.msra.mxu0 %v1610
      %1631 = vmatpush.msra.mxu0 %v1608
      %1632 = vmatmul.f32.gmra.mxu0 %v369
      %v1633 = vpop.f32.mrf.mxu0
      %v1634 = vadd.f32 %v330, %v1633
      %1635 = vmatmul.f32.gmra.mxu0 %v372
      %v1636 = vpop.f32.mrf.mxu0
      %v1637 = vadd.f32 %v335, %v1636
      %1638 = vmatmul.f32.gmra.mxu0 %v375
      %v1639 = vpop.f32.mrf.mxu0
      %v1640 = vadd.f32 %v340, %v1639
      %1641 = vmatmul.f32.gmra.mxu0 %v378
      %v1642 = vpop.f32.mrf.mxu0
      %v1643 = vadd.f32 %v345, %v1642
      %1644 = vmatmul.f32.gmra.mxu0 %v381
      %v1645 = vpop.f32.mrf.mxu0
      %v1646 = vadd.f32 %v350, %v1645
      %1647 = vmatmul.f32.gmra.mxu0 %v384
      %v1648 = vpop.f32.mrf.mxu0
      %v1649 = vadd.f32 %v355, %v1648
      %1650 = vmatmul.f32.gmra.mxu0 %v387
      %v1651 = vpop.f32.mrf.mxu0
      %v1652 = vadd.f32 %v360, %v1651
      %1653 = vmatmul.f32.gmra.mxu0 %v390
      %v1654 = vpop.f32.mrf.mxu0
      %v1655 = vadd.f32 %v365, %v1654
      %1656 = vdwg.mxu0
      %1657 = vmatpush.msra.mxu0 0.0
      %1658 = vmatpush.msra.mxu0 0.0
      %1659 = vmatpush.msra.mxu0 0.0
      %1660 = vmatpush.msra.mxu0 0.0
      %1661 = vmatpush.msra.mxu0 0.0
      %1662 = vmatpush.msra.mxu0 0.0
      %1663 = vmatpush.msra.mxu0 0.0
      %1664 = vmatpush.msra.mxu0 0.0
      %1665 = vmatpush.msra.mxu0 0.0
      %1666 = vmatpush.msra.mxu0 0.0
      %1667 = vmatpush.msra.mxu0 0.0
      %1668 = vmatpush.msra.mxu0 0.0
      %1669 = vmatpush.msra.mxu0 %v1615
      %1670 = vmatpush.msra.mxu0 %v1613
      %1671 = vmatpush.msra.mxu0 %v1611
      %1672 = vmatpush.msra.mxu0 %v1609
      %1673 = vmatmul.f32.gmra.mxu0 %v369
      %v1674 = vpop.f32.mrf.mxu0
      %v1675 = vadd.f32 %v330, %v1674
      %1676 = vmatmul.f32.gmra.mxu0 %v372
      %v1677 = vpop.f32.mrf.mxu0
      %v1678 = vadd.f32 %v335, %v1677
      %1679 = vmatmul.f32.gmra.mxu0 %v375
      %v1680 = vpop.f32.mrf.mxu0
      %v1681 = vadd.f32 %v340, %v1680
      %1682 = vmatmul.f32.gmra.mxu0 %v378
      %v1683 = vpop.f32.mrf.mxu0
      %v1684 = vadd.f32 %v345, %v1683
      %1685 = vmatmul.f32.gmra.mxu0 %v381
      %v1686 = vpop.f32.mrf.mxu0
      %v1687 = vadd.f32 %v350, %v1686
      %1688 = vmatmul.f32.gmra.mxu0 %v384
      %v1689 = vpop.f32.mrf.mxu0
      %v1690 = vadd.f32 %v355, %v1689
      %1691 = vmatmul.f32.gmra.mxu0 %v387
      %v1692 = vpop.f32.mrf.mxu0
      %v1693 = vadd.f32 %v360, %v1692
      %1694 = vmatmul.f32.gmra.mxu0 %v390
      %v1695 = vpop.f32.mrf.mxu0
      %v1696 = vadd.f32 %v365, %v1695
      %1697 = vdwg.mxu0
      %v1698 = vld [vmem:[%s474] sm:$0xff]
      %v1699 = vld [vmem:[%s474 + $0x8] sm:$0xff]
      %v1700 = vld [vmem:[%s474 + $0x10] sm:$0xff]
      %v1701 = vld [vmem:[%s474 + $0x18] sm:$0xff]
      %v1702 = vld [vmem:[%s474 + $0x20] sm:$0xff]
      %v1703 = vld [vmem:[%s474 + $0x28] sm:$0xff]
      %v1704 = vld [vmem:[%s474 + $0x30] sm:$0xff]
      %v1705 = vld [vmem:[%s474 + $0x38] sm:$0xff]
      %v1706 = vld [vmem:[%s474 + $0x40] sm:$0xff]
      %v1707 = vld [vmem:[%s474 + $0x48] sm:$0xff]
      %v1708 = vld [vmem:[%s474 + $0x50] sm:$0xff]
      %v1709 = vld [vmem:[%s474 + $0x58] sm:$0xff]
      %v1710 = vld [vmem:[%s474 + $0x60] sm:$0xff]
      %v1711 = vld [vmem:[%s474 + $0x68] sm:$0xff]
      %v1712 = vld [vmem:[%s474 + $0x70] sm:$0xff]
      %v1713 = vld [vmem:[%s474 + $0x78] sm:$0xff]
      %v1714 = vmul.f32 %v1634, %v1698
      %v1715 = vmul.f32 %v1675, %v1699
      %v1716 = vmul.f32 %v1637, %v1700
      %v1717 = vmul.f32 %v1678, %v1701
      %v1718 = vmul.f32 %v1640, %v1702
      %v1719 = vmul.f32 %v1681, %v1703
      %v1720 = vmul.f32 %v1643, %v1704
      %v1721 = vmul.f32 %v1684, %v1705
      %v1722 = vmul.f32 %v1646, %v1706
      %v1723 = vmul.f32 %v1687, %v1707
      %v1724 = vmul.f32 %v1649, %v1708
      %v1725 = vmul.f32 %v1690, %v1709
      %v1726 = vmul.f32 %v1652, %v1710
      %v1727 = vmul.f32 %v1693, %v1711
      %v1728 = vmul.f32 %v1655, %v1712
      %v1729 = vmul.f32 %v1696, %v1713
      %1730 = vrot.lane.b32.xlu0 %v1634, 17
      %v1731 = vpop.permute.xlu0 %1730
      %1732 = vrot.lane.b32.xlu0 %v1637, 17
      %v1733 = vpop.permute.xlu0 %1732
      %1734 = vrot.lane.b32.xlu0 %v1640, 17
      %v1735 = vpop.permute.xlu0 %1734
      %1736 = vrot.lane.b32.xlu0 %v1643, 17
      %v1737 = vpop.permute.xlu0 %1736
      %1738 = vrot.lane.b32.xlu0 %v1646, 17
      %v1739 = vpop.permute.xlu0 %1738
      %1740 = vrot.lane.b32.xlu0 %v1649, 17
      %v1741 = vpop.permute.xlu0 %1740
      %1742 = vrot.lane.b32.xlu0 %v1652, 17
      %v1743 = vpop.permute.xlu0 %1742
      %1744 = vrot.lane.b32.xlu0 %v1655, 17
      %v1745 = vpop.permute.xlu0 %1744
      %1746 = vrot.lane.b32.xlu0 %v1675, 17
      %v1747 = vpop.permute.xlu0 %1746
      %1748 = vrot.lane.b32.xlu0 %v1678, 17
      %v1749 = vpop.permute.xlu0 %1748
      %1750 = vrot.lane.b32.xlu0 %v1681, 17
      %v1751 = vpop.permute.xlu0 %1750
      %1752 = vrot.lane.b32.xlu0 %v1684, 17
      %v1753 = vpop.permute.xlu0 %1752
      %1754 = vrot.lane.b32.xlu0 %v1687, 17
      %v1755 = vpop.permute.xlu0 %1754
      %1756 = vrot.lane.b32.xlu0 %v1690, 17
      %v1757 = vpop.permute.xlu0 %1756
      %1758 = vrot.lane.b32.xlu0 %v1693, 17
      %v1759 = vpop.permute.xlu0 %1758
      %1760 = vrot.lane.b32.xlu0 %v1696, 17
      %v1761 = vpop.permute.xlu0 %1760
      %v1762 = vsel %vm541, %v1731, %v1747
      %v1763 = vsel %vm541, %v1733, %v1749
      %v1764 = vsel %vm541, %v1735, %v1751
      %v1765 = vsel %vm541, %v1737, %v1753
      %v1766 = vsel %vm541, %v1739, %v1755
      %v1767 = vsel %vm541, %v1741, %v1757
      %v1768 = vsel %vm541, %v1743, %v1759
      %v1769 = vsel %vm541, %v1745, %v1761
      %v1770 = vsel %vm541, %v1747, %v1731
      %v1771 = vsel %vm541, %v1749, %v1733
      %v1772 = vsel %vm541, %v1751, %v1735
      %v1773 = vsel %vm541, %v1753, %v1737
      %v1774 = vsel %vm541, %v1755, %v1739
      %v1775 = vsel %vm541, %v1757, %v1741
      %v1776 = vsel %vm541, %v1759, %v1743
      %v1777 = vsel %vm541, %v1761, %v1745
      %v1778 = vld [vmem:[%s3] sm:$0xff]
      %v1779 = vld [vmem:[%s3 + $0x8] sm:$0xff]
      %v1780 = vld [vmem:[%s3 + $0x10] sm:$0xff]
      %v1781 = vld [vmem:[%s3 + $0x18] sm:$0xff]
      %v1782 = vld [vmem:[%s3 + $0x20] sm:$0xff]
      %v1783 = vld [vmem:[%s3 + $0x28] sm:$0xff]
      %v1784 = vld [vmem:[%s3 + $0x30] sm:$0xff]
      %v1785 = vld [vmem:[%s3 + $0x38] sm:$0xff]
      %v1786 = vld [vmem:[%s3 + $0x40] sm:$0xff]
      %v1787 = vld [vmem:[%s3 + $0x48] sm:$0xff]
      %v1788 = vld [vmem:[%s3 + $0x50] sm:$0xff]
      %v1789 = vld [vmem:[%s3 + $0x58] sm:$0xff]
      %v1790 = vld [vmem:[%s3 + $0x60] sm:$0xff]
      %v1791 = vld [vmem:[%s3 + $0x68] sm:$0xff]
      %v1792 = vld [vmem:[%s3 + $0x70] sm:$0xff]
      %v1793 = vld [vmem:[%s3 + $0x78] sm:$0xff]
      %v1794 = vmul.f32 %v1770, %v1778
      %v1795 = vmul.f32 %v1762, %v1779
      %v1796 = vmul.f32 %v1771, %v1780
      %v1797 = vmul.f32 %v1763, %v1781
      %v1798 = vmul.f32 %v1772, %v1782
      %v1799 = vmul.f32 %v1764, %v1783
      %v1800 = vmul.f32 %v1773, %v1784
      %v1801 = vmul.f32 %v1765, %v1785
      %v1802 = vmul.f32 %v1774, %v1786
      %v1803 = vmul.f32 %v1766, %v1787
      %v1804 = vmul.f32 %v1775, %v1788
      %v1805 = vmul.f32 %v1767, %v1789
      %v1806 = vmul.f32 %v1776, %v1790
      %v1807 = vmul.f32 %v1768, %v1791
      %v1808 = vmul.f32 %v1777, %v1792
      %v1809 = vmul.f32 %v1769, %v1793
      %v1810 = vadd.f32 %v1714, %v1794
      %v1811 = vadd.f32 %v1715, %v1795
      %v1812 = vadd.f32 %v1716, %v1796
      %v1813 = vadd.f32 %v1717, %v1797
      %v1814 = vadd.f32 %v1718, %v1798
      %v1815 = vadd.f32 %v1719, %v1799
      %v1816 = vadd.f32 %v1720, %v1800
      %v1817 = vadd.f32 %v1721, %v1801
      %v1818 = vadd.f32 %v1722, %v1802
      %v1819 = vadd.f32 %v1723, %v1803
      %v1820 = vadd.f32 %v1724, %v1804
      %v1821 = vadd.f32 %v1725, %v1805
      %v1822 = vadd.f32 %v1726, %v1806
      %v1823 = vadd.f32 %v1727, %v1807
      %v1824 = vadd.f32 %v1728, %v1808
      %v1825 = vadd.f32 %v1729, %v1809
      %1826 = vrot.lane.b32.xlu0 %v1634, 16
      %v1827 = vpop.permute.xlu0 %1826
      %1828 = vrot.lane.b32.xlu0 %v1637, 16
      %v1829 = vpop.permute.xlu0 %1828
      %1830 = vrot.lane.b32.xlu0 %v1640, 16
      %v1831 = vpop.permute.xlu0 %1830
      %1832 = vrot.lane.b32.xlu0 %v1643, 16
      %v1833 = vpop.permute.xlu0 %1832
      %1834 = vrot.lane.b32.xlu0 %v1646, 16
      %v1835 = vpop.permute.xlu0 %1834
      %1836 = vrot.lane.b32.xlu0 %v1649, 16
      %v1837 = vpop.permute.xlu0 %1836
      %1838 = vrot.lane.b32.xlu0 %v1652, 16
      %v1839 = vpop.permute.xlu0 %1838
      %1840 = vrot.lane.b32.xlu0 %v1655, 16
      %v1841 = vpop.permute.xlu0 %1840
      %1842 = vrot.lane.b32.xlu0 %v1675, 16
      %v1843 = vpop.permute.xlu0 %1842
      %1844 = vrot.lane.b32.xlu0 %v1678, 16
      %v1845 = vpop.permute.xlu0 %1844
      %1846 = vrot.lane.b32.xlu0 %v1681, 16
      %v1847 = vpop.permute.xlu0 %1846
      %1848 = vrot.lane.b32.xlu0 %v1684, 16
      %v1849 = vpop.permute.xlu0 %1848
      %1850 = vrot.lane.b32.xlu0 %v1687, 16
      %v1851 = vpop.permute.xlu0 %1850
      %1852 = vrot.lane.b32.xlu0 %v1690, 16
      %v1853 = vpop.permute.xlu0 %1852
      %1854 = vrot.lane.b32.xlu0 %v1693, 16
      %v1855 = vpop.permute.xlu0 %1854
      %1856 = vrot.lane.b32.xlu0 %v1696, 16
      %v1857 = vpop.permute.xlu0 %1856
      %v1858 = vsel %vm638, %v1827, %v1843
      %v1859 = vsel %vm638, %v1829, %v1845
      %v1860 = vsel %vm638, %v1831, %v1847
      %v1861 = vsel %vm638, %v1833, %v1849
      %v1862 = vsel %vm638, %v1835, %v1851
      %v1863 = vsel %vm638, %v1837, %v1853
      %v1864 = vsel %vm638, %v1839, %v1855
      %v1865 = vsel %vm638, %v1841, %v1857
      %v1866 = vsel %vm638, %v1843, %v1827
      %v1867 = vsel %vm638, %v1845, %v1829
      %v1868 = vsel %vm638, %v1847, %v1831
      %v1869 = vsel %vm638, %v1849, %v1833
      %v1870 = vsel %vm638, %v1851, %v1835
      %v1871 = vsel %vm638, %v1853, %v1837
      %v1872 = vsel %vm638, %v1855, %v1839
      %v1873 = vsel %vm638, %v1857, %v1841
      %v1874 = vld [vmem:[%s655] sm:$0xff]
      %v1875 = vld [vmem:[%s655 + $0x8] sm:$0xff]
      %v1876 = vld [vmem:[%s655 + $0x10] sm:$0xff]
      %v1877 = vld [vmem:[%s655 + $0x18] sm:$0xff]
      %v1878 = vld [vmem:[%s655 + $0x20] sm:$0xff]
      %v1879 = vld [vmem:[%s655 + $0x28] sm:$0xff]
      %v1880 = vld [vmem:[%s655 + $0x30] sm:$0xff]
      %v1881 = vld [vmem:[%s655 + $0x38] sm:$0xff]
      %v1882 = vld [vmem:[%s655 + $0x40] sm:$0xff]
      %v1883 = vld [vmem:[%s655 + $0x48] sm:$0xff]
      %v1884 = vld [vmem:[%s655 + $0x50] sm:$0xff]
      %v1885 = vld [vmem:[%s655 + $0x58] sm:$0xff]
      %v1886 = vld [vmem:[%s655 + $0x60] sm:$0xff]
      %v1887 = vld [vmem:[%s655 + $0x68] sm:$0xff]
      %v1888 = vld [vmem:[%s655 + $0x70] sm:$0xff]
      %v1889 = vld [vmem:[%s655 + $0x78] sm:$0xff]
      %v1890 = vmul.f32 %v1866, %v1874
      %v1891 = vmul.f32 %v1858, %v1875
      %v1892 = vmul.f32 %v1867, %v1876
      %v1893 = vmul.f32 %v1859, %v1877
      %v1894 = vmul.f32 %v1868, %v1878
      %v1895 = vmul.f32 %v1860, %v1879
      %v1896 = vmul.f32 %v1869, %v1880
      %v1897 = vmul.f32 %v1861, %v1881
      %v1898 = vmul.f32 %v1870, %v1882
      %v1899 = vmul.f32 %v1862, %v1883
      %v1900 = vmul.f32 %v1871, %v1884
      %v1901 = vmul.f32 %v1863, %v1885
      %v1902 = vmul.f32 %v1872, %v1886
      %v1903 = vmul.f32 %v1864, %v1887
      %v1904 = vmul.f32 %v1873, %v1888
      %v1905 = vmul.f32 %v1865, %v1889
      %v1906 = vadd.f32 %v1810, %v1890
      %v1907 = vadd.f32 %v1811, %v1891
      %v1908 = vadd.f32 %v1812, %v1892
      %v1909 = vadd.f32 %v1813, %v1893
      %v1910 = vadd.f32 %v1814, %v1894
      %v1911 = vadd.f32 %v1815, %v1895
      %v1912 = vadd.f32 %v1816, %v1896
      %v1913 = vadd.f32 %v1817, %v1897
      %v1914 = vadd.f32 %v1818, %v1898
      %v1915 = vadd.f32 %v1819, %v1899
      %v1916 = vadd.f32 %v1820, %v1900
      %v1917 = vadd.f32 %v1821, %v1901
      %v1918 = vadd.f32 %v1822, %v1902
      %v1919 = vadd.f32 %v1823, %v1903
      %v1920 = vadd.f32 %v1824, %v1904
      %v1921 = vadd.f32 %v1825, %v1905
      %1922 = vrot.lane.b32.xlu0 %v1634, 15
      %v1923 = vpop.permute.xlu0 %1922
      %1924 = vrot.lane.b32.xlu0 %v1637, 15
      %v1925 = vpop.permute.xlu0 %1924
      %1926 = vrot.lane.b32.xlu0 %v1640, 15
      %v1927 = vpop.permute.xlu0 %1926
      %1928 = vrot.lane.b32.xlu0 %v1643, 15
      %v1929 = vpop.permute.xlu0 %1928
      %1930 = vrot.lane.b32.xlu0 %v1646, 15
      %v1931 = vpop.permute.xlu0 %1930
      %1932 = vrot.lane.b32.xlu0 %v1649, 15
      %v1933 = vpop.permute.xlu0 %1932
      %1934 = vrot.lane.b32.xlu0 %v1652, 15
      %v1935 = vpop.permute.xlu0 %1934
      %1936 = vrot.lane.b32.xlu0 %v1655, 15
      %v1937 = vpop.permute.xlu0 %1936
      %1938 = vrot.lane.b32.xlu0 %v1675, 15
      %v1939 = vpop.permute.xlu0 %1938
      %1940 = vrot.lane.b32.xlu0 %v1678, 15
      %v1941 = vpop.permute.xlu0 %1940
      %1942 = vrot.lane.b32.xlu0 %v1681, 15
      %v1943 = vpop.permute.xlu0 %1942
      %1944 = vrot.lane.b32.xlu0 %v1684, 15
      %v1945 = vpop.permute.xlu0 %1944
      %1946 = vrot.lane.b32.xlu0 %v1687, 15
      %v1947 = vpop.permute.xlu0 %1946
      %1948 = vrot.lane.b32.xlu0 %v1690, 15
      %v1949 = vpop.permute.xlu0 %1948
      %1950 = vrot.lane.b32.xlu0 %v1693, 15
      %v1951 = vpop.permute.xlu0 %1950
      %1952 = vrot.lane.b32.xlu0 %v1696, 15
      %v1953 = vpop.permute.xlu0 %1952
      %v1954 = vsel %vm736, %v1923, %v1939
      %v1955 = vsel %vm736, %v1925, %v1941
      %v1956 = vsel %vm736, %v1927, %v1943
      %v1957 = vsel %vm736, %v1929, %v1945
      %v1958 = vsel %vm736, %v1931, %v1947
      %v1959 = vsel %vm736, %v1933, %v1949
      %v1960 = vsel %vm736, %v1935, %v1951
      %v1961 = vsel %vm736, %v1937, %v1953
      %v1962 = vsel %vm736, %v1939, %v1923
      %v1963 = vsel %vm736, %v1941, %v1925
      %v1964 = vsel %vm736, %v1943, %v1927
      %v1965 = vsel %vm736, %v1945, %v1929
      %v1966 = vsel %vm736, %v1947, %v1931
      %v1967 = vsel %vm736, %v1949, %v1933
      %v1968 = vsel %vm736, %v1951, %v1935
      %v1969 = vsel %vm736, %v1953, %v1937
      %v1970 = vld [vmem:[%s753] sm:$0xff]
      %v1971 = vld [vmem:[%s753 + $0x8] sm:$0xff]
      %v1972 = vld [vmem:[%s753 + $0x10] sm:$0xff]
      %v1973 = vld [vmem:[%s753 + $0x18] sm:$0xff]
      %v1974 = vld [vmem:[%s753 + $0x20] sm:$0xff]
      %v1975 = vld [vmem:[%s753 + $0x28] sm:$0xff]
      %v1976 = vld [vmem:[%s753 + $0x30] sm:$0xff]
      %v1977 = vld [vmem:[%s753 + $0x38] sm:$0xff]
      %v1978 = vld [vmem:[%s753 + $0x40] sm:$0xff]
      %v1979 = vld [vmem:[%s753 + $0x48] sm:$0xff]
      %v1980 = vld [vmem:[%s753 + $0x50] sm:$0xff]
      %v1981 = vld [vmem:[%s753 + $0x58] sm:$0xff]
      %v1982 = vld [vmem:[%s753 + $0x60] sm:$0xff]
      %v1983 = vld [vmem:[%s753 + $0x68] sm:$0xff]
      %v1984 = vld [vmem:[%s753 + $0x70] sm:$0xff]
      %v1985 = vld [vmem:[%s753 + $0x78] sm:$0xff]
      %v1986 = vmul.f32 %v1962, %v1970
      %v1987 = vmul.f32 %v1954, %v1971
      %v1988 = vmul.f32 %v1963, %v1972
      %v1989 = vmul.f32 %v1955, %v1973
      %v1990 = vmul.f32 %v1964, %v1974
      %v1991 = vmul.f32 %v1956, %v1975
      %v1992 = vmul.f32 %v1965, %v1976
      %v1993 = vmul.f32 %v1957, %v1977
      %v1994 = vmul.f32 %v1966, %v1978
      %v1995 = vmul.f32 %v1958, %v1979
      %v1996 = vmul.f32 %v1967, %v1980
      %v1997 = vmul.f32 %v1959, %v1981
      %v1998 = vmul.f32 %v1968, %v1982
      %v1999 = vmul.f32 %v1960, %v1983
      %v2000 = vmul.f32 %v1969, %v1984
      %v2001 = vmul.f32 %v1961, %v1985
      %v2002 = vadd.f32 %v1906, %v1986
      %v2003 = vadd.f32 %v1907, %v1987
      %v2004 = vadd.f32 %v1908, %v1988
      %v2005 = vadd.f32 %v1909, %v1989
      %v2006 = vadd.f32 %v1910, %v1990
      %v2007 = vadd.f32 %v1911, %v1991
      %v2008 = vadd.f32 %v1912, %v1992
      %v2009 = vadd.f32 %v1913, %v1993
      %v2010 = vadd.f32 %v1914, %v1994
      %v2011 = vadd.f32 %v1915, %v1995
      %v2012 = vadd.f32 %v1916, %v1996
      %v2013 = vadd.f32 %v1917, %v1997
      %v2014 = vadd.f32 %v1918, %v1998
      %v2015 = vadd.f32 %v1919, %v1999
      %v2016 = vadd.f32 %v1920, %v2000
      %v2017 = vadd.f32 %v1921, %v2001
      %2018 = vrot.lane.b32.xlu0 %v1634, 1
      %v2019 = vpop.permute.xlu0 %2018
      %2020 = vrot.lane.b32.xlu0 %v1637, 1
      %v2021 = vpop.permute.xlu0 %2020
      %2022 = vrot.lane.b32.xlu0 %v1640, 1
      %v2023 = vpop.permute.xlu0 %2022
      %2024 = vrot.lane.b32.xlu0 %v1643, 1
      %v2025 = vpop.permute.xlu0 %2024
      %2026 = vrot.lane.b32.xlu0 %v1646, 1
      %v2027 = vpop.permute.xlu0 %2026
      %2028 = vrot.lane.b32.xlu0 %v1649, 1
      %v2029 = vpop.permute.xlu0 %2028
      %2030 = vrot.lane.b32.xlu0 %v1652, 1
      %v2031 = vpop.permute.xlu0 %2030
      %2032 = vrot.lane.b32.xlu0 %v1655, 1
      %v2033 = vpop.permute.xlu0 %2032
      %2034 = vrot.lane.b32.xlu0 %v1675, 1
      %v2035 = vpop.permute.xlu0 %2034
      %2036 = vrot.lane.b32.xlu0 %v1678, 1
      %v2037 = vpop.permute.xlu0 %2036
      %2038 = vrot.lane.b32.xlu0 %v1681, 1
      %v2039 = vpop.permute.xlu0 %2038
      %2040 = vrot.lane.b32.xlu0 %v1684, 1
      %v2041 = vpop.permute.xlu0 %2040
      %2042 = vrot.lane.b32.xlu0 %v1687, 1
      %v2043 = vpop.permute.xlu0 %2042
      %2044 = vrot.lane.b32.xlu0 %v1690, 1
      %v2045 = vpop.permute.xlu0 %2044
      %2046 = vrot.lane.b32.xlu0 %v1693, 1
      %v2047 = vpop.permute.xlu0 %2046
      %2048 = vrot.lane.b32.xlu0 %v1696, 1
      %v2049 = vpop.permute.xlu0 %2048
      %v2050 = vsel %vm834, %v2019, %v2035
      %v2051 = vsel %vm834, %v2021, %v2037
      %v2052 = vsel %vm834, %v2023, %v2039
      %v2053 = vsel %vm834, %v2025, %v2041
      %v2054 = vsel %vm834, %v2027, %v2043
      %v2055 = vsel %vm834, %v2029, %v2045
      %v2056 = vsel %vm834, %v2031, %v2047
      %v2057 = vsel %vm834, %v2033, %v2049
      %v2058 = vsel %vm834, %v2035, %v2019
      %v2059 = vsel %vm834, %v2037, %v2021
      %v2060 = vsel %vm834, %v2039, %v2023
      %v2061 = vsel %vm834, %v2041, %v2025
      %v2062 = vsel %vm834, %v2043, %v2027
      %v2063 = vsel %vm834, %v2045, %v2029
      %v2064 = vsel %vm834, %v2047, %v2031
      %v2065 = vsel %vm834, %v2049, %v2033
      %v2066 = vld [vmem:[%s851] sm:$0xff]
      %v2067 = vld [vmem:[%s851 + $0x8] sm:$0xff]
      %v2068 = vld [vmem:[%s851 + $0x10] sm:$0xff]
      %v2069 = vld [vmem:[%s851 + $0x18] sm:$0xff]
      %v2070 = vld [vmem:[%s851 + $0x20] sm:$0xff]
      %v2071 = vld [vmem:[%s851 + $0x28] sm:$0xff]
      %v2072 = vld [vmem:[%s851 + $0x30] sm:$0xff]
      %v2073 = vld [vmem:[%s851 + $0x38] sm:$0xff]
      %v2074 = vld [vmem:[%s851 + $0x40] sm:$0xff]
      %v2075 = vld [vmem:[%s851 + $0x48] sm:$0xff]
      %v2076 = vld [vmem:[%s851 + $0x50] sm:$0xff]
      %v2077 = vld [vmem:[%s851 + $0x58] sm:$0xff]
      %v2078 = vld [vmem:[%s851 + $0x60] sm:$0xff]
      %v2079 = vld [vmem:[%s851 + $0x68] sm:$0xff]
      %v2080 = vld [vmem:[%s851 + $0x70] sm:$0xff]
      %v2081 = vld [vmem:[%s851 + $0x78] sm:$0xff]
      %v2082 = vmul.f32 %v2058, %v2066
      %v2083 = vmul.f32 %v2050, %v2067
      %v2084 = vmul.f32 %v2059, %v2068
      %v2085 = vmul.f32 %v2051, %v2069
      %v2086 = vmul.f32 %v2060, %v2070
      %v2087 = vmul.f32 %v2052, %v2071
      %v2088 = vmul.f32 %v2061, %v2072
      %v2089 = vmul.f32 %v2053, %v2073
      %v2090 = vmul.f32 %v2062, %v2074
      %v2091 = vmul.f32 %v2054, %v2075
      %v2092 = vmul.f32 %v2063, %v2076
      %v2093 = vmul.f32 %v2055, %v2077
      %v2094 = vmul.f32 %v2064, %v2078
      %v2095 = vmul.f32 %v2056, %v2079
      %v2096 = vmul.f32 %v2065, %v2080
      %v2097 = vmul.f32 %v2057, %v2081
      %v2098 = vadd.f32 %v2002, %v2082
      %v2099 = vadd.f32 %v2003, %v2083
      %v2100 = vadd.f32 %v2004, %v2084
      %v2101 = vadd.f32 %v2005, %v2085
      %v2102 = vadd.f32 %v2006, %v2086
      %v2103 = vadd.f32 %v2007, %v2087
      %v2104 = vadd.f32 %v2008, %v2088
      %v2105 = vadd.f32 %v2009, %v2089
      %v2106 = vadd.f32 %v2010, %v2090
      %v2107 = vadd.f32 %v2011, %v2091
      %v2108 = vadd.f32 %v2012, %v2092
      %v2109 = vadd.f32 %v2013, %v2093
      %v2110 = vadd.f32 %v2014, %v2094
      %v2111 = vadd.f32 %v2015, %v2095
      %v2112 = vadd.f32 %v2016, %v2096
      %v2113 = vadd.f32 %v2017, %v2097
      %2114 = vrot.lane.b32.xlu0 %v1634, 127
      %v2115 = vpop.permute.xlu0 %2114
      %2116 = vrot.lane.b32.xlu0 %v1637, 127
      %v2117 = vpop.permute.xlu0 %2116
      %2118 = vrot.lane.b32.xlu0 %v1640, 127
      %v2119 = vpop.permute.xlu0 %2118
      %2120 = vrot.lane.b32.xlu0 %v1643, 127
      %v2121 = vpop.permute.xlu0 %2120
      %2122 = vrot.lane.b32.xlu0 %v1646, 127
      %v2123 = vpop.permute.xlu0 %2122
      %2124 = vrot.lane.b32.xlu0 %v1649, 127
      %v2125 = vpop.permute.xlu0 %2124
      %2126 = vrot.lane.b32.xlu0 %v1652, 127
      %v2127 = vpop.permute.xlu0 %2126
      %2128 = vrot.lane.b32.xlu0 %v1655, 127
      %v2129 = vpop.permute.xlu0 %2128
      %2130 = vrot.lane.b32.xlu0 %v1675, 127
      %v2131 = vpop.permute.xlu0 %2130
      %2132 = vrot.lane.b32.xlu0 %v1678, 127
      %v2133 = vpop.permute.xlu0 %2132
      %2134 = vrot.lane.b32.xlu0 %v1681, 127
      %v2135 = vpop.permute.xlu0 %2134
      %2136 = vrot.lane.b32.xlu0 %v1684, 127
      %v2137 = vpop.permute.xlu0 %2136
      %2138 = vrot.lane.b32.xlu0 %v1687, 127
      %v2139 = vpop.permute.xlu0 %2138
      %2140 = vrot.lane.b32.xlu0 %v1690, 127
      %v2141 = vpop.permute.xlu0 %2140
      %2142 = vrot.lane.b32.xlu0 %v1693, 127
      %v2143 = vpop.permute.xlu0 %2142
      %2144 = vrot.lane.b32.xlu0 %v1696, 127
      %v2145 = vpop.permute.xlu0 %2144
      %v2146 = vsel %vm932, %v2115, %v2131
      %v2147 = vsel %vm932, %v2117, %v2133
      %v2148 = vsel %vm932, %v2119, %v2135
      %v2149 = vsel %vm932, %v2121, %v2137
      %v2150 = vsel %vm932, %v2123, %v2139
      %v2151 = vsel %vm932, %v2125, %v2141
      %v2152 = vsel %vm932, %v2127, %v2143
      %v2153 = vsel %vm932, %v2129, %v2145
      %v2154 = vsel %vm932, %v2131, %v2115
      %v2155 = vsel %vm932, %v2133, %v2117
      %v2156 = vsel %vm932, %v2135, %v2119
      %v2157 = vsel %vm932, %v2137, %v2121
      %v2158 = vsel %vm932, %v2139, %v2123
      %v2159 = vsel %vm932, %v2141, %v2125
      %v2160 = vsel %vm932, %v2143, %v2127
      %v2161 = vsel %vm932, %v2145, %v2129
      %v2162 = vld [vmem:[%s949] sm:$0xff]
      %v2163 = vld [vmem:[%s949 + $0x8] sm:$0xff]
      %v2164 = vld [vmem:[%s949 + $0x10] sm:$0xff]
      %v2165 = vld [vmem:[%s949 + $0x18] sm:$0xff]
      %v2166 = vld [vmem:[%s949 + $0x20] sm:$0xff]
      %v2167 = vld [vmem:[%s949 + $0x28] sm:$0xff]
      %v2168 = vld [vmem:[%s949 + $0x30] sm:$0xff]
      %v2169 = vld [vmem:[%s949 + $0x38] sm:$0xff]
      %v2170 = vld [vmem:[%s949 + $0x40] sm:$0xff]
      %v2171 = vld [vmem:[%s949 + $0x48] sm:$0xff]
      %v2172 = vld [vmem:[%s949 + $0x50] sm:$0xff]
      %v2173 = vld [vmem:[%s949 + $0x58] sm:$0xff]
      %v2174 = vld [vmem:[%s949 + $0x60] sm:$0xff]
      %v2175 = vld [vmem:[%s949 + $0x68] sm:$0xff]
      %v2176 = vld [vmem:[%s949 + $0x70] sm:$0xff]
      %v2177 = vld [vmem:[%s949 + $0x78] sm:$0xff]
      %v2178 = vmul.f32 %v2146, %v2162
      %v2179 = vmul.f32 %v2154, %v2163
      %v2180 = vmul.f32 %v2147, %v2164
      %v2181 = vmul.f32 %v2155, %v2165
      %v2182 = vmul.f32 %v2148, %v2166
      %v2183 = vmul.f32 %v2156, %v2167
      %v2184 = vmul.f32 %v2149, %v2168
      %v2185 = vmul.f32 %v2157, %v2169
      %v2186 = vmul.f32 %v2150, %v2170
      %v2187 = vmul.f32 %v2158, %v2171
      %v2188 = vmul.f32 %v2151, %v2172
      %v2189 = vmul.f32 %v2159, %v2173
      %v2190 = vmul.f32 %v2152, %v2174
      %v2191 = vmul.f32 %v2160, %v2175
      %v2192 = vmul.f32 %v2153, %v2176
      %v2193 = vmul.f32 %v2161, %v2177
      %v2194 = vadd.f32 %v2098, %v2178
      %v2195 = vadd.f32 %v2099, %v2179
      %v2196 = vadd.f32 %v2100, %v2180
      %v2197 = vadd.f32 %v2101, %v2181
      %v2198 = vadd.f32 %v2102, %v2182
      %v2199 = vadd.f32 %v2103, %v2183
      %v2200 = vadd.f32 %v2104, %v2184
      %v2201 = vadd.f32 %v2105, %v2185
      %v2202 = vadd.f32 %v2106, %v2186
      %v2203 = vadd.f32 %v2107, %v2187
      %v2204 = vadd.f32 %v2108, %v2188
      %v2205 = vadd.f32 %v2109, %v2189
      %v2206 = vadd.f32 %v2110, %v2190
      %v2207 = vadd.f32 %v2111, %v2191
      %v2208 = vadd.f32 %v2112, %v2192
      %v2209 = vadd.f32 %v2113, %v2193
      %2210 = vrot.lane.b32.xlu0 %v1634, 113
      %v2211 = vpop.permute.xlu0 %2210
      %2212 = vrot.lane.b32.xlu0 %v1637, 113
      %v2213 = vpop.permute.xlu0 %2212
      %2214 = vrot.lane.b32.xlu0 %v1640, 113
      %v2215 = vpop.permute.xlu0 %2214
      %2216 = vrot.lane.b32.xlu0 %v1643, 113
      %v2217 = vpop.permute.xlu0 %2216
      %2218 = vrot.lane.b32.xlu0 %v1646, 113
      %v2219 = vpop.permute.xlu0 %2218
      %2220 = vrot.lane.b32.xlu0 %v1649, 113
      %v2221 = vpop.permute.xlu0 %2220
      %2222 = vrot.lane.b32.xlu0 %v1652, 113
      %v2223 = vpop.permute.xlu0 %2222
      %2224 = vrot.lane.b32.xlu0 %v1655, 113
      %v2225 = vpop.permute.xlu0 %2224
      %2226 = vrot.lane.b32.xlu0 %v1675, 113
      %v2227 = vpop.permute.xlu0 %2226
      %2228 = vrot.lane.b32.xlu0 %v1678, 113
      %v2229 = vpop.permute.xlu0 %2228
      %2230 = vrot.lane.b32.xlu0 %v1681, 113
      %v2231 = vpop.permute.xlu0 %2230
      %2232 = vrot.lane.b32.xlu0 %v1684, 113
      %v2233 = vpop.permute.xlu0 %2232
      %2234 = vrot.lane.b32.xlu0 %v1687, 113
      %v2235 = vpop.permute.xlu0 %2234
      %2236 = vrot.lane.b32.xlu0 %v1690, 113
      %v2237 = vpop.permute.xlu0 %2236
      %2238 = vrot.lane.b32.xlu0 %v1693, 113
      %v2239 = vpop.permute.xlu0 %2238
      %2240 = vrot.lane.b32.xlu0 %v1696, 113
      %v2241 = vpop.permute.xlu0 %2240
      %v2242 = vsel %vm1030, %v2211, %v2227
      %v2243 = vsel %vm1030, %v2213, %v2229
      %v2244 = vsel %vm1030, %v2215, %v2231
      %v2245 = vsel %vm1030, %v2217, %v2233
      %v2246 = vsel %vm1030, %v2219, %v2235
      %v2247 = vsel %vm1030, %v2221, %v2237
      %v2248 = vsel %vm1030, %v2223, %v2239
      %v2249 = vsel %vm1030, %v2225, %v2241
      %v2250 = vsel %vm1030, %v2227, %v2211
      %v2251 = vsel %vm1030, %v2229, %v2213
      %v2252 = vsel %vm1030, %v2231, %v2215
      %v2253 = vsel %vm1030, %v2233, %v2217
      %v2254 = vsel %vm1030, %v2235, %v2219
      %v2255 = vsel %vm1030, %v2237, %v2221
      %v2256 = vsel %vm1030, %v2239, %v2223
      %v2257 = vsel %vm1030, %v2241, %v2225
      %v2258 = vld [vmem:[%s1047] sm:$0xff]
      %v2259 = vld [vmem:[%s1047 + $0x8] sm:$0xff]
      %v2260 = vld [vmem:[%s1047 + $0x10] sm:$0xff]
      %v2261 = vld [vmem:[%s1047 + $0x18] sm:$0xff]
      %v2262 = vld [vmem:[%s1047 + $0x20] sm:$0xff]
      %v2263 = vld [vmem:[%s1047 + $0x28] sm:$0xff]
      %v2264 = vld [vmem:[%s1047 + $0x30] sm:$0xff]
      %v2265 = vld [vmem:[%s1047 + $0x38] sm:$0xff]
      %v2266 = vld [vmem:[%s1047 + $0x40] sm:$0xff]
      %v2267 = vld [vmem:[%s1047 + $0x48] sm:$0xff]
      %v2268 = vld [vmem:[%s1047 + $0x50] sm:$0xff]
      %v2269 = vld [vmem:[%s1047 + $0x58] sm:$0xff]
      %v2270 = vld [vmem:[%s1047 + $0x60] sm:$0xff]
      %v2271 = vld [vmem:[%s1047 + $0x68] sm:$0xff]
      %v2272 = vld [vmem:[%s1047 + $0x70] sm:$0xff]
      %v2273 = vld [vmem:[%s1047 + $0x78] sm:$0xff]
      %v2274 = vmul.f32 %v2242, %v2258
      %v2275 = vmul.f32 %v2250, %v2259
      %v2276 = vmul.f32 %v2243, %v2260
      %v2277 = vmul.f32 %v2251, %v2261
      %v2278 = vmul.f32 %v2244, %v2262
      %v2279 = vmul.f32 %v2252, %v2263
      %v2280 = vmul.f32 %v2245, %v2264
      %v2281 = vmul.f32 %v2253, %v2265
      %v2282 = vmul.f32 %v2246, %v2266
      %v2283 = vmul.f32 %v2254, %v2267
      %v2284 = vmul.f32 %v2247, %v2268
      %v2285 = vmul.f32 %v2255, %v2269
      %v2286 = vmul.f32 %v2248, %v2270
      %v2287 = vmul.f32 %v2256, %v2271
      %v2288 = vmul.f32 %v2249, %v2272
      %v2289 = vmul.f32 %v2257, %v2273
      %v2290 = vadd.f32 %v2194, %v2274
      %v2291 = vadd.f32 %v2195, %v2275
      %v2292 = vadd.f32 %v2196, %v2276
      %v2293 = vadd.f32 %v2197, %v2277
      %v2294 = vadd.f32 %v2198, %v2278
      %v2295 = vadd.f32 %v2199, %v2279
      %v2296 = vadd.f32 %v2200, %v2280
      %v2297 = vadd.f32 %v2201, %v2281
      %v2298 = vadd.f32 %v2202, %v2282
      %v2299 = vadd.f32 %v2203, %v2283
      %v2300 = vadd.f32 %v2204, %v2284
      %v2301 = vadd.f32 %v2205, %v2285
      %v2302 = vadd.f32 %v2206, %v2286
      %v2303 = vadd.f32 %v2207, %v2287
      %v2304 = vadd.f32 %v2208, %v2288
      %v2305 = vadd.f32 %v2209, %v2289
      %2306 = vrot.lane.b32.xlu0 %v1634, 112
      %v2307 = vpop.permute.xlu0 %2306
      %2308 = vrot.lane.b32.xlu0 %v1637, 112
      %v2309 = vpop.permute.xlu0 %2308
      %2310 = vrot.lane.b32.xlu0 %v1640, 112
      %v2311 = vpop.permute.xlu0 %2310
      %2312 = vrot.lane.b32.xlu0 %v1643, 112
      %v2313 = vpop.permute.xlu0 %2312
      %2314 = vrot.lane.b32.xlu0 %v1646, 112
      %v2315 = vpop.permute.xlu0 %2314
      %2316 = vrot.lane.b32.xlu0 %v1649, 112
      %v2317 = vpop.permute.xlu0 %2316
      %2318 = vrot.lane.b32.xlu0 %v1652, 112
      %v2319 = vpop.permute.xlu0 %2318
      %2320 = vrot.lane.b32.xlu0 %v1655, 112
      %v2321 = vpop.permute.xlu0 %2320
      %2322 = vrot.lane.b32.xlu0 %v1675, 112
      %v2323 = vpop.permute.xlu0 %2322
      %2324 = vrot.lane.b32.xlu0 %v1678, 112
      %v2325 = vpop.permute.xlu0 %2324
      %2326 = vrot.lane.b32.xlu0 %v1681, 112
      %v2327 = vpop.permute.xlu0 %2326
      %2328 = vrot.lane.b32.xlu0 %v1684, 112
      %v2329 = vpop.permute.xlu0 %2328
      %2330 = vrot.lane.b32.xlu0 %v1687, 112
      %v2331 = vpop.permute.xlu0 %2330
      %2332 = vrot.lane.b32.xlu0 %v1690, 112
      %v2333 = vpop.permute.xlu0 %2332
      %2334 = vrot.lane.b32.xlu0 %v1693, 112
      %v2335 = vpop.permute.xlu0 %2334
      %2336 = vrot.lane.b32.xlu0 %v1696, 112
      %v2337 = vpop.permute.xlu0 %2336
      %v2338 = vsel %vm1128, %v2307, %v2323
      %v2339 = vsel %vm1128, %v2309, %v2325
      %v2340 = vsel %vm1128, %v2311, %v2327
      %v2341 = vsel %vm1128, %v2313, %v2329
      %v2342 = vsel %vm1128, %v2315, %v2331
      %v2343 = vsel %vm1128, %v2317, %v2333
      %v2344 = vsel %vm1128, %v2319, %v2335
      %v2345 = vsel %vm1128, %v2321, %v2337
      %v2346 = vsel %vm1128, %v2323, %v2307
      %v2347 = vsel %vm1128, %v2325, %v2309
      %v2348 = vsel %vm1128, %v2327, %v2311
      %v2349 = vsel %vm1128, %v2329, %v2313
      %v2350 = vsel %vm1128, %v2331, %v2315
      %v2351 = vsel %vm1128, %v2333, %v2317
      %v2352 = vsel %vm1128, %v2335, %v2319
      %v2353 = vsel %vm1128, %v2337, %v2321
      %v2354 = vld [vmem:[%s1145] sm:$0xff]
      %v2355 = vld [vmem:[%s1145 + $0x8] sm:$0xff]
      %v2356 = vld [vmem:[%s1145 + $0x10] sm:$0xff]
      %v2357 = vld [vmem:[%s1145 + $0x18] sm:$0xff]
      %v2358 = vld [vmem:[%s1145 + $0x20] sm:$0xff]
      %v2359 = vld [vmem:[%s1145 + $0x28] sm:$0xff]
      %v2360 = vld [vmem:[%s1145 + $0x30] sm:$0xff]
      %v2361 = vld [vmem:[%s1145 + $0x38] sm:$0xff]
      %v2362 = vld [vmem:[%s1145 + $0x40] sm:$0xff]
      %v2363 = vld [vmem:[%s1145 + $0x48] sm:$0xff]
      %v2364 = vld [vmem:[%s1145 + $0x50] sm:$0xff]
      %v2365 = vld [vmem:[%s1145 + $0x58] sm:$0xff]
      %v2366 = vld [vmem:[%s1145 + $0x60] sm:$0xff]
      %v2367 = vld [vmem:[%s1145 + $0x68] sm:$0xff]
      %v2368 = vld [vmem:[%s1145 + $0x70] sm:$0xff]
      %v2369 = vld [vmem:[%s1145 + $0x78] sm:$0xff]
      %v2370 = vmul.f32 %v2338, %v2354
      %v2371 = vmul.f32 %v2346, %v2355
      %v2372 = vmul.f32 %v2339, %v2356
      %v2373 = vmul.f32 %v2347, %v2357
      %v2374 = vmul.f32 %v2340, %v2358
      %v2375 = vmul.f32 %v2348, %v2359
      %v2376 = vmul.f32 %v2341, %v2360
      %v2377 = vmul.f32 %v2349, %v2361
      %v2378 = vmul.f32 %v2342, %v2362
      %v2379 = vmul.f32 %v2350, %v2363
      %v2380 = vmul.f32 %v2343, %v2364
      %v2381 = vmul.f32 %v2351, %v2365
      %v2382 = vmul.f32 %v2344, %v2366
      %v2383 = vmul.f32 %v2352, %v2367
      %v2384 = vmul.f32 %v2345, %v2368
      %v2385 = vmul.f32 %v2353, %v2369
      %v2386 = vadd.f32 %v2290, %v2370
      %v2387 = vadd.f32 %v2291, %v2371
      %v2388 = vadd.f32 %v2292, %v2372
      %v2389 = vadd.f32 %v2293, %v2373
      %v2390 = vadd.f32 %v2294, %v2374
      %v2391 = vadd.f32 %v2295, %v2375
      %v2392 = vadd.f32 %v2296, %v2376
      %v2393 = vadd.f32 %v2297, %v2377
      %v2394 = vadd.f32 %v2298, %v2378
      %v2395 = vadd.f32 %v2299, %v2379
      %v2396 = vadd.f32 %v2300, %v2380
      %v2397 = vadd.f32 %v2301, %v2381
      %v2398 = vadd.f32 %v2302, %v2382
      %v2399 = vadd.f32 %v2303, %v2383
      %v2400 = vadd.f32 %v2304, %v2384
      %v2401 = vadd.f32 %v2305, %v2385
      %2402 = vrot.lane.b32.xlu0 %v1634, 111
      %v2403 = vpop.permute.xlu0 %2402
      %2404 = vrot.lane.b32.xlu0 %v1637, 111
      %v2405 = vpop.permute.xlu0 %2404
      %2406 = vrot.lane.b32.xlu0 %v1640, 111
      %v2407 = vpop.permute.xlu0 %2406
      %2408 = vrot.lane.b32.xlu0 %v1643, 111
      %v2409 = vpop.permute.xlu0 %2408
      %2410 = vrot.lane.b32.xlu0 %v1646, 111
      %v2411 = vpop.permute.xlu0 %2410
      %2412 = vrot.lane.b32.xlu0 %v1649, 111
      %v2413 = vpop.permute.xlu0 %2412
      %2414 = vrot.lane.b32.xlu0 %v1652, 111
      %v2415 = vpop.permute.xlu0 %2414
      %2416 = vrot.lane.b32.xlu0 %v1655, 111
      %v2417 = vpop.permute.xlu0 %2416
      %2418 = vrot.lane.b32.xlu0 %v1675, 111
      %v2419 = vpop.permute.xlu0 %2418
      %2420 = vrot.lane.b32.xlu0 %v1678, 111
      %v2421 = vpop.permute.xlu0 %2420
      %2422 = vrot.lane.b32.xlu0 %v1681, 111
      %v2423 = vpop.permute.xlu0 %2422
      %2424 = vrot.lane.b32.xlu0 %v1684, 111
      %v2425 = vpop.permute.xlu0 %2424
      %2426 = vrot.lane.b32.xlu0 %v1687, 111
      %v2427 = vpop.permute.xlu0 %2426
      %2428 = vrot.lane.b32.xlu0 %v1690, 111
      %v2429 = vpop.permute.xlu0 %2428
      %2430 = vrot.lane.b32.xlu0 %v1693, 111
      %v2431 = vpop.permute.xlu0 %2430
      %2432 = vrot.lane.b32.xlu0 %v1696, 111
      %v2433 = vpop.permute.xlu0 %2432
      %v2434 = vsel %vm1226, %v2403, %v2419
      %v2435 = vsel %vm1226, %v2405, %v2421
      %v2436 = vsel %vm1226, %v2407, %v2423
      %v2437 = vsel %vm1226, %v2409, %v2425
      %v2438 = vsel %vm1226, %v2411, %v2427
      %v2439 = vsel %vm1226, %v2413, %v2429
      %v2440 = vsel %vm1226, %v2415, %v2431
      %v2441 = vsel %vm1226, %v2417, %v2433
      %v2442 = vsel %vm1226, %v2419, %v2403
      %v2443 = vsel %vm1226, %v2421, %v2405
      %v2444 = vsel %vm1226, %v2423, %v2407
      %v2445 = vsel %vm1226, %v2425, %v2409
      %v2446 = vsel %vm1226, %v2427, %v2411
      %v2447 = vsel %vm1226, %v2429, %v2413
      %v2448 = vsel %vm1226, %v2431, %v2415
      %v2449 = vsel %vm1226, %v2433, %v2417
      %v2450 = vld [vmem:[%s1243] sm:$0xff]
      %v2451 = vld [vmem:[%s1243 + $0x8] sm:$0xff]
      %v2452 = vld [vmem:[%s1243 + $0x10] sm:$0xff]
      %v2453 = vld [vmem:[%s1243 + $0x18] sm:$0xff]
      %v2454 = vld [vmem:[%s1243 + $0x20] sm:$0xff]
      %v2455 = vld [vmem:[%s1243 + $0x28] sm:$0xff]
      %v2456 = vld [vmem:[%s1243 + $0x30] sm:$0xff]
      %v2457 = vld [vmem:[%s1243 + $0x38] sm:$0xff]
      %v2458 = vld [vmem:[%s1243 + $0x40] sm:$0xff]
      %v2459 = vld [vmem:[%s1243 + $0x48] sm:$0xff]
      %v2460 = vld [vmem:[%s1243 + $0x50] sm:$0xff]
      %v2461 = vld [vmem:[%s1243 + $0x58] sm:$0xff]
      %v2462 = vld [vmem:[%s1243 + $0x60] sm:$0xff]
      %v2463 = vld [vmem:[%s1243 + $0x68] sm:$0xff]
      %v2464 = vld [vmem:[%s1243 + $0x70] sm:$0xff]
      %v2465 = vld [vmem:[%s1243 + $0x78] sm:$0xff]
      %v2466 = vmul.f32 %v2434, %v2450
      %v2467 = vmul.f32 %v2442, %v2451
      %v2468 = vmul.f32 %v2435, %v2452
      %v2469 = vmul.f32 %v2443, %v2453
      %v2470 = vmul.f32 %v2436, %v2454
      %v2471 = vmul.f32 %v2444, %v2455
      %v2472 = vmul.f32 %v2437, %v2456
      %v2473 = vmul.f32 %v2445, %v2457
      %v2474 = vmul.f32 %v2438, %v2458
      %v2475 = vmul.f32 %v2446, %v2459
      %v2476 = vmul.f32 %v2439, %v2460
      %v2477 = vmul.f32 %v2447, %v2461
      %v2478 = vmul.f32 %v2440, %v2462
      %v2479 = vmul.f32 %v2448, %v2463
      %v2480 = vmul.f32 %v2441, %v2464
      %v2481 = vmul.f32 %v2449, %v2465
      %v2482 = vadd.f32 %v2386, %v2466
      %v2483 = vadd.f32 %v2387, %v2467
      %v2484 = vadd.f32 %v2388, %v2468
      %v2485 = vadd.f32 %v2389, %v2469
      %v2486 = vadd.f32 %v2390, %v2470
      %v2487 = vadd.f32 %v2391, %v2471
      %v2488 = vadd.f32 %v2392, %v2472
      %v2489 = vadd.f32 %v2393, %v2473
      %v2490 = vadd.f32 %v2394, %v2474
      %v2491 = vadd.f32 %v2395, %v2475
      %v2492 = vadd.f32 %v2396, %v2476
      %v2493 = vadd.f32 %v2397, %v2477
      %v2494 = vadd.f32 %v2398, %v2478
      %v2495 = vadd.f32 %v2399, %v2479
      %v2496 = vadd.f32 %v2400, %v2480
      %v2497 = vadd.f32 %v2401, %v2481
      %v2498 = vadd.f32 %v1634, %v2482
      %v2499 = vadd.f32 %v1675, %v2483
      %v2500 = vadd.f32 %v1637, %v2484
      %v2501 = vadd.f32 %v1678, %v2485
      %v2502 = vadd.f32 %v1640, %v2486
      %v2503 = vadd.f32 %v1681, %v2487
      %v2504 = vadd.f32 %v1643, %v2488
      %v2505 = vadd.f32 %v1684, %v2489
      %v2506 = vadd.f32 %v1646, %v2490
      %v2507 = vadd.f32 %v1687, %v2491
      %v2508 = vadd.f32 %v1649, %v2492
      %v2509 = vadd.f32 %v1690, %v2493
      %v2510 = vadd.f32 %v1652, %v2494
      %v2511 = vadd.f32 %v1693, %v2495
      %v2512 = vadd.f32 %v1655, %v2496
      %v2513 = vadd.f32 %v1696, %v2497
      %v2514 = vadd.f32 %v2498, %v1311
      %v2515 = vadd.f32 %v2499, %v1311
      %v2516 = vadd.f32 %v2500, %v1316
      %v2517 = vadd.f32 %v2501, %v1316
      %v2518 = vadd.f32 %v2502, %v1321
      %v2519 = vadd.f32 %v2503, %v1321
      %v2520 = vadd.f32 %v2504, %v1326
      %v2521 = vadd.f32 %v2505, %v1326
      %v2522 = vadd.f32 %v2506, %v1331
      %v2523 = vadd.f32 %v2507, %v1331
      %v2524 = vadd.f32 %v2508, %v1336
      %v2525 = vadd.f32 %v2509, %v1336
      %v2526 = vadd.f32 %v2510, %v1341
      %v2527 = vadd.f32 %v2511, %v1341
      %v2528 = vadd.f32 %v2512, %v1346
      %v2529 = vadd.f32 %v2513, %v1346
      %v2530 = vmul.f32 %v2514, 0.5
      %v2531 = vmul.f32 %v2515, 0.5
      %v2532 = vmul.f32 %v2516, 0.5
      %v2533 = vmul.f32 %v2517, 0.5
      %v2534 = vmul.f32 %v2518, 0.5
      %v2535 = vmul.f32 %v2519, 0.5
      %v2536 = vmul.f32 %v2520, 0.5
      %v2537 = vmul.f32 %v2521, 0.5
      %v2538 = vmul.f32 %v2522, 0.5
      %v2539 = vmul.f32 %v2523, 0.5
      %v2540 = vmul.f32 %v2524, 0.5
      %v2541 = vmul.f32 %v2525, 0.5
      %v2542 = vmul.f32 %v2526, 0.5
      %v2543 = vmul.f32 %v2527, 0.5
      %v2544 = vmul.f32 %v2528, 0.5
      %v2545 = vmul.f32 %v2529, 0.5
      %v2546 = vmul.f32 %v2514, 0.044715
      %v2547 = vmul.f32 %v2515, 0.044715
      %v2548 = vmul.f32 %v2516, 0.044715
      %v2549 = vmul.f32 %v2517, 0.044715
      %v2550 = vmul.f32 %v2518, 0.044715
      %v2551 = vmul.f32 %v2519, 0.044715
      %v2552 = vmul.f32 %v2520, 0.044715
      %v2553 = vmul.f32 %v2521, 0.044715
      %v2554 = vmul.f32 %v2522, 0.044715
      %v2555 = vmul.f32 %v2523, 0.044715
      %v2556 = vmul.f32 %v2524, 0.044715
      %v2557 = vmul.f32 %v2525, 0.044715
      %v2558 = vmul.f32 %v2526, 0.044715
      %v2559 = vmul.f32 %v2527, 0.044715
      %v2560 = vmul.f32 %v2528, 0.044715
      %v2561 = vmul.f32 %v2529, 0.044715
      %v2562 = vmul.f32 %v2546, %v2514
      %v2563 = vmul.f32 %v2547, %v2515
      %v2564 = vmul.f32 %v2548, %v2516
      %v2565 = vmul.f32 %v2549, %v2517
      %v2566 = vmul.f32 %v2550, %v2518
      %v2567 = vmul.f32 %v2551, %v2519
      %v2568 = vmul.f32 %v2552, %v2520
      %v2569 = vmul.f32 %v2553, %v2521
      %v2570 = vmul.f32 %v2554, %v2522
      %v2571 = vmul.f32 %v2555, %v2523
      %v2572 = vmul.f32 %v2556, %v2524
      %v2573 = vmul.f32 %v2557, %v2525
      %v2574 = vmul.f32 %v2558, %v2526
      %v2575 = vmul.f32 %v2559, %v2527
      %v2576 = vmul.f32 %v2560, %v2528
      %v2577 = vmul.f32 %v2561, %v2529
      %v2578 = vmul.f32 %v2562, %v2514
      %v2579 = vmul.f32 %v2563, %v2515
      %v2580 = vmul.f32 %v2564, %v2516
      %v2581 = vmul.f32 %v2565, %v2517
      %v2582 = vmul.f32 %v2566, %v2518
      %v2583 = vmul.f32 %v2567, %v2519
      %v2584 = vmul.f32 %v2568, %v2520
      %v2585 = vmul.f32 %v2569, %v2521
      %v2586 = vmul.f32 %v2570, %v2522
      %v2587 = vmul.f32 %v2571, %v2523
      %v2588 = vmul.f32 %v2572, %v2524
      %v2589 = vmul.f32 %v2573, %v2525
      %v2590 = vmul.f32 %v2574, %v2526
      %v2591 = vmul.f32 %v2575, %v2527
      %v2592 = vmul.f32 %v2576, %v2528
      %v2593 = vmul.f32 %v2577, %v2529
      %v2594 = vadd.f32 %v2514, %v2578
      %v2595 = vadd.f32 %v2515, %v2579
      %v2596 = vadd.f32 %v2516, %v2580
      %v2597 = vadd.f32 %v2517, %v2581
      %v2598 = vadd.f32 %v2518, %v2582
      %v2599 = vadd.f32 %v2519, %v2583
      %v2600 = vadd.f32 %v2520, %v2584
      %v2601 = vadd.f32 %v2521, %v2585
      %v2602 = vadd.f32 %v2522, %v2586
      %v2603 = vadd.f32 %v2523, %v2587
      %v2604 = vadd.f32 %v2524, %v2588
      %v2605 = vadd.f32 %v2525, %v2589
      %v2606 = vadd.f32 %v2526, %v2590
      %v2607 = vadd.f32 %v2527, %v2591
      %v2608 = vadd.f32 %v2528, %v2592
      %v2609 = vadd.f32 %v2529, %v2593
      %v2610 = vmul.f32 %v2594, 0.7978846
      %v2611 = vmul.f32 %v2595, 0.7978846
      %v2612 = vmul.f32 %v2596, 0.7978846
      %v2613 = vmul.f32 %v2597, 0.7978846
      %v2614 = vmul.f32 %v2598, 0.7978846
      %v2615 = vmul.f32 %v2599, 0.7978846
      %v2616 = vmul.f32 %v2600, 0.7978846
      %v2617 = vmul.f32 %v2601, 0.7978846
      %v2618 = vmul.f32 %v2602, 0.7978846
      %v2619 = vmul.f32 %v2603, 0.7978846
      %v2620 = vmul.f32 %v2604, 0.7978846
      %v2621 = vmul.f32 %v2605, 0.7978846
      %v2622 = vmul.f32 %v2606, 0.7978846
      %v2623 = vmul.f32 %v2607, 0.7978846
      %v2624 = vmul.f32 %v2608, 0.7978846
      %v2625 = vmul.f32 %v2609, 0.7978846
      %v2626 = vtanh.pop %v2610
      %v2627 = vtanh.pop %v2611
      %v2628 = vtanh.pop %v2612
      %v2629 = vtanh.pop %v2613
      %v2630 = vtanh.pop %v2614
      %v2631 = vtanh.pop %v2615
      %v2632 = vtanh.pop %v2616
      %v2633 = vtanh.pop %v2617
      %v2634 = vtanh.pop %v2618
      %v2635 = vtanh.pop %v2619
      %v2636 = vtanh.pop %v2620
      %v2637 = vtanh.pop %v2621
      %v2638 = vtanh.pop %v2622
      %v2639 = vtanh.pop %v2623
      %v2640 = vtanh.pop %v2624
      %v2641 = vtanh.pop %v2625
      %v2642 = vadd.f32 %v2626, 1.0
      %v2643 = vadd.f32 %v2627, 1.0
      %v2644 = vadd.f32 %v2628, 1.0
      %v2645 = vadd.f32 %v2629, 1.0
      %v2646 = vadd.f32 %v2630, 1.0
      %v2647 = vadd.f32 %v2631, 1.0
      %v2648 = vadd.f32 %v2632, 1.0
      %v2649 = vadd.f32 %v2633, 1.0
      %v2650 = vadd.f32 %v2634, 1.0
      %v2651 = vadd.f32 %v2635, 1.0
      %v2652 = vadd.f32 %v2636, 1.0
      %v2653 = vadd.f32 %v2637, 1.0
      %v2654 = vadd.f32 %v2638, 1.0
      %v2655 = vadd.f32 %v2639, 1.0
      %v2656 = vadd.f32 %v2640, 1.0
      %v2657 = vadd.f32 %v2641, 1.0
      %v2658 = vmul.f32 %v2530, %v2642
      %v2659 = vmul.f32 %v2531, %v2643
      %v2660 = vmul.f32 %v2532, %v2644
      %v2661 = vmul.f32 %v2533, %v2645
      %v2662 = vmul.f32 %v2534, %v2646
      %v2663 = vmul.f32 %v2535, %v2647
      %v2664 = vmul.f32 %v2536, %v2648
      %v2665 = vmul.f32 %v2537, %v2649
      %v2666 = vmul.f32 %v2538, %v2650
      %v2667 = vmul.f32 %v2539, %v2651
      %v2668 = vmul.f32 %v2540, %v2652
      %v2669 = vmul.f32 %v2541, %v2653
      %v2670 = vmul.f32 %v2542, %v2654
      %v2671 = vmul.f32 %v2543, %v2655
      %v2672 = vmul.f32 %v2544, %v2656
      %v2673 = vmul.f32 %v2545, %v2657
      %2674 = vmatpush.msra.mxu0 0.0
      %2675 = vmatpush.msra.mxu0 0.0
      %2676 = vmatpush.msra.mxu0 0.0
      %2677 = vmatpush.msra.mxu0 0.0
      %2678 = vmatpush.msra.mxu0 0.0
      %2679 = vmatpush.msra.mxu0 0.0
      %2680 = vmatpush.msra.mxu0 0.0
      %2681 = vmatpush.msra.mxu0 0.0
      %2682 = vmatpush.msra.mxu0 %v2672
      %2683 = vmatpush.msra.mxu0 %v2670
      %2684 = vmatpush.msra.mxu0 %v2668
      %2685 = vmatpush.msra.mxu0 %v2666
      %2686 = vmatpush.msra.mxu0 %v2664
      %2687 = vmatpush.msra.mxu0 %v2662
      %2688 = vmatpush.msra.mxu0 %v2660
      %2689 = vmatpush.msra.mxu0 %v2658
      %2690 = vmatmul.f32.gmra.mxu0 %v1530
      %v2691 = vpop.f32.mrf.mxu0
      %v2692 = vadd.f32 %v1511, %v2691
      %2693 = vmatmul.f32.gmra.mxu0 %v1533
      %v2694 = vpop.f32.mrf.mxu0
      %v2695 = vadd.f32 %v1516, %v2694
      %2696 = vmatmul.f32.gmra.mxu0 %v1536
      %v2697 = vpop.f32.mrf.mxu0
      %v2698 = vadd.f32 %v1521, %v2697
      %2699 = vmatmul.f32.gmra.mxu0 %v1539
      %v2700 = vpop.f32.mrf.mxu0
      %v2701 = vadd.f32 %v1526, %v2700
      %2702 = vdwg.mxu0
      %2703 = vmatpush.msra.mxu0 0.0
      %2704 = vmatpush.msra.mxu0 0.0
      %2705 = vmatpush.msra.mxu0 0.0
      %2706 = vmatpush.msra.mxu0 0.0
      %2707 = vmatpush.msra.mxu0 0.0
      %2708 = vmatpush.msra.mxu0 0.0
      %2709 = vmatpush.msra.mxu0 0.0
      %2710 = vmatpush.msra.mxu0 0.0
      %2711 = vmatpush.msra.mxu0 %v2673
      %2712 = vmatpush.msra.mxu0 %v2671
      %2713 = vmatpush.msra.mxu0 %v2669
      %2714 = vmatpush.msra.mxu0 %v2667
      %2715 = vmatpush.msra.mxu0 %v2665
      %2716 = vmatpush.msra.mxu0 %v2663
      %2717 = vmatpush.msra.mxu0 %v2661
      %2718 = vmatpush.msra.mxu0 %v2659
      %2719 = vmatmul.f32.gmra.mxu0 %v1530
      %v2720 = vpop.f32.mrf.mxu0
      %v2721 = vadd.f32 %v1511, %v2720
      %2722 = vmatmul.f32.gmra.mxu0 %v1533
      %v2723 = vpop.f32.mrf.mxu0
      %v2724 = vadd.f32 %v1516, %v2723
      %2725 = vmatmul.f32.gmra.mxu0 %v1536
      %v2726 = vpop.f32.mrf.mxu0
      %v2727 = vadd.f32 %v1521, %v2726
      %2728 = vmatmul.f32.gmra.mxu0 %v1539
      %v2729 = vpop.f32.mrf.mxu0
      %v2730 = vadd.f32 %v1526, %v2729
      %2731 = vdwg.mxu0
      %s2732 = scalar_lea.vmem %s285, 64
      %2733 = vst [vmem:[%s2732] sm:$0xff] %v2692
      %2734 = vst [vmem:[%s2732 + $0x8] sm:$0xff] %v2721
      %2735 = vst [vmem:[%s2732 + $0x10] sm:$0xff] %v2695
      %2736 = vst [vmem:[%s2732 + $0x18] sm:$0xff] %v2724
      %2737 = vst [vmem:[%s2732 + $0x20] sm:$0xff] %v2698
      %2738 = vst [vmem:[%s2732 + $0x28] sm:$0xff] %v2727
      %2739 = vst [vmem:[%s2732 + $0x30] sm:$0xff] %v2701
      %2740 = vst [vmem:[%s2732 + $0x38] sm:$0xff] %v2730
      %s2741 = smul.u32 2, %s18
      %p2742 = scmp.lt.s32.totalorder %s2741, 3
      %s2743 = scalar_select %p2742, %s2741, 3
      %s2744 = smul.addr %s2743, 8
      %s2745 = smul.addr %s2744, 8
      %s2746 = scalar_lea.vmem %s7, %s2745
      // Predicated region
      $region49: #{_lambda_.1} parent=47 // pred_check
        %p2747 = pneg %p188
      $region50: #{_lambda_.1} parent=47 // pred_check_branch
        %2749 = sbr.rel (%p2747) target = $region52
      $region51: #{_lambda_.1} parent=47 // pred_region
        %s2750 = smul.u32 2, %s18
      $region52: #{_lambda_.1} parent=47 // pred_fallthru
        _
    $region48: #{_lambda_.1} parent=5 // pred_fallthru
      _
    %p2751 = scmp.le.s32.totalorder 2, %s13
    // Predicated region
    $region53: #{_lambda_.1} parent=5 // pred_check
      %p2752 = pneg %p2751
    $region54: #{_lambda_.1} parent=5 // pred_check_branch
      %2754 = sbr.rel (%p2752) target = $region56
    $region55: #{_lambda_.1} parent=5 // pred_region
      %s2755 = ssub.s32 %s13, 2
      // Predicated region
      $region57: #{_lambda_.1} parent=55 // pred_check
        %p2756 = pneg %p194
      $region58: #{_lambda_.1} parent=55 // pred_check_branch
        %2758 = sbr.rel (%p2756) target = $region60
      $region59: #{_lambda_.1} parent=55 // pred_region
        %s2759 = smul.u32 2, %s19
        %p2760 = scmp.lt.s32.totalorder %s2759, 3
        %s2761 = scalar_select %p2760, %s2759, 3
        %s2762 = smul.addr %s2761, 8
        %s2763 = smul.addr %s2762, 8
        %s2764 = scalar_lea.vmem %s7, %s2763
      $region60: #{_lambda_.1} parent=55 // pred_fallthru
        _
    $region56: #{_lambda_.1} parent=5 // pred_fallthru
      _
  $region6: #{_lambda_.1} parent=0 // loop_footer
    %s17 = sadd.s32 1, %s13
  $region7: #{_lambda_.1} parent=0 // loop_footer_branch
    %12 = sbr.rel target = $region3
  $region8: #{_lambda_.1} parent=0 // loop_exit
    _

</llo_original>
